<compile_context>
chip_gen: v6e
topology: v6e:2x2x1
jax: 0.10.0
libtpu: 0.0.40
codegen_flags: <defaults>
</compile_context>

<pallas_src>
import functools

import jax
import jax.numpy as jnp
from jax import lax
from jax.experimental import pallas as pl
from jax.experimental.pallas import tpu as pltpu


# ----------------------------------------------------------------------------
# In-kernel helpers
# ----------------------------------------------------------------------------
def _upsample2_plane(p):
    """Separable x2 linear upsample of a (H, W, C) plane over H and W.

    Matches nn.Upsample(scale_factor=2, mode='trilinear', align_corners=False)
    per axis: even = 0.25*prev + 0.75*cur, odd = 0.75*cur + 0.25*next, edge clamp.
    """
    H, W, C = p.shape
    # W axis
    prev_w = jnp.concatenate([p[:, :1], p[:, :-1]], axis=1)
    next_w = jnp.concatenate([p[:, 1:], p[:, -1:]], axis=1)
    even_w = 0.25 * prev_w + 0.75 * p
    odd_w = 0.75 * p + 0.25 * next_w
    q = jnp.concatenate([even_w[:, :, None, :], odd_w[:, :, None, :]],
                        axis=2).reshape(H, 2 * W, C)
    # H axis
    prev_h = jnp.concatenate([q[:1], q[:-1]], axis=0)
    next_h = jnp.concatenate([q[1:], q[-1:]], axis=0)
    even_h = 0.25 * prev_h + 0.75 * q
    odd_h = 0.75 * q + 0.25 * next_h
    return jnp.concatenate([even_h[:, None], odd_h[:, None]],
                           axis=1).reshape(2 * H, 2 * W, C)


def _zero_pad_hw(p):
    """Zero-pad a (Hf, Wf, C) plane by 1 voxel on both spatial axes."""
    Hf, Wf, C = p.shape
    zr = jnp.zeros((1, Wf, C), p.dtype)
    q = jnp.concatenate([zr, p, zr], axis=0)
    zc = jnp.zeros((Hf + 2, 1, C), p.dtype)
    return jnp.concatenate([zc, q, zc], axis=1)


def _im2col9(ppad):
    """(Hf+2, Wf+2, C) padded plane -> (Hf*Wf, 9*C) taps, ordered (dy, dx, cin)."""
    Hf = ppad.shape[0] - 2
    Wf = ppad.shape[1] - 2
    C = ppad.shape[-1]
    taps = []
    for dy in range(3):
        for dx in range(3):
            taps.append(ppad[dy:dy + Hf, dx:dx + Wf, :])
    return jnp.concatenate(taps, axis=-1).reshape(Hf * Wf, 9 * C)


# ----------------------------------------------------------------------------
# Fused kernel: trilinear x2 (in-VMEM) + upsample_conv(3x3x3) + pixel_shuffle_conv
#               + PixelShuffle3D + cat_conv (folded) + LayerNorm, lane-dense store.
# One grid step = one (batch, coarse-z) slice -> the two fine-z planes it emits.
# ----------------------------------------------------------------------------
def _patch_expand_kernel(xm_ref, x0_ref, xp_ref, wps_ref, wup_ref, g_ref, b_ref,
                         o_ref, *, Z, H, W, c_half):
    C = x0_ref.shape[-1]
    H2, W2 = 2 * H, 2 * W
    z = pl.program_id(1)

    # ---- trilinear x2: y/x-upsample the three (clamped) coarse z-planes -------
    um = _upsample2_plane(xm_ref[...].astype(jnp.float32))   # plane clamp(z-1)
    u0 = _upsample2_plane(x0_ref[...].astype(jnp.float32))   # plane z
    up = _upsample2_plane(xp_ref[...].astype(jnp.float32))   # plane clamp(z+1)

    # z interpolation -> the four fine z-planes used by this step's conv taps.
    # Clamped halo index_maps give the upsample edge clamp; the conv's zero
    # padding at fine z = -1 / 2Z is applied via the scalar masks below.
    not_first = (z > 0).astype(jnp.float32)
    not_last = (z < Z - 1).astype(jnp.float32)
    fA = (0.75 * um + 0.25 * u0) * not_first                 # fine z = 2z-1
    fB = 0.25 * um + 0.75 * u0                               # fine z = 2z
    fC = 0.75 * u0 + 0.25 * up                               # fine z = 2z+1
    fD = (0.25 * u0 + 0.75 * up) * not_last                  # fine z = 2z+2

    # ---- 9-tap y/x im2col per fine plane, built once (K = 9*C) ---------------
    cols = [_im2col9(_zero_pad_hw(f.astype(jnp.bfloat16))) for f in (fA, fB, fC, fD)]

    # ---- pixel_shuffle_conv fused over all 8 sub-positions (N = 8*c_half) ----
    x2d = x0_ref[...].reshape(H * W, C)
    ps_all = jnp.dot(x2d, wps_ref[...], preferred_element_type=jnp.float32)

    gamma = g_ref[...].reshape(1, 1, c_half)
    beta = b_ref[...].reshape(1, 1, c_half)
    w0, w1, w2 = wup_ref[0], wup_ref[1], wup_ref[2]          # (9*C, c_half) each

    for rz in range(2):                                      # two fine-z rows
        # -- upsample_conv (3x3x3, zero pad) folded with cat_conv bottom half --
        conv = (jnp.dot(cols[rz + 0], w0, preferred_element_type=jnp.float32)
                + jnp.dot(cols[rz + 1], w1, preferred_element_type=jnp.float32)
                + jnp.dot(cols[rz + 2], w2, preferred_element_type=jnp.float32))
        conv = conv.reshape(H2, W2, c_half)

        # -- PixelShuffle3D interleave of the fused ps matmul (cat_conv folded) --
        rows = []
        for ry in range(2):
            blks = []
            for rx in range(2):
                s = rz * 4 + ry * 2 + rx
                blk = ps_all[:, s * c_half:(s + 1) * c_half]
                blks.append(blk.reshape(H, W, 1, c_half))
            rows.append(jnp.concatenate(blks, axis=2).reshape(H, 1, W2, c_half))
        ps_fine = jnp.concatenate(rows, axis=1).reshape(H2, W2, c_half)

        # -- LayerNorm(dim // 2), eps=1e-5, biased variance (torch parity) -----
        y = conv + ps_fine
        mean = jnp.mean(y, axis=-1, keepdims=True)
        var = jnp.mean(jnp.square(y - mean), axis=-1, keepdims=True)
        y = (y - mean) * lax.rsqrt(var + 1e-5) * gamma + beta

        # -- lane-dense store: last dim = 2W*c_half (multiple of 128 typically) --
        o_ref[rz] = y.reshape(H2, W2 * c_half).astype(o_ref.dtype)


# ----------------------------------------------------------------------------
# PatchExpandingConcat forward (wrapper: weight folding + pallas_call only)
# ----------------------------------------------------------------------------
def patch_expanding_concat(x, params, *, input_resolution, dim, dim_scale=2):
    assert dim_scale == 2, "kernel is specialized for dim_scale=2"
    assert dim % 2 == 0
    Z, H, W = input_resolution
    B, L, C = x.shape
    assert L == Z * H * W and C == dim
    assert Z % 2 == 0 and H % 2 == 0 and W % 2 == 0
    c_half = dim // 2
    Z2, H2, W2 = 2 * Z, 2 * H, 2 * W

    # x.permute(0,2,1).view(B,C,Z,H,W) in NCDHW == (B,Z,H,W,C) in NDHWC.
    xs = x.reshape(B, Z, H, W, C).astype(jnp.bfloat16)

    # ---- fold cat_conv (bias-free 1x1x1) into both producer convs (exact) ----
    # Assumes torch concat order [pixel_shuffle, upsample] and the standard
    # PixelShuffle3D channel split (c_out, rz, ry, rx)  -> sub-position s = s::8.
    w_cat_top = params["w_cat"][:c_half]
    w_cat_bot = params["w_cat"][c_half:]
    wps_fold = jnp.concatenate(
        [params["w_ps"][:, s::8] @ w_cat_top for s in range(8)], axis=1
    ).astype(jnp.bfloat16)                                   # (C, 8*c_half)
    wup_fold = (params["w_up"].reshape(27, C, c_half) @ w_cat_bot
                ).reshape(3, 9 * C, c_half).astype(jnp.bfloat16)  # per-kz (9C, c/2)
    gamma = params["ln_gamma"].reshape(1, c_half).astype(jnp.float32)
    beta = params["ln_beta"].reshape(1, c_half).astype(jnp.float32)

    kern = functools.partial(_patch_expand_kernel, Z=Z, H=H, W=W, c_half=c_half)

    plane_block = (None, None, H, W, C)
    xm_spec = pl.BlockSpec(plane_block, lambda b, z: (b, jnp.maximum(z - 1, 0), 0, 0, 0))
    x0_spec = pl.BlockSpec(plane_block, lambda b, z: (b, z, 0, 0, 0))
    xp_spec = pl.BlockSpec(plane_block, lambda b, z: (b, jnp.minimum(z + 1, Z - 1), 0, 0, 0))
    wps_spec = pl.BlockSpec((C, 8 * c_half), lambda b, z: (0, 0))
    wup_spec = pl.BlockSpec((3, 9 * C, c_half), lambda b, z: (0, 0, 0))
    vec_spec = pl.BlockSpec((1, c_half), lambda b, z: (0, 0))
    out_spec = pl.BlockSpec((None, 2, H2, W2 * c_half), lambda b, z: (b, z, 0, 0))

    n_fine = B * Z2 * H2 * W2
    cost = pl.CostEstimate(
        flops=2 * n_fine * C * c_half * 28,
        transcendentals=n_fine,
        bytes_accessed=(3 * xs.size * 2                      # coarse planes (halo 3x)
                        + wps_fold.size * 2 + wup_fold.size * 2
                        + n_fine * c_half * 4),              # f32 output
    )

    out = pl.pallas_call(
        kern,
        out_shape=jax.ShapeDtypeStruct((B, Z2, H2, W2 * c_half), jnp.float32),
        grid=(B, Z),
        in_specs=[xm_spec, x0_spec, xp_spec, wps_spec, wup_spec, vec_spec, vec_spec],
        out_specs=out_spec,
        compiler_params=pltpu.CompilerParams(
            dimension_semantics=("parallel", "parallel"),
            vmem_limit_bytes=48 * 1024 * 1024,               # v7x-safe (64 MiB/TC)
        ),
        cost_estimate=cost,
    )(xs, xs, xs, wps_fold, wup_fold, gamma, beta)

    # (B, 2Z, 2H, 2W*c_half) -> (B, 8L, dim//2): contiguous, free reshape.
    return out.reshape(B, Z2 * H2 * W2, c_half)


# ----------------------------------------------------------------------------
# Plain-JAX reference (direct port of the PyTorch forward) for self-checking
# ----------------------------------------------------------------------------
def _upsample2_axis(x, axis):
    n = x.shape[axis]
    first = lax.slice_in_dim(x, 0, 1, axis=axis)
    last = lax.slice_in_dim(x, n - 1, n, axis=axis)
    prev = jnp.concatenate([first, lax.slice_in_dim(x, 0, n - 1, axis=axis)], axis=axis)
    nxt = jnp.concatenate([lax.slice_in_dim(x, 1, n, axis=axis), last], axis=axis)
    even = 0.25 * prev + 0.75 * x
    odd = 0.75 * x + 0.25 * nxt
    out = jnp.stack([even, odd], axis=axis + 1)
    shape = list(x.shape)
    shape[axis] = 2 * n
    return out.reshape(shape)


def trilinear_upsample2(x):
    for axis in (1, 2, 3):
        x = _upsample2_axis(x, axis)
    return x


def _reference_forward(x, params, *, input_resolution, dim):
    Z, H, W = input_resolution
    B, L, C = x.shape
    c_half = dim // 2
    xs = x.reshape(B, Z, H, W, C)

    y = xs @ params["w_ps"]                                  # (B,Z,H,W,4*dim)
    y = y.reshape(B, Z, H, W, c_half, 2, 2, 2)
    y = y.transpose(0, 1, 5, 2, 6, 3, 7, 4)
    ps = y.reshape(B, 2 * Z, 2 * H, 2 * W, c_half)

    up = trilinear_upsample2(xs)
    pad = jnp.pad(up, ((0, 0), (1, 1), (1, 1), (1, 1), (0, 0)))
    w_up = params["w_up"].reshape(27, C, c_half)
    uc = jnp.zeros((B, 2 * Z, 2 * H, 2 * W, c_half), jnp.float32)
    t = 0
    for dz in range(3):
        for dy in range(3):
            for dx in range(3):
                uc = uc + pad[:, dz:dz + 2 * Z, dy:dy + 2 * H, dx:dx + 2 * W, :] @ w_up[t]
                t += 1

    pre = ps @ params["w_cat"][:c_half] + uc @ params["w_cat"][c_half:]
    mean = pre.mean(-1, keepdims=True)
    var = jnp.square(pre - mean).mean(-1, keepdims=True)
    out = (pre - mean) * lax.rsqrt(var + 1e-5) * params["ln_gamma"] + params["ln_beta"]
    return out.reshape(B, 8 * L, c_half)


def init_params(key, dim, dim_scale=2):
    k1, k2, k3, k4, k5 = jax.random.split(key, 5)
    c_half = dim // 2
    c_ps = dim * dim_scale ** 3 // 2
    return {
        "w_ps": 0.05 * jax.random.normal(k1, (dim, c_ps), jnp.float32),
        "w_up": 0.05 * jax.random.normal(k2, (27 * dim, c_half), jnp.float32),
        "w_cat": 0.05 * jax.random.normal(k3, (dim, c_half), jnp.float32),
        "ln_gamma": 1.0 + 0.1 * jax.random.normal(k4, (c_half,), jnp.float32),
        "ln_beta": 0.1 * jax.random.normal(k5, (c_half,), jnp.float32),
    }


if __name__ == "__main__":
    key = jax.random.PRNGKey(0)
    kx, kp = jax.random.split(key)

    B, dim = 2, 32
    input_resolution = (4, 4, 4)
    Z, H, W = input_resolution
    L = Z * H * W

    x = jax.random.normal(kx, (B, L, dim), jnp.float32)      # (2, 64, 32)
    params = init_params(kp, dim)

    fwd = jax.jit(functools.partial(
        patch_expanding_concat,
        input_resolution=input_resolution, dim=dim, dim_scale=2))
    out = fwd(x, params)
    jax.block_until_ready(out)
    assert out.shape == (B, L * 8, dim // 2), out.shape
    assert bool(jnp.isfinite(out).all())

    # parity check against the plain-JAX port of the PyTorch module (bf16 tolerance)
    ref = jax.jit(functools.partial(
        _reference_forward, input_resolution=input_resolution, dim=dim))(x, params)
    err = float(jnp.max(jnp.abs(out - ref)))
    assert err < 0.2, f"max abs err vs reference: {err}"

    print("KERNEL_OK")
</pallas_src>

<mosaic_0001>
module attributes {stable_mosaic.version = 11 : i64} {
  func.func @_patch_expand_kernel(%arg0: i32, %arg1: i32, %arg2: memref<1x1x4x4x32xbf16, #tpu.memory_space<vmem>>, %arg3: memref<1x1x4x4x32xbf16, #tpu.memory_space<vmem>>, %arg4: memref<1x1x4x4x32xbf16, #tpu.memory_space<vmem>>, %arg5: memref<32x128xbf16, #tpu.memory_space<vmem>>, %arg6: memref<3x288x16xbf16, #tpu.memory_space<vmem>>, %arg7: memref<1x16xf32, #tpu.memory_space<vmem>>, %arg8: memref<1x16xf32, #tpu.memory_space<vmem>>, %arg9: memref<1x2x8x128xf32, #tpu.memory_space<vmem>>) attributes {dimension_semantics = [#tpu.dimension_semantics<parallel>, #tpu.dimension_semantics<parallel>], iteration_bounds = array<i64: 2, 4>, scalar_prefetch = 0 : i64, scratch_operands = 0 : i64, tpu.core_type = #tpu.core_type<tc>, window_params = [{transform_indices = @transform_0, window_bounds = array<i64: 1, 1, 4, 4, 32>}, {transform_indices = @transform_1, window_bounds = array<i64: 1, 1, 4, 4, 32>}, {transform_indices = @transform_2, window_bounds = array<i64: 1, 1, 4, 4, 32>}, {pipeline_mode = #tpu.pipeline_mode<synchronous>, transform_indices = @transform_3, window_bounds = array<i64: 32, 128>}, {pipeline_mode = #tpu.pipeline_mode<synchronous>, transform_indices = @transform_4, window_bounds = array<i64: 3, 288, 16>}, {pipeline_mode = #tpu.pipeline_mode<synchronous>, transform_indices = @transform_5, window_bounds = array<i64: 1, 16>}, {pipeline_mode = #tpu.pipeline_mode<synchronous>, transform_indices = @transform_6, window_bounds = array<i64: 1, 16>}, {transform_indices = @transform_7, window_bounds = array<i64: 1, 2, 8, 128>}]} {
    %c0 = arith.constant 0 : index
    %c0_0 = arith.constant 0 : index
    %c0_1 = arith.constant 0 : index
    %c0_2 = arith.constant 0 : index
    %c0_3 = arith.constant 0 : index
    %0 = vector.load %arg2[%c0, %c0_0, %c0_1, %c0_2, %c0_3] : memref<1x1x4x4x32xbf16, #tpu.memory_space<vmem>>, vector<1x1x4x4x32xbf16>
    %1 = vector.shape_cast %0 : vector<1x1x4x4x32xbf16> to vector<4x4x32xbf16>
    %2 = arith.extf %1 : vector<4x4x32xbf16> to vector<4x4x32xf32>
    %3 = vector.extract_strided_slice %2 {offsets = [0, 0, 0], sizes = [4, 1, 32], strides = [1, 1, 1]} : vector<4x4x32xf32> to vector<4x1x32xf32>
    %4 = vector.extract_strided_slice %2 {offsets = [0, 0, 0], sizes = [4, 3, 32], strides = [1, 1, 1]} : vector<4x4x32xf32> to vector<4x3x32xf32>
    %5 = tpu.concatenate %3, %4 in 1 : vector<4x1x32xf32>, vector<4x3x32xf32> -> vector<4x4x32xf32>
    %6 = vector.extract_strided_slice %2 {offsets = [0, 1, 0], sizes = [4, 3, 32], strides = [1, 1, 1]} : vector<4x4x32xf32> to vector<4x3x32xf32>
    %7 = vector.extract_strided_slice %2 {offsets = [0, 3, 0], sizes = [4, 1, 32], strides = [1, 1, 1]} : vector<4x4x32xf32> to vector<4x1x32xf32>
    %8 = tpu.concatenate %6, %7 in 1 : vector<4x3x32xf32>, vector<4x1x32xf32> -> vector<4x4x32xf32>
    %cst = arith.constant 2.500000e-01 : f32
    %9 = vector.broadcast %cst : f32 to vector<4x4x32xf32>
    %10 = arith.mulf %9, %5 : vector<4x4x32xf32>
    %cst_4 = arith.constant 7.500000e-01 : f32
    %11 = vector.broadcast %cst_4 : f32 to vector<4x4x32xf32>
    %12 = arith.mulf %11, %2 : vector<4x4x32xf32>
    %13 = arith.addf %10, %12 : vector<4x4x32xf32>
    %cst_5 = arith.constant 7.500000e-01 : f32
    %14 = vector.broadcast %cst_5 : f32 to vector<4x4x32xf32>
    %15 = arith.mulf %14, %2 : vector<4x4x32xf32>
    %cst_6 = arith.constant 2.500000e-01 : f32
    %16 = vector.broadcast %cst_6 : f32 to vector<4x4x32xf32>
    %17 = arith.mulf %16, %8 : vector<4x4x32xf32>
    %18 = arith.addf %15, %17 : vector<4x4x32xf32>
    %19 = vector.shape_cast %13 : vector<4x4x32xf32> to vector<4x4x1x32xf32>
    %20 = vector.shape_cast %18 : vector<4x4x32xf32> to vector<4x4x1x32xf32>
    %21 = tpu.concatenate %19, %20 in 2 : vector<4x4x1x32xf32>, vector<4x4x1x32xf32> -> vector<4x4x2x32xf32>
    %22 = vector.shape_cast %21 : vector<4x4x2x32xf32> to vector<4x8x32xf32>
    %23 = vector.extract_strided_slice %22 {offsets = [0, 0, 0], sizes = [1, 8, 32], strides = [1, 1, 1]} : vector<4x8x32xf32> to vector<1x8x32xf32>
    %24 = vector.extract_strided_slice %22 {offsets = [0, 0, 0], sizes = [3, 8, 32], strides = [1, 1, 1]} : vector<4x8x32xf32> to vector<3x8x32xf32>
    %25 = tpu.concatenate %23, %24 in 0 : vector<1x8x32xf32>, vector<3x8x32xf32> -> vector<4x8x32xf32>
    %26 = vector.extract_strided_slice %22 {offsets = [1, 0, 0], sizes = [3, 8, 32], strides = [1, 1, 1]} : vector<4x8x32xf32> to vector<3x8x32xf32>
    %27 = vector.extract_strided_slice %22 {offsets = [3, 0, 0], sizes = [1, 8, 32], strides = [1, 1, 1]} : vector<4x8x32xf32> to vector<1x8x32xf32>
    %28 = tpu.concatenate %26, %27 in 0 : vector<3x8x32xf32>, vector<1x8x32xf32> -> vector<4x8x32xf32>
    %cst_7 = arith.constant 2.500000e-01 : f32
    %29 = vector.broadcast %cst_7 : f32 to vector<4x8x32xf32>
    %30 = arith.mulf %29, %25 : vector<4x8x32xf32>
    %cst_8 = arith.constant 7.500000e-01 : f32
    %31 = vector.broadcast %cst_8 : f32 to vector<4x8x32xf32>
    %32 = arith.mulf %31, %22 : vector<4x8x32xf32>
    %33 = arith.addf %30, %32 : vector<4x8x32xf32>
    %cst_9 = arith.constant 7.500000e-01 : f32
    %34 = vector.broadcast %cst_9 : f32 to vector<4x8x32xf32>
    %35 = arith.mulf %34, %22 : vector<4x8x32xf32>
    %cst_10 = arith.constant 2.500000e-01 : f32
    %36 = vector.broadcast %cst_10 : f32 to vector<4x8x32xf32>
    %37 = arith.mulf %36, %28 : vector<4x8x32xf32>
    %38 = arith.addf %35, %37 : vector<4x8x32xf32>
    %39 = vector.shape_cast %33 : vector<4x8x32xf32> to vector<4x1x8x32xf32>
    %40 = vector.shape_cast %38 : vector<4x8x32xf32> to vector<4x1x8x32xf32>
    %41 = tpu.concatenate %39, %40 in 1 : vector<4x1x8x32xf32>, vector<4x1x8x32xf32> -> vector<4x2x8x32xf32>
    %42 = vector.shape_cast %41 : vector<4x2x8x32xf32> to vector<8x8x32xf32>
    %c0_11 = arith.constant 0 : index
    %c0_12 = arith.constant 0 : index
    %c0_13 = arith.constant 0 : index
    %c0_14 = arith.constant 0 : index
    %c0_15 = arith.constant 0 : index
    %43 = vector.load %arg3[%c0_11, %c0_12, %c0_13, %c0_14, %c0_15] : memref<1x1x4x4x32xbf16, #tpu.memory_space<vmem>>, vector<1x1x4x4x32xbf16>
    %44 = vector.shape_cast %43 : vector<1x1x4x4x32xbf16> to vector<4x4x32xbf16>
    %45 = arith.extf %44 : vector<4x4x32xbf16> to vector<4x4x32xf32>
    %46 = vector.extract_strided_slice %45 {offsets = [0, 0, 0], sizes = [4, 1, 32], strides = [1, 1, 1]} : vector<4x4x32xf32> to vector<4x1x32xf32>
    %47 = vector.extract_strided_slice %45 {offsets = [0, 0, 0], sizes = [4, 3, 32], strides = [1, 1, 1]} : vector<4x4x32xf32> to vector<4x3x32xf32>
    %48 = tpu.concatenate %46, %47 in 1 : vector<4x1x32xf32>, vector<4x3x32xf32> -> vector<4x4x32xf32>
    %49 = vector.extract_strided_slice %45 {offsets = [0, 1, 0], sizes = [4, 3, 32], strides = [1, 1, 1]} : vector<4x4x32xf32> to vector<4x3x32xf32>
    %50 = vector.extract_strided_slice %45 {offsets = [0, 3, 0], sizes = [4, 1, 32], strides = [1, 1, 1]} : vector<4x4x32xf32> to vector<4x1x32xf32>
    %51 = tpu.concatenate %49, %50 in 1 : vector<4x3x32xf32>, vector<4x1x32xf32> -> vector<4x4x32xf32>
    %cst_16 = arith.constant 2.500000e-01 : f32
    %52 = vector.broadcast %cst_16 : f32 to vector<4x4x32xf32>
    %53 = arith.mulf %52, %48 : vector<4x4x32xf32>
    %cst_17 = arith.constant 7.500000e-01 : f32
    %54 = vector.broadcast %cst_17 : f32 to vector<4x4x32xf32>
    %55 = arith.mulf %54, %45 : vector<4x4x32xf32>
    %56 = arith.addf %53, %55 : vector<4x4x32xf32>
    %cst_18 = arith.constant 7.500000e-01 : f32
    %57 = vector.broadcast %cst_18 : f32 to vector<4x4x32xf32>
    %58 = arith.mulf %57, %45 : vector<4x4x32xf32>
    %cst_19 = arith.constant 2.500000e-01 : f32
    %59 = vector.broadcast %cst_19 : f32 to vector<4x4x32xf32>
    %60 = arith.mulf %59, %51 : vector<4x4x32xf32>
    %61 = arith.addf %58, %60 : vector<4x4x32xf32>
    %62 = vector.shape_cast %56 : vector<4x4x32xf32> to vector<4x4x1x32xf32>
    %63 = vector.shape_cast %61 : vector<4x4x32xf32> to vector<4x4x1x32xf32>
    %64 = tpu.concatenate %62, %63 in 2 : vector<4x4x1x32xf32>, vector<4x4x1x32xf32> -> vector<4x4x2x32xf32>
    %65 = vector.shape_cast %64 : vector<4x4x2x32xf32> to vector<4x8x32xf32>
    %66 = vector.extract_strided_slice %65 {offsets = [0, 0, 0], sizes = [1, 8, 32], strides = [1, 1, 1]} : vector<4x8x32xf32> to vector<1x8x32xf32>
    %67 = vector.extract_strided_slice %65 {offsets = [0, 0, 0], sizes = [3, 8, 32], strides = [1, 1, 1]} : vector<4x8x32xf32> to vector<3x8x32xf32>
    %68 = tpu.concatenate %66, %67 in 0 : vector<1x8x32xf32>, vector<3x8x32xf32> -> vector<4x8x32xf32>
    %69 = vector.extract_strided_slice %65 {offsets = [1, 0, 0], sizes = [3, 8, 32], strides = [1, 1, 1]} : vector<4x8x32xf32> to vector<3x8x32xf32>
    %70 = vector.extract_strided_slice %65 {offsets = [3, 0, 0], sizes = [1, 8, 32], strides = [1, 1, 1]} : vector<4x8x32xf32> to vector<1x8x32xf32>
    %71 = tpu.concatenate %69, %70 in 0 : vector<3x8x32xf32>, vector<1x8x32xf32> -> vector<4x8x32xf32>
    %cst_20 = arith.constant 2.500000e-01 : f32
    %72 = vector.broadcast %cst_20 : f32 to vector<4x8x32xf32>
    %73 = arith.mulf %72, %68 : vector<4x8x32xf32>
    %cst_21 = arith.constant 7.500000e-01 : f32
    %74 = vector.broadcast %cst_21 : f32 to vector<4x8x32xf32>
    %75 = arith.mulf %74, %65 : vector<4x8x32xf32>
    %76 = arith.addf %73, %75 : vector<4x8x32xf32>
    %cst_22 = arith.constant 7.500000e-01 : f32
    %77 = vector.broadcast %cst_22 : f32 to vector<4x8x32xf32>
    %78 = arith.mulf %77, %65 : vector<4x8x32xf32>
    %cst_23 = arith.constant 2.500000e-01 : f32
    %79 = vector.broadcast %cst_23 : f32 to vector<4x8x32xf32>
    %80 = arith.mulf %79, %71 : vector<4x8x32xf32>
    %81 = arith.addf %78, %80 : vector<4x8x32xf32>
    %82 = vector.shape_cast %76 : vector<4x8x32xf32> to vector<4x1x8x32xf32>
    %83 = vector.shape_cast %81 : vector<4x8x32xf32> to vector<4x1x8x32xf32>
    %84 = tpu.concatenate %82, %83 in 1 : vector<4x1x8x32xf32>, vector<4x1x8x32xf32> -> vector<4x2x8x32xf32>
    %85 = vector.shape_cast %84 : vector<4x2x8x32xf32> to vector<8x8x32xf32>
    %c0_24 = arith.constant 0 : index
    %c0_25 = arith.constant 0 : index
    %c0_26 = arith.constant 0 : index
    %c0_27 = arith.constant 0 : index
    %c0_28 = arith.constant 0 : index
    %86 = vector.load %arg4[%c0_24, %c0_25, %c0_26, %c0_27, %c0_28] : memref<1x1x4x4x32xbf16, #tpu.memory_space<vmem>>, vector<1x1x4x4x32xbf16>
    %87 = vector.shape_cast %86 : vector<1x1x4x4x32xbf16> to vector<4x4x32xbf16>
    %88 = arith.extf %87 : vector<4x4x32xbf16> to vector<4x4x32xf32>
    %89 = vector.extract_strided_slice %88 {offsets = [0, 0, 0], sizes = [4, 1, 32], strides = [1, 1, 1]} : vector<4x4x32xf32> to vector<4x1x32xf32>
    %90 = vector.extract_strided_slice %88 {offsets = [0, 0, 0], sizes = [4, 3, 32], strides = [1, 1, 1]} : vector<4x4x32xf32> to vector<4x3x32xf32>
    %91 = tpu.concatenate %89, %90 in 1 : vector<4x1x32xf32>, vector<4x3x32xf32> -> vector<4x4x32xf32>
    %92 = vector.extract_strided_slice %88 {offsets = [0, 1, 0], sizes = [4, 3, 32], strides = [1, 1, 1]} : vector<4x4x32xf32> to vector<4x3x32xf32>
    %93 = vector.extract_strided_slice %88 {offsets = [0, 3, 0], sizes = [4, 1, 32], strides = [1, 1, 1]} : vector<4x4x32xf32> to vector<4x1x32xf32>
    %94 = tpu.concatenate %92, %93 in 1 : vector<4x3x32xf32>, vector<4x1x32xf32> -> vector<4x4x32xf32>
    %cst_29 = arith.constant 2.500000e-01 : f32
    %95 = vector.broadcast %cst_29 : f32 to vector<4x4x32xf32>
    %96 = arith.mulf %95, %91 : vector<4x4x32xf32>
    %cst_30 = arith.constant 7.500000e-01 : f32
    %97 = vector.broadcast %cst_30 : f32 to vector<4x4x32xf32>
    %98 = arith.mulf %97, %88 : vector<4x4x32xf32>
    %99 = arith.addf %96, %98 : vector<4x4x32xf32>
    %cst_31 = arith.constant 7.500000e-01 : f32
    %100 = vector.broadcast %cst_31 : f32 to vector<4x4x32xf32>
    %101 = arith.mulf %100, %88 : vector<4x4x32xf32>
    %cst_32 = arith.constant 2.500000e-01 : f32
    %102 = vector.broadcast %cst_32 : f32 to vector<4x4x32xf32>
    %103 = arith.mulf %102, %94 : vector<4x4x32xf32>
    %104 = arith.addf %101, %103 : vector<4x4x32xf32>
    %105 = vector.shape_cast %99 : vector<4x4x32xf32> to vector<4x4x1x32xf32>
    %106 = vector.shape_cast %104 : vector<4x4x32xf32> to vector<4x4x1x32xf32>
    %107 = tpu.concatenate %105, %106 in 2 : vector<4x4x1x32xf32>, vector<4x4x1x32xf32> -> vector<4x4x2x32xf32>
    %108 = vector.shape_cast %107 : vector<4x4x2x32xf32> to vector<4x8x32xf32>
    %109 = vector.extract_strided_slice %108 {offsets = [0, 0, 0], sizes = [1, 8, 32], strides = [1, 1, 1]} : vector<4x8x32xf32> to vector<1x8x32xf32>
    %110 = vector.extract_strided_slice %108 {offsets = [0, 0, 0], sizes = [3, 8, 32], strides = [1, 1, 1]} : vector<4x8x32xf32> to vector<3x8x32xf32>
    %111 = tpu.concatenate %109, %110 in 0 : vector<1x8x32xf32>, vector<3x8x32xf32> -> vector<4x8x32xf32>
    %112 = vector.extract_strided_slice %108 {offsets = [1, 0, 0], sizes = [3, 8, 32], strides = [1, 1, 1]} : vector<4x8x32xf32> to vector<3x8x32xf32>
    %113 = vector.extract_strided_slice %108 {offsets = [3, 0, 0], sizes = [1, 8, 32], strides = [1, 1, 1]} : vector<4x8x32xf32> to vector<1x8x32xf32>
    %114 = tpu.concatenate %112, %113 in 0 : vector<3x8x32xf32>, vector<1x8x32xf32> -> vector<4x8x32xf32>
    %cst_33 = arith.constant 2.500000e-01 : f32
    %115 = vector.broadcast %cst_33 : f32 to vector<4x8x32xf32>
    %116 = arith.mulf %115, %111 : vector<4x8x32xf32>
    %cst_34 = arith.constant 7.500000e-01 : f32
    %117 = vector.broadcast %cst_34 : f32 to vector<4x8x32xf32>
    %118 = arith.mulf %117, %108 : vector<4x8x32xf32>
    %119 = arith.addf %116, %118 : vector<4x8x32xf32>
    %cst_35 = arith.constant 7.500000e-01 : f32
    %120 = vector.broadcast %cst_35 : f32 to vector<4x8x32xf32>
    %121 = arith.mulf %120, %108 : vector<4x8x32xf32>
    %cst_36 = arith.constant 2.500000e-01 : f32
    %122 = vector.broadcast %cst_36 : f32 to vector<4x8x32xf32>
    %123 = arith.mulf %122, %114 : vector<4x8x32xf32>
    %124 = arith.addf %121, %123 : vector<4x8x32xf32>
    %125 = vector.shape_cast %119 : vector<4x8x32xf32> to vector<4x1x8x32xf32>
    %126 = vector.shape_cast %124 : vector<4x8x32xf32> to vector<4x1x8x32xf32>
    %127 = tpu.concatenate %125, %126 in 1 : vector<4x1x8x32xf32>, vector<4x1x8x32xf32> -> vector<4x2x8x32xf32>
    %128 = vector.shape_cast %127 : vector<4x2x8x32xf32> to vector<8x8x32xf32>
    %c0_i32 = arith.constant 0 : i32
    %129 = arith.cmpi sgt, %arg1, %c0_i32 : i32
    %130 = arith.extui %129 : i1 to i32
    %131 = arith.sitofp %130 : i32 to f32
    %c3_i32 = arith.constant 3 : i32
    %132 = arith.cmpi slt, %arg1, %c3_i32 : i32
    %133 = arith.extui %132 : i1 to i32
    %134 = arith.sitofp %133 : i32 to f32
    %cst_37 = arith.constant 7.500000e-01 : f32
    %135 = vector.broadcast %cst_37 : f32 to vector<8x8x32xf32>
    %136 = arith.mulf %135, %42 : vector<8x8x32xf32>
    %cst_38 = arith.constant 2.500000e-01 : f32
    %137 = vector.broadcast %cst_38 : f32 to vector<8x8x32xf32>
    %138 = arith.mulf %137, %85 : vector<8x8x32xf32>
    %139 = arith.addf %136, %138 : vector<8x8x32xf32>
    %140 = vector.broadcast %131 : f32 to vector<8x8x32xf32>
    %141 = arith.mulf %139, %140 : vector<8x8x32xf32>
    %cst_39 = arith.constant 2.500000e-01 : f32
    %142 = vector.broadcast %cst_39 : f32 to vector<8x8x32xf32>
    %143 = arith.mulf %142, %42 : vector<8x8x32xf32>
    %cst_40 = arith.constant 7.500000e-01 : f32
    %144 = vector.broadcast %cst_40 : f32 to vector<8x8x32xf32>
    %145 = arith.mulf %144, %85 : vector<8x8x32xf32>
    %146 = arith.addf %143, %145 : vector<8x8x32xf32>
    %cst_41 = arith.constant 7.500000e-01 : f32
    %147 = vector.broadcast %cst_41 : f32 to vector<8x8x32xf32>
    %148 = arith.mulf %147, %85 : vector<8x8x32xf32>
    %cst_42 = arith.constant 2.500000e-01 : f32
    %149 = vector.broadcast %cst_42 : f32 to vector<8x8x32xf32>
    %150 = arith.mulf %149, %128 : vector<8x8x32xf32>
    %151 = arith.addf %148, %150 : vector<8x8x32xf32>
    %cst_43 = arith.constant 2.500000e-01 : f32
    %152 = vector.broadcast %cst_43 : f32 to vector<8x8x32xf32>
    %153 = arith.mulf %152, %85 : vector<8x8x32xf32>
    %cst_44 = arith.constant 7.500000e-01 : f32
    %154 = vector.broadcast %cst_44 : f32 to vector<8x8x32xf32>
    %155 = arith.mulf %154, %128 : vector<8x8x32xf32>
    %156 = arith.addf %153, %155 : vector<8x8x32xf32>
    %157 = vector.broadcast %134 : f32 to vector<8x8x32xf32>
    %158 = arith.mulf %156, %157 : vector<8x8x32xf32>
    %159 = arith.truncf %141 : vector<8x8x32xf32> to vector<8x8x32xbf16>
    %cst_45 = arith.constant 0.000000e+00 : bf16
    %160 = vector.broadcast %cst_45 : bf16 to vector<1x8x32xbf16>
    %161 = tpu.concatenate %160, %159, %160 in 0 : vector<1x8x32xbf16>, vector<8x8x32xbf16>, vector<1x8x32xbf16> -> vector<10x8x32xbf16>
    %cst_46 = arith.constant 0.000000e+00 : bf16
    %162 = vector.broadcast %cst_46 : bf16 to vector<10x1x32xbf16>
    %163 = tpu.concatenate %162, %161, %162 in 1 : vector<10x1x32xbf16>, vector<10x8x32xbf16>, vector<10x1x32xbf16> -> vector<10x10x32xbf16>
    %164 = vector.extract_strided_slice %163 {offsets = [0, 0, 0], sizes = [8, 8, 32], strides = [1, 1, 1]} : vector<10x10x32xbf16> to vector<8x8x32xbf16>
    %165 = vector.extract_strided_slice %163 {offsets = [0, 1, 0], sizes = [8, 8, 32], strides = [1, 1, 1]} : vector<10x10x32xbf16> to vector<8x8x32xbf16>
    %166 = vector.extract_strided_slice %163 {offsets = [0, 2, 0], sizes = [8, 8, 32], strides = [1, 1, 1]} : vector<10x10x32xbf16> to vector<8x8x32xbf16>
    %167 = vector.extract_strided_slice %163 {offsets = [1, 0, 0], sizes = [8, 8, 32], strides = [1, 1, 1]} : vector<10x10x32xbf16> to vector<8x8x32xbf16>
    %168 = vector.extract_strided_slice %163 {offsets = [1, 1, 0], sizes = [8, 8, 32], strides = [1, 1, 1]} : vector<10x10x32xbf16> to vector<8x8x32xbf16>
    %169 = vector.extract_strided_slice %163 {offsets = [1, 2, 0], sizes = [8, 8, 32], strides = [1, 1, 1]} : vector<10x10x32xbf16> to vector<8x8x32xbf16>
    %170 = vector.extract_strided_slice %163 {offsets = [2, 0, 0], sizes = [8, 8, 32], strides = [1, 1, 1]} : vector<10x10x32xbf16> to vector<8x8x32xbf16>
    %171 = vector.extract_strided_slice %163 {offsets = [2, 1, 0], sizes = [8, 8, 32], strides = [1, 1, 1]} : vector<10x10x32xbf16> to vector<8x8x32xbf16>
    %172 = vector.extract_strided_slice %163 {offsets = [2, 2, 0], sizes = [8, 8, 32], strides = [1, 1, 1]} : vector<10x10x32xbf16> to vector<8x8x32xbf16>
    %173 = tpu.concatenate %164, %165, %166, %167, %168, %169, %170, %171, %172 in 2 : vector<8x8x32xbf16>, vector<8x8x32xbf16>, vector<8x8x32xbf16>, vector<8x8x32xbf16>, vector<8x8x32xbf16>, vector<8x8x32xbf16>, vector<8x8x32xbf16>, vector<8x8x32xbf16>, vector<8x8x32xbf16> -> vector<8x8x288xbf16>
    %174 = vector.shape_cast %173 : vector<8x8x288xbf16> to vector<64x288xbf16>
    %175 = arith.truncf %146 : vector<8x8x32xf32> to vector<8x8x32xbf16>
    %cst_47 = arith.constant 0.000000e+00 : bf16
    %176 = vector.broadcast %cst_47 : bf16 to vector<1x8x32xbf16>
    %177 = tpu.concatenate %176, %175, %176 in 0 : vector<1x8x32xbf16>, vector<8x8x32xbf16>, vector<1x8x32xbf16> -> vector<10x8x32xbf16>
    %cst_48 = arith.constant 0.000000e+00 : bf16
    %178 = vector.broadcast %cst_48 : bf16 to vector<10x1x32xbf16>
    %179 = tpu.concatenate %178, %177, %178 in 1 : vector<10x1x32xbf16>, vector<10x8x32xbf16>, vector<10x1x32xbf16> -> vector<10x10x32xbf16>
    %180 = vector.extract_strided_slice %179 {offsets = [0, 0, 0], sizes = [8, 8, 32], strides = [1, 1, 1]} : vector<10x10x32xbf16> to vector<8x8x32xbf16>
    %181 = vector.extract_strided_slice %179 {offsets = [0, 1, 0], sizes = [8, 8, 32], strides = [1, 1, 1]} : vector<10x10x32xbf16> to vector<8x8x32xbf16>
    %182 = vector.extract_strided_slice %179 {offsets = [0, 2, 0], sizes = [8, 8, 32], strides = [1, 1, 1]} : vector<10x10x32xbf16> to vector<8x8x32xbf16>
    %183 = vector.extract_strided_slice %179 {offsets = [1, 0, 0], sizes = [8, 8, 32], strides = [1, 1, 1]} : vector<10x10x32xbf16> to vector<8x8x32xbf16>
    %184 = vector.extract_strided_slice %179 {offsets = [1, 1, 0], sizes = [8, 8, 32], strides = [1, 1, 1]} : vector<10x10x32xbf16> to vector<8x8x32xbf16>
    %185 = vector.extract_strided_slice %179 {offsets = [1, 2, 0], sizes = [8, 8, 32], strides = [1, 1, 1]} : vector<10x10x32xbf16> to vector<8x8x32xbf16>
    %186 = vector.extract_strided_slice %179 {offsets = [2, 0, 0], sizes = [8, 8, 32], strides = [1, 1, 1]} : vector<10x10x32xbf16> to vector<8x8x32xbf16>
    %187 = vector.extract_strided_slice %179 {offsets = [2, 1, 0], sizes = [8, 8, 32], strides = [1, 1, 1]} : vector<10x10x32xbf16> to vector<8x8x32xbf16>
    %188 = vector.extract_strided_slice %179 {offsets = [2, 2, 0], sizes = [8, 8, 32], strides = [1, 1, 1]} : vector<10x10x32xbf16> to vector<8x8x32xbf16>
    %189 = tpu.concatenate %180, %181, %182, %183, %184, %185, %186, %187, %188 in 2 : vector<8x8x32xbf16>, vector<8x8x32xbf16>, vector<8x8x32xbf16>, vector<8x8x32xbf16>, vector<8x8x32xbf16>, vector<8x8x32xbf16>, vector<8x8x32xbf16>, vector<8x8x32xbf16>, vector<8x8x32xbf16> -> vector<8x8x288xbf16>
    %190 = vector.shape_cast %189 : vector<8x8x288xbf16> to vector<64x288xbf16>
    %191 = arith.truncf %151 : vector<8x8x32xf32> to vector<8x8x32xbf16>
    %cst_49 = arith.constant 0.000000e+00 : bf16
    %192 = vector.broadcast %cst_49 : bf16 to vector<1x8x32xbf16>
    %193 = tpu.concatenate %192, %191, %192 in 0 : vector<1x8x32xbf16>, vector<8x8x32xbf16>, vector<1x8x32xbf16> -> vector<10x8x32xbf16>
    %cst_50 = arith.constant 0.000000e+00 : bf16
    %194 = vector.broadcast %cst_50 : bf16 to vector<10x1x32xbf16>
    %195 = tpu.concatenate %194, %193, %194 in 1 : vector<10x1x32xbf16>, vector<10x8x32xbf16>, vector<10x1x32xbf16> -> vector<10x10x32xbf16>
    %196 = vector.extract_strided_slice %195 {offsets = [0, 0, 0], sizes = [8, 8, 32], strides = [1, 1, 1]} : vector<10x10x32xbf16> to vector<8x8x32xbf16>
    %197 = vector.extract_strided_slice %195 {offsets = [0, 1, 0], sizes = [8, 8, 32], strides = [1, 1, 1]} : vector<10x10x32xbf16> to vector<8x8x32xbf16>
    %198 = vector.extract_strided_slice %195 {offsets = [0, 2, 0], sizes = [8, 8, 32], strides = [1, 1, 1]} : vector<10x10x32xbf16> to vector<8x8x32xbf16>
    %199 = vector.extract_strided_slice %195 {offsets = [1, 0, 0], sizes = [8, 8, 32], strides = [1, 1, 1]} : vector<10x10x32xbf16> to vector<8x8x32xbf16>
    %200 = vector.extract_strided_slice %195 {offsets = [1, 1, 0], sizes = [8, 8, 32], strides = [1, 1, 1]} : vector<10x10x32xbf16> to vector<8x8x32xbf16>
    %201 = vector.extract_strided_slice %195 {offsets = [1, 2, 0], sizes = [8, 8, 32], strides = [1, 1, 1]} : vector<10x10x32xbf16> to vector<8x8x32xbf16>
    %202 = vector.extract_strided_slice %195 {offsets = [2, 0, 0], sizes = [8, 8, 32], strides = [1, 1, 1]} : vector<10x10x32xbf16> to vector<8x8x32xbf16>
    %203 = vector.extract_strided_slice %195 {offsets = [2, 1, 0], sizes = [8, 8, 32], strides = [1, 1, 1]} : vector<10x10x32xbf16> to vector<8x8x32xbf16>
    %204 = vector.extract_strided_slice %195 {offsets = [2, 2, 0], sizes = [8, 8, 32], strides = [1, 1, 1]} : vector<10x10x32xbf16> to vector<8x8x32xbf16>
    %205 = tpu.concatenate %196, %197, %198, %199, %200, %201, %202, %203, %204 in 2 : vector<8x8x32xbf16>, vector<8x8x32xbf16>, vector<8x8x32xbf16>, vector<8x8x32xbf16>, vector<8x8x32xbf16>, vector<8x8x32xbf16>, vector<8x8x32xbf16>, vector<8x8x32xbf16>, vector<8x8x32xbf16> -> vector<8x8x288xbf16>
    %206 = vector.shape_cast %205 : vector<8x8x288xbf16> to vector<64x288xbf16>
    %207 = arith.truncf %158 : vector<8x8x32xf32> to vector<8x8x32xbf16>
    %cst_51 = arith.constant 0.000000e+00 : bf16
    %208 = vector.broadcast %cst_51 : bf16 to vector<1x8x32xbf16>
    %209 = tpu.concatenate %208, %207, %208 in 0 : vector<1x8x32xbf16>, vector<8x8x32xbf16>, vector<1x8x32xbf16> -> vector<10x8x32xbf16>
    %cst_52 = arith.constant 0.000000e+00 : bf16
    %210 = vector.broadcast %cst_52 : bf16 to vector<10x1x32xbf16>
    %211 = tpu.concatenate %210, %209, %210 in 1 : vector<10x1x32xbf16>, vector<10x8x32xbf16>, vector<10x1x32xbf16> -> vector<10x10x32xbf16>
    %212 = vector.extract_strided_slice %211 {offsets = [0, 0, 0], sizes = [8, 8, 32], strides = [1, 1, 1]} : vector<10x10x32xbf16> to vector<8x8x32xbf16>
    %213 = vector.extract_strided_slice %211 {offsets = [0, 1, 0], sizes = [8, 8, 32], strides = [1, 1, 1]} : vector<10x10x32xbf16> to vector<8x8x32xbf16>
    %214 = vector.extract_strided_slice %211 {offsets = [0, 2, 0], sizes = [8, 8, 32], strides = [1, 1, 1]} : vector<10x10x32xbf16> to vector<8x8x32xbf16>
    %215 = vector.extract_strided_slice %211 {offsets = [1, 0, 0], sizes = [8, 8, 32], strides = [1, 1, 1]} : vector<10x10x32xbf16> to vector<8x8x32xbf16>
    %216 = vector.extract_strided_slice %211 {offsets = [1, 1, 0], sizes = [8, 8, 32], strides = [1, 1, 1]} : vector<10x10x32xbf16> to vector<8x8x32xbf16>
    %217 = vector.extract_strided_slice %211 {offsets = [1, 2, 0], sizes = [8, 8, 32], strides = [1, 1, 1]} : vector<10x10x32xbf16> to vector<8x8x32xbf16>
    %218 = vector.extract_strided_slice %211 {offsets = [2, 0, 0], sizes = [8, 8, 32], strides = [1, 1, 1]} : vector<10x10x32xbf16> to vector<8x8x32xbf16>
    %219 = vector.extract_strided_slice %211 {offsets = [2, 1, 0], sizes = [8, 8, 32], strides = [1, 1, 1]} : vector<10x10x32xbf16> to vector<8x8x32xbf16>
    %220 = vector.extract_strided_slice %211 {offsets = [2, 2, 0], sizes = [8, 8, 32], strides = [1, 1, 1]} : vector<10x10x32xbf16> to vector<8x8x32xbf16>
    %221 = tpu.concatenate %212, %213, %214, %215, %216, %217, %218, %219, %220 in 2 : vector<8x8x32xbf16>, vector<8x8x32xbf16>, vector<8x8x32xbf16>, vector<8x8x32xbf16>, vector<8x8x32xbf16>, vector<8x8x32xbf16>, vector<8x8x32xbf16>, vector<8x8x32xbf16>, vector<8x8x32xbf16> -> vector<8x8x288xbf16>
    %222 = vector.shape_cast %221 : vector<8x8x288xbf16> to vector<64x288xbf16>
    %c0_53 = arith.constant 0 : index
    %c0_54 = arith.constant 0 : index
    %c0_55 = arith.constant 0 : index
    %c0_56 = arith.constant 0 : index
    %c0_57 = arith.constant 0 : index
    %223 = vector.load %arg3[%c0_53, %c0_54, %c0_55, %c0_56, %c0_57] : memref<1x1x4x4x32xbf16, #tpu.memory_space<vmem>>, vector<1x1x4x4x32xbf16>
    %224 = vector.shape_cast %223 : vector<1x1x4x4x32xbf16> to vector<4x4x32xbf16>
    %225 = vector.shape_cast %224 : vector<4x4x32xbf16> to vector<16x32xbf16>
    %c0_58 = arith.constant 0 : index
    %c0_59 = arith.constant 0 : index
    %226 = vector.load %arg5[%c0_58, %c0_59] : memref<32x128xbf16, #tpu.memory_space<vmem>>, vector<32x128xbf16>
    %cst_60 = arith.constant dense<0.000000e+00> : vector<16x128xf32>
    %227 = tpu.matmul %225, %226, %cst_60 {dimension_numbers = #tpu.dot_dimension_numbers<[1], [0], [0], [1], [0, 0, 1, 1], [], []>} : vector<16x32xbf16>, vector<32x128xbf16>, vector<16x128xf32> -> vector<16x128xf32>
    %c0_61 = arith.constant 0 : index
    %c0_62 = arith.constant 0 : index
    %228 = vector.load %arg7[%c0_61, %c0_62] : memref<1x16xf32, #tpu.memory_space<vmem>>, vector<1x16xf32>
    %229 = vector.shape_cast %228 : vector<1x16xf32> to vector<1x1x16xf32>
    %c0_63 = arith.constant 0 : index
    %c0_64 = arith.constant 0 : index
    %230 = vector.load %arg8[%c0_63, %c0_64] : memref<1x16xf32, #tpu.memory_space<vmem>>, vector<1x16xf32>
    %231 = vector.shape_cast %230 : vector<1x16xf32> to vector<1x1x16xf32>
    %c0_65 = arith.constant 0 : index
    %c0_66 = arith.constant 0 : index
    %c0_67 = arith.constant 0 : index
    %232 = vector.load %arg6[%c0_65, %c0_66, %c0_67] : memref<3x288x16xbf16, #tpu.memory_space<vmem>>, vector<1x288x16xbf16>
    %233 = vector.shape_cast %232 : vector<1x288x16xbf16> to vector<288x16xbf16>
    %c1 = arith.constant 1 : index
    %c0_68 = arith.constant 0 : index
    %c0_69 = arith.constant 0 : index
    %234 = vector.load %arg6[%c1, %c0_68, %c0_69] : memref<3x288x16xbf16, #tpu.memory_space<vmem>>, vector<1x288x16xbf16>
    %235 = vector.shape_cast %234 : vector<1x288x16xbf16> to vector<288x16xbf16>
    %c2 = arith.constant 2 : index
    %c0_70 = arith.constant 0 : index
    %c0_71 = arith.constant 0 : index
    %236 = vector.load %arg6[%c2, %c0_70, %c0_71] : memref<3x288x16xbf16, #tpu.memory_space<vmem>>, vector<1x288x16xbf16>
    %237 = vector.shape_cast %236 : vector<1x288x16xbf16> to vector<288x16xbf16>
    %cst_72 = arith.constant dense<0.000000e+00> : vector<64x16xf32>
    %238 = tpu.matmul %174, %233, %cst_72 {dimension_numbers = #tpu.dot_dimension_numbers<[1], [0], [0], [1], [0, 0, 1, 1], [], []>} : vector<64x288xbf16>, vector<288x16xbf16>, vector<64x16xf32> -> vector<64x16xf32>
    %cst_73 = arith.constant dense<0.000000e+00> : vector<64x16xf32>
    %239 = tpu.matmul %190, %235, %cst_73 {dimension_numbers = #tpu.dot_dimension_numbers<[1], [0], [0], [1], [0, 0, 1, 1], [], []>} : vector<64x288xbf16>, vector<288x16xbf16>, vector<64x16xf32> -> vector<64x16xf32>
    %240 = arith.addf %238, %239 : vector<64x16xf32>
    %cst_74 = arith.constant dense<0.000000e+00> : vector<64x16xf32>
    %241 = tpu.matmul %206, %237, %cst_74 {dimension_numbers = #tpu.dot_dimension_numbers<[1], [0], [0], [1], [0, 0, 1, 1], [], []>} : vector<64x288xbf16>, vector<288x16xbf16>, vector<64x16xf32> -> vector<64x16xf32>
    %242 = arith.addf %240, %241 : vector<64x16xf32>
    %243 = vector.shape_cast %242 : vector<64x16xf32> to vector<8x8x16xf32>
    %244 = vector.extract_strided_slice %227 {offsets = [0, 0], sizes = [16, 16], strides = [1, 1]} : vector<16x128xf32> to vector<16x16xf32>
    %245 = vector.shape_cast %244 : vector<16x16xf32> to vector<4x4x1x16xf32>
    %246 = vector.extract_strided_slice %227 {offsets = [0, 16], sizes = [16, 16], strides = [1, 1]} : vector<16x128xf32> to vector<16x16xf32>
    %247 = vector.shape_cast %246 : vector<16x16xf32> to vector<4x4x1x16xf32>
    %248 = tpu.concatenate %245, %247 in 2 : vector<4x4x1x16xf32>, vector<4x4x1x16xf32> -> vector<4x4x2x16xf32>
    %249 = vector.shape_cast %248 : vector<4x4x2x16xf32> to vector<4x1x8x16xf32>
    %250 = vector.extract_strided_slice %227 {offsets = [0, 32], sizes = [16, 16], strides = [1, 1]} : vector<16x128xf32> to vector<16x16xf32>
    %251 = vector.shape_cast %250 : vector<16x16xf32> to vector<4x4x1x16xf32>
    %252 = vector.extract_strided_slice %227 {offsets = [0, 48], sizes = [16, 16], strides = [1, 1]} : vector<16x128xf32> to vector<16x16xf32>
    %253 = vector.shape_cast %252 : vector<16x16xf32> to vector<4x4x1x16xf32>
    %254 = tpu.concatenate %251, %253 in 2 : vector<4x4x1x16xf32>, vector<4x4x1x16xf32> -> vector<4x4x2x16xf32>
    %255 = vector.shape_cast %254 : vector<4x4x2x16xf32> to vector<4x1x8x16xf32>
    %256 = tpu.concatenate %249, %255 in 1 : vector<4x1x8x16xf32>, vector<4x1x8x16xf32> -> vector<4x2x8x16xf32>
    %257 = vector.shape_cast %256 : vector<4x2x8x16xf32> to vector<8x8x16xf32>
    %258 = arith.addf %243, %257 : vector<8x8x16xf32>
    %cst_75 = arith.constant dense<0.000000e+00> : vector<8x8xf32>
    %259 = vector.multi_reduction <add>, %258, %cst_75 [2] : vector<8x8x16xf32> to vector<8x8xf32>
    %260 = vector.shape_cast %259 : vector<8x8xf32> to vector<8x8x1xf32>
    %cst_76 = arith.constant 1.600000e+01 : f32
    %261 = vector.broadcast %cst_76 : f32 to vector<8x8x1xf32>
    %262 = arith.divf %260, %261 : vector<8x8x1xf32>
    %263 = vector.broadcast %262 : vector<8x8x1xf32> to vector<8x8x16xf32>
    %264 = arith.subf %258, %263 : vector<8x8x16xf32>
    %265 = arith.mulf %264, %264 : vector<8x8x16xf32>
    %cst_77 = arith.constant dense<0.000000e+00> : vector<8x8xf32>
    %266 = vector.multi_reduction <add>, %265, %cst_77 [2] : vector<8x8x16xf32> to vector<8x8xf32>
    %267 = vector.shape_cast %266 : vector<8x8xf32> to vector<8x8x1xf32>
    %cst_78 = arith.constant 1.600000e+01 : f32
    %268 = vector.broadcast %cst_78 : f32 to vector<8x8x1xf32>
    %269 = arith.divf %267, %268 : vector<8x8x1xf32>
    %270 = vector.broadcast %262 : vector<8x8x1xf32> to vector<8x8x16xf32>
    %271 = arith.subf %258, %270 : vector<8x8x16xf32>
    %cst_79 = arith.constant 9.99999974E-6 : f32
    %272 = vector.broadcast %cst_79 : f32 to vector<8x8x1xf32>
    %273 = arith.addf %269, %272 : vector<8x8x1xf32>
    %274 = math.rsqrt %273 : vector<8x8x1xf32>
    %275 = vector.broadcast %274 : vector<8x8x1xf32> to vector<8x8x16xf32>
    %276 = arith.mulf %271, %275 : vector<8x8x16xf32>
    %277 = vector.broadcast %229 : vector<1x1x16xf32> to vector<8x8x16xf32>
    %278 = arith.mulf %276, %277 : vector<8x8x16xf32>
    %279 = vector.broadcast %231 : vector<1x1x16xf32> to vector<8x8x16xf32>
    %280 = arith.addf %278, %279 : vector<8x8x16xf32>
    %281 = vector.shape_cast %280 : vector<8x8x16xf32> to vector<8x128xf32>
    %c0_80 = arith.constant 0 : index
    %c0_81 = arith.constant 0 : index
    %c0_82 = arith.constant 0 : index
    %c0_83 = arith.constant 0 : index
    %282 = vector.load %arg9[%c0_80, %c0_81, %c0_82, %c0_83] : memref<1x2x8x128xf32, #tpu.memory_space<vmem>>, vector<1x1x8x128xf32>
    %283 = vector.shape_cast %282 : vector<1x1x8x128xf32> to vector<8x128xf32>
    %284 = vector.shape_cast %281 : vector<8x128xf32> to vector<1x1x8x128xf32>
    tpu.vector_store %arg9[%c0_80, %c0_81, %c0_82, %c0_83], %284 {strides = array<i32>} : memref<1x2x8x128xf32, #tpu.memory_space<vmem>>, vector<1x1x8x128xf32>,
    %cst_84 = arith.constant dense<0.000000e+00> : vector<64x16xf32>
    %285 = tpu.matmul %190, %233, %cst_84 {dimension_numbers = #tpu.dot_dimension_numbers<[1], [0], [0], [1], [0, 0, 1, 1], [], []>} : vector<64x288xbf16>, vector<288x16xbf16>, vector<64x16xf32> -> vector<64x16xf32>
    %cst_85 = arith.constant dense<0.000000e+00> : vector<64x16xf32>
    %286 = tpu.matmul %206, %235, %cst_85 {dimension_numbers = #tpu.dot_dimension_numbers<[1], [0], [0], [1], [0, 0, 1, 1], [], []>} : vector<64x288xbf16>, vector<288x16xbf16>, vector<64x16xf32> -> vector<64x16xf32>
    %287 = arith.addf %285, %286 : vector<64x16xf32>
    %cst_86 = arith.constant dense<0.000000e+00> : vector<64x16xf32>
    %288 = tpu.matmul %222, %237, %cst_86 {dimension_numbers = #tpu.dot_dimension_numbers<[1], [0], [0], [1], [0, 0, 1, 1], [], []>} : vector<64x288xbf16>, vector<288x16xbf16>, vector<64x16xf32> -> vector<64x16xf32>
    %289 = arith.addf %287, %288 : vector<64x16xf32>
    %290 = vector.shape_cast %289 : vector<64x16xf32> to vector<8x8x16xf32>
    %291 = vector.extract_strided_slice %227 {offsets = [0, 64], sizes = [16, 16], strides = [1, 1]} : vector<16x128xf32> to vector<16x16xf32>
    %292 = vector.shape_cast %291 : vector<16x16xf32> to vector<4x4x1x16xf32>
    %293 = vector.extract_strided_slice %227 {offsets = [0, 80], sizes = [16, 16], strides = [1, 1]} : vector<16x128xf32> to vector<16x16xf32>
    %294 = vector.shape_cast %293 : vector<16x16xf32> to vector<4x4x1x16xf32>
    %295 = tpu.concatenate %292, %294 in 2 : vector<4x4x1x16xf32>, vector<4x4x1x16xf32> -> vector<4x4x2x16xf32>
    %296 = vector.shape_cast %295 : vector<4x4x2x16xf32> to vector<4x1x8x16xf32>
    %297 = vector.extract_strided_slice %227 {offsets = [0, 96], sizes = [16, 16], strides = [1, 1]} : vector<16x128xf32> to vector<16x16xf32>
    %298 = vector.shape_cast %297 : vector<16x16xf32> to vector<4x4x1x16xf32>
    %299 = vector.extract_strided_slice %227 {offsets = [0, 112], sizes = [16, 16], strides = [1, 1]} : vector<16x128xf32> to vector<16x16xf32>
    %300 = vector.shape_cast %299 : vector<16x16xf32> to vector<4x4x1x16xf32>
    %301 = tpu.concatenate %298, %300 in 2 : vector<4x4x1x16xf32>, vector<4x4x1x16xf32> -> vector<4x4x2x16xf32>
    %302 = vector.shape_cast %301 : vector<4x4x2x16xf32> to vector<4x1x8x16xf32>
    %303 = tpu.concatenate %296, %302 in 1 : vector<4x1x8x16xf32>, vector<4x1x8x16xf32> -> vector<4x2x8x16xf32>
    %304 = vector.shape_cast %303 : vector<4x2x8x16xf32> to vector<8x8x16xf32>
    %305 = arith.addf %290, %304 : vector<8x8x16xf32>
    %cst_87 = arith.constant dense<0.000000e+00> : vector<8x8xf32>
    %306 = vector.multi_reduction <add>, %305, %cst_87 [2] : vector<8x8x16xf32> to vector<8x8xf32>
    %307 = vector.shape_cast %306 : vector<8x8xf32> to vector<8x8x1xf32>
    %cst_88 = arith.constant 1.600000e+01 : f32
    %308 = vector.broadcast %cst_88 : f32 to vector<8x8x1xf32>
    %309 = arith.divf %307, %308 : vector<8x8x1xf32>
    %310 = vector.broadcast %309 : vector<8x8x1xf32> to vector<8x8x16xf32>
    %311 = arith.subf %305, %310 : vector<8x8x16xf32>
    %312 = arith.mulf %311, %311 : vector<8x8x16xf32>
    %cst_89 = arith.constant dense<0.000000e+00> : vector<8x8xf32>
    %313 = vector.multi_reduction <add>, %312, %cst_89 [2] : vector<8x8x16xf32> to vector<8x8xf32>
    %314 = vector.shape_cast %313 : vector<8x8xf32> to vector<8x8x1xf32>
    %cst_90 = arith.constant 1.600000e+01 : f32
    %315 = vector.broadcast %cst_90 : f32 to vector<8x8x1xf32>
    %316 = arith.divf %314, %315 : vector<8x8x1xf32>
    %317 = vector.broadcast %309 : vector<8x8x1xf32> to vector<8x8x16xf32>
    %318 = arith.subf %305, %317 : vector<8x8x16xf32>
    %cst_91 = arith.constant 9.99999974E-6 : f32
    %319 = vector.broadcast %cst_91 : f32 to vector<8x8x1xf32>
    %320 = arith.addf %316, %319 : vector<8x8x1xf32>
    %321 = math.rsqrt %320 : vector<8x8x1xf32>
    %322 = vector.broadcast %321 : vector<8x8x1xf32> to vector<8x8x16xf32>
    %323 = arith.mulf %318, %322 : vector<8x8x16xf32>
    %324 = vector.broadcast %229 : vector<1x1x16xf32> to vector<8x8x16xf32>
    %325 = arith.mulf %323, %324 : vector<8x8x16xf32>
    %326 = vector.broadcast %231 : vector<1x1x16xf32> to vector<8x8x16xf32>
    %327 = arith.addf %325, %326 : vector<8x8x16xf32>
    %328 = vector.shape_cast %327 : vector<8x8x16xf32> to vector<8x128xf32>
    %c0_92 = arith.constant 0 : index
    %c1_93 = arith.constant 1 : index
    %c0_94 = arith.constant 0 : index
    %c0_95 = arith.constant 0 : index
    %329 = vector.load %arg9[%c0_92, %c1_93, %c0_94, %c0_95] : memref<1x2x8x128xf32, #tpu.memory_space<vmem>>, vector<1x1x8x128xf32>
    %330 = vector.shape_cast %329 : vector<1x1x8x128xf32> to vector<8x128xf32>
    %331 = vector.shape_cast %328 : vector<8x128xf32> to vector<1x1x8x128xf32>
    tpu.vector_store %arg9[%c0_92, %c1_93, %c0_94, %c0_95], %331 {strides = array<i32>} : memref<1x2x8x128xf32, #tpu.memory_space<vmem>>, vector<1x1x8x128xf32>,
    return
  }
  func.func @transform_0(%arg0: i32, %arg1: i32) -> (i32, i32, i32, i32, i32) {
    %c1_i32 = arith.constant 1 : i32
    %0 = arith.subi %arg1, %c1_i32 : i32
    %c0_i32 = arith.constant 0 : i32
    %1 = arith.maxsi %0, %c0_i32 : i32
    %c0_i32_0 = arith.constant 0 : i32
    %c0_i32_1 = arith.constant 0 : i32
    %c0_i32_2 = arith.constant 0 : i32
    %c0_i32_3 = arith.constant 0 : i32
    return %arg0, %1, %c0_i32_0, %c0_i32_1, %c0_i32_2 : i32, i32, i32, i32, i32
  }
  func.func @transform_1(%arg0: i32, %arg1: i32) -> (i32, i32, i32, i32, i32) {
    %c0_i32 = arith.constant 0 : i32
    %c0_i32_0 = arith.constant 0 : i32
    %c0_i32_1 = arith.constant 0 : i32
    %c0_i32_2 = arith.constant 0 : i32
    return %arg0, %arg1, %c0_i32, %c0_i32_0, %c0_i32_1 : i32, i32, i32, i32, i32
  }
  func.func @transform_2(%arg0: i32, %arg1: i32) -> (i32, i32, i32, i32, i32) {
    %c1_i32 = arith.constant 1 : i32
    %0 = arith.addi %arg1, %c1_i32 : i32
    %c3_i32 = arith.constant 3 : i32
    %1 = arith.minsi %0, %c3_i32 : i32
    %c0_i32 = arith.constant 0 : i32
    %c0_i32_0 = arith.constant 0 : i32
    %c0_i32_1 = arith.constant 0 : i32
    %c0_i32_2 = arith.constant 0 : i32
    return %arg0, %1, %c0_i32, %c0_i32_0, %c0_i32_1 : i32, i32, i32, i32, i32
  }
  func.func @transform_3(%arg0: i32, %arg1: i32) -> (i32, i32) {
    %c0_i32 = arith.constant 0 : i32
    %c0_i32_0 = arith.constant 0 : i32
    %c0_i32_1 = arith.constant 0 : i32
    return %c0_i32, %c0_i32_0 : i32, i32
  }
  func.func @transform_4(%arg0: i32, %arg1: i32) -> (i32, i32, i32) {
    %c0_i32 = arith.constant 0 : i32
    %c0_i32_0 = arith.constant 0 : i32
    %c0_i32_1 = arith.constant 0 : i32
    %c0_i32_2 = arith.constant 0 : i32
    return %c0_i32, %c0_i32_0, %c0_i32_1 : i32, i32, i32
  }
  func.func @transform_5(%arg0: i32, %arg1: i32) -> (i32, i32) {
    %c0_i32 = arith.constant 0 : i32
    %c0_i32_0 = arith.constant 0 : i32
    %c0_i32_1 = arith.constant 0 : i32
    return %c0_i32, %c0_i32_0 : i32, i32
  }
  func.func @transform_6(%arg0: i32, %arg1: i32) -> (i32, i32) {
    %c0_i32 = arith.constant 0 : i32
    %c0_i32_0 = arith.constant 0 : i32
    %c0_i32_1 = arith.constant 0 : i32
    return %c0_i32, %c0_i32_0 : i32, i32
  }
  func.func @transform_7(%arg0: i32, %arg1: i32) -> (i32, i32, i32, i32) {
    %c0_i32 = arith.constant 0 : i32
    %c0_i32_0 = arith.constant 0 : i32
    %c0_i32_1 = arith.constant 0 : i32
    return %arg0, %arg1, %c0_i32, %c0_i32_0 : i32, i32, i32, i32
  }
}

</mosaic_0001>

<llo_original>
// kernel: patch_expanding_concat.1
$region0: #{patch_expanding_concat.1}
  #allocation0 [shape = 'u32[]', space=smem, size = 0x4, offset = 0x4, fixed_abs, tag = 'smem constant byte address 0x4 - core index']
  #allocation1 [shape = 'u32[144,128]{1,0:T(1,128)}', space=vmem, size = 0x12000, scoped, tag = 'internal scratch']
  %s0 = inlined_call_operand.vmem [shape: bf16[2,4,4,4,32], index: 0, kind: input, shape index: {}, may-alias: {0,1,2}]
  %s1 = inlined_call_operand.vmem [shape: bf16[2,4,4,4,32], index: 1, kind: input, shape index: {}, may-alias: {0,1,2}]
  %s2 = inlined_call_operand.vmem [shape: bf16[2,4,4,4,32], index: 2, kind: input, shape index: {}, may-alias: {0,1,2}]
  %s3 = inlined_call_operand.vmem [shape: bf16[32,128], index: 3, kind: input, shape index: {}]
  %s4 = inlined_call_operand.vmem [shape: bf16[3,288,16], index: 4, kind: input, shape index: {}]
  %s5 = inlined_call_operand.vmem [shape: f32[1,16], index: 5, kind: input, shape index: {}]
  %s6 = inlined_call_operand.vmem [shape: f32[1,16], index: 6, kind: input, shape index: {}]
  %s7 = inlined_call_operand.vmem [shape: f32[2,8,8,128], index: 7, kind: output, shape index: {}]
  %s8 = sld [smem:[#allocation0]]
  $region61: #{patch_expanding_concat.1} parent=0
    _
  %s10 = ssub.s32 1, %s8
  %s11 = scalar_select 0, %s10, %s8
  loop: start=0, step=1, limit=10
  $region2: #{patch_expanding_concat.1} parent=0 // loop_pre_header
    _
  $region3: #{patch_expanding_concat.1} parent=0 // loop_header
    %s13 = sphi 0, %s17
    %p14 = scmp.ge.s32.totalorder %s13, 10
    %s20 = sphi 0, %s32
    %s21 = sphi 0, %s28
    %s22 = sphi 0, %s20
    %s23 = sphi 0, %s21
    %s24 = sphi 0, %s22
    %s25 = sphi 0, %s23
    %s43 = sphi 0, %s45
    %s46 = sphi 0, %s43
    %s47 = sphi 0, %s46
    %s63 = sphi 0, %s47
    %s71 = sphi 0, %s73
    %s74 = sphi 0, %s71
    %s75 = sphi 0, %s74
    %s91 = sphi 0, %s75
    %s105 = sphi 0, %s107
    %s108 = sphi 0, %s105
    %s109 = sphi 0, %s108
    %s125 = sphi 0, %s109
    %s129 = sphi 0, %s129
    %s131 = sphi 0, %s129
    %s132 = sphi 0, %s131
    %s146 = sphi 0, %s132
    %s150 = sphi 0, %s150
    %s152 = sphi 0, %s150
    %s153 = sphi 0, %s152
    %s167 = sphi 0, %s153
    %s171 = sphi 0, %s171
    %s173 = sphi 0, %s171
    %s174 = sphi 0, %s173
    %s188 = sphi 0, %s174
    %s192 = sphi 0, %s192
    %s194 = sphi 0, %s192
    %s195 = sphi 0, %s194
    %s209 = sphi 0, %s195
    %s217 = sphi 0, %s219
    %s220 = sphi 0, %s217
    %s221 = sphi 0, %s220
    %s237 = sphi 0, %s221
  $region4: #{patch_expanding_concat.1} parent=0 // loop_header_branch
    %16 = sbr.rel (%p14) target = $region8
  $region5: #{patch_expanding_concat.1} parent=0 // loop_body
    %s18 = ssub.s32 %s13, 1
    %s19 = ssub.s32 %s13, 2
    %s26 = sadd.s32 1, %s21
    %p27 = scmp.ge.s32.totalorder %s26, 4
    %s28 = scalar_select %p27, 0, %s26
    %s29 = sadd.s32 1, %s20
    %s30 = scalar_select %p27, %s29, %s20
    %p31 = scmp.ge.s32.totalorder %s30, 2
    %s32 = scalar_select %p31, 0, %s30
    %s33 = ssub.s32 %s21, 1
    %p34 = scmp.gt.s32.totalorder %s33, 0
    %s35 = scalar_select %p34, %s33, 0
    %s36 = ssub.s32 %s28, 1
    %p37 = scmp.gt.s32.totalorder %s36, 0
    %s38 = scalar_select %p37, %s36, 0
    %s39 = ssub.s32 %s20, %s32
    %s40 = ssub.s32 %s35, %s38
    %s41 = sor.u32 %s39, %s40
    %p42 = scmp.eq.s32.totalorder %s41, 0
    %s44 = sadd.s32 %s43, 1
    %s45 = scalar_select %p42, %s43, %s44
    %p48 = pneg %p42
    %p49 = scmp.eq.s32.totalorder %s13, 7
    %p50 = por %p48, %p49
    %p51 = scmp.ne.s32.totalorder %s43, %s46
    %p52 = scmp.eq.s32.totalorder %s13, 0
    %p53 = por %p51, %p52
    %p54 = scmp.ne.s32.totalorder %s43, %s46
    %p55 = scmp.eq.s32.totalorder %s18, 7
    %p56 = por %p54, %p55
    %p57 = scmp.ne.s32.totalorder %s46, %s47
    %p58 = scmp.eq.s32.totalorder %s18, 0
    %p59 = por %p57, %p58
    %p60 = scmp.ne.s32.totalorder %s46, %s47
    %p61 = scmp.eq.s32.totalorder %s19, 7
    %p62 = por %p60, %p61
    %p64 = scmp.ne.s32.totalorder %s47, %s63
    %p65 = scmp.eq.s32.totalorder %s19, 0
    %p66 = por %p64, %p65
    %s67 = ssub.s32 %s20, %s32
    %s68 = ssub.s32 %s21, %s28
    %s69 = sor.u32 %s67, %s68
    %p70 = scmp.eq.s32.totalorder %s69, 0
    %s72 = sadd.s32 %s71, 1
    %s73 = scalar_select %p70, %s71, %s72
    %p76 = pneg %p70
    %p77 = scmp.eq.s32.totalorder %s13, 7
    %p78 = por %p76, %p77
    %p79 = scmp.ne.s32.totalorder %s71, %s74
    %p80 = scmp.eq.s32.totalorder %s13, 0
    %p81 = por %p79, %p80
    %p82 = scmp.ne.s32.totalorder %s71, %s74
    %p83 = scmp.eq.s32.totalorder %s18, 7
    %p84 = por %p82, %p83
    %p85 = scmp.ne.s32.totalorder %s74, %s75
    %p86 = scmp.eq.s32.totalorder %s18, 0
    %p87 = por %p85, %p86
    %p88 = scmp.ne.s32.totalorder %s74, %s75
    %p89 = scmp.eq.s32.totalorder %s19, 7
    %p90 = por %p88, %p89
    %p92 = scmp.ne.s32.totalorder %s75, %s91
    %p93 = scmp.eq.s32.totalorder %s19, 0
    %p94 = por %p92, %p93
    %s95 = sadd.s32 %s21, 1
    %p96 = scmp.lt.s32.totalorder %s95, 3
    %s97 = scalar_select %p96, %s95, 3
    %s98 = sadd.s32 %s28, 1
    %p99 = scmp.lt.s32.totalorder %s98, 3
    %s100 = scalar_select %p99, %s98, 3
    %s101 = ssub.s32 %s20, %s32
    %s102 = ssub.s32 %s97, %s100
    %s103 = sor.u32 %s101, %s102
    %p104 = scmp.eq.s32.totalorder %s103, 0
    %s106 = sadd.s32 %s105, 1
    %s107 = scalar_select %p104, %s105, %s106
    %p110 = pneg %p104
    %p111 = scmp.eq.s32.totalorder %s13, 7
    %p112 = por %p110, %p111
    %p113 = scmp.ne.s32.totalorder %s105, %s108
    %p114 = scmp.eq.s32.totalorder %s13, 0
    %p115 = por %p113, %p114
    %p116 = scmp.ne.s32.totalorder %s105, %s108
    %p117 = scmp.eq.s32.totalorder %s18, 7
    %p118 = por %p116, %p117
    %p119 = scmp.ne.s32.totalorder %s108, %s109
    %p120 = scmp.eq.s32.totalorder %s18, 0
    %p121 = por %p119, %p120
    %p122 = scmp.ne.s32.totalorder %s108, %s109
    %p123 = scmp.eq.s32.totalorder %s19, 7
    %p124 = por %p122, %p123
    %p126 = scmp.ne.s32.totalorder %s109, %s125
    %p127 = scmp.eq.s32.totalorder %s19, 0
    %p128 = por %p126, %p127
    %s130 = sadd.s32 %s129, 1
    %p133 = scmp.eq.s32.totalorder %s13, 7
    %p134 = scmp.ne.s32.totalorder %s129, %s131
    %p135 = scmp.eq.s32.totalorder %s13, 0
    %p136 = por %p134, %p135
    %p137 = scmp.ne.s32.totalorder %s129, %s131
    %p138 = scmp.eq.s32.totalorder %s18, 7
    %p139 = por %p137, %p138
    %p140 = scmp.ne.s32.totalorder %s131, %s132
    %p141 = scmp.eq.s32.totalorder %s18, 0
    %p142 = por %p140, %p141
    %p143 = scmp.ne.s32.totalorder %s131, %s132
    %p144 = scmp.eq.s32.totalorder %s19, 7
    %p145 = por %p143, %p144
    %p147 = scmp.ne.s32.totalorder %s132, %s146
    %p148 = scmp.eq.s32.totalorder %s19, 0
    %p149 = por %p147, %p148
    %s151 = sadd.s32 %s150, 1
    %p154 = scmp.eq.s32.totalorder %s13, 7
    %p155 = scmp.ne.s32.totalorder %s150, %s152
    %p156 = scmp.eq.s32.totalorder %s13, 0
    %p157 = por %p155, %p156
    %p158 = scmp.ne.s32.totalorder %s150, %s152
    %p159 = scmp.eq.s32.totalorder %s18, 7
    %p160 = por %p158, %p159
    %p161 = scmp.ne.s32.totalorder %s152, %s153
    %p162 = scmp.eq.s32.totalorder %s18, 0
    %p163 = por %p161, %p162
    %p164 = scmp.ne.s32.totalorder %s152, %s153
    %p165 = scmp.eq.s32.totalorder %s19, 7
    %p166 = por %p164, %p165
    %p168 = scmp.ne.s32.totalorder %s153, %s167
    %p169 = scmp.eq.s32.totalorder %s19, 0
    %p170 = por %p168, %p169
    %s172 = sadd.s32 %s171, 1
    %p175 = scmp.eq.s32.totalorder %s13, 7
    %p176 = scmp.ne.s32.totalorder %s171, %s173
    %p177 = scmp.eq.s32.totalorder %s13, 0
    %p178 = por %p176, %p177
    %p179 = scmp.ne.s32.totalorder %s171, %s173
    %p180 = scmp.eq.s32.totalorder %s18, 7
    %p181 = por %p179, %p180
    %p182 = scmp.ne.s32.totalorder %s173, %s174
    %p183 = scmp.eq.s32.totalorder %s18, 0
    %p184 = por %p182, %p183
    %p185 = scmp.ne.s32.totalorder %s173, %s174
    %p186 = scmp.eq.s32.totalorder %s19, 7
    %p187 = por %p185, %p186
    %p189 = scmp.ne.s32.totalorder %s174, %s188
    %p190 = scmp.eq.s32.totalorder %s19, 0
    %p191 = por %p189, %p190
    %s193 = sadd.s32 %s192, 1
    %p196 = scmp.eq.s32.totalorder %s13, 7
    %p197 = scmp.ne.s32.totalorder %s192, %s194
    %p198 = scmp.eq.s32.totalorder %s13, 0
    %p199 = por %p197, %p198
    %p200 = scmp.ne.s32.totalorder %s192, %s194
    %p201 = scmp.eq.s32.totalorder %s18, 7
    %p202 = por %p200, %p201
    %p203 = scmp.ne.s32.totalorder %s194, %s195
    %p204 = scmp.eq.s32.totalorder %s18, 0
    %p205 = por %p203, %p204
    %p206 = scmp.ne.s32.totalorder %s194, %s195
    %p207 = scmp.eq.s32.totalorder %s19, 7
    %p208 = por %p206, %p207
    %p210 = scmp.ne.s32.totalorder %s195, %s209
    %p211 = scmp.eq.s32.totalorder %s19, 0
    %p212 = por %p210, %p211
    %s213 = ssub.s32 %s20, %s32
    %s214 = ssub.s32 %s21, %s28
    %s215 = sor.u32 %s213, %s214
    %p216 = scmp.eq.s32.totalorder %s215, 0
    %s218 = sadd.s32 %s217, 1
    %s219 = scalar_select %p216, %s217, %s218
    %p222 = pneg %p216
    %p223 = scmp.eq.s32.totalorder %s13, 7
    %p224 = por %p222, %p223
    %p225 = scmp.ne.s32.totalorder %s217, %s220
    %p226 = scmp.eq.s32.totalorder %s13, 0
    %p227 = por %p225, %p226
    %p228 = scmp.ne.s32.totalorder %s217, %s220
    %p229 = scmp.eq.s32.totalorder %s18, 7
    %p230 = por %p228, %p229
    %p231 = scmp.ne.s32.totalorder %s220, %s221
    %p232 = scmp.eq.s32.totalorder %s18, 0
    %p233 = por %p231, %p232
    %p234 = scmp.ne.s32.totalorder %s220, %s221
    %p235 = scmp.eq.s32.totalorder %s19, 7
    %p236 = por %p234, %p235
    %p238 = scmp.ne.s32.totalorder %s221, %s237
    %p239 = scmp.eq.s32.totalorder %s19, 0
    %p240 = por %p238, %p239
    %p241 = scmp.le.s32.totalorder 1, %s13
    %p242 = scmp.lt.s32.totalorder %s13, 9
    %p243 = pnand %p241, %p242
    %p244 = pneg %p243
    // Predicated region
    $region9: #{patch_expanding_concat.1} parent=5 // pred_check
      _
    $region10: #{patch_expanding_concat.1} parent=5 // pred_check_branch
      %246 = sbr.rel (%p243) target = $region12
    $region11: #{patch_expanding_concat.1} parent=5 // pred_region
      %s247 = ssub.s32 %s13, 1
      // Predicated region
      $region13: #{patch_expanding_concat.1} parent=11 // pred_check
        %p248 = pneg %p142
      $region14: #{patch_expanding_concat.1} parent=11 // pred_check_branch
        %250 = sbr.rel (%p248) target = $region16
      $region15: #{patch_expanding_concat.1} parent=11 // pred_region
        _
      $region16: #{patch_expanding_concat.1} parent=11 // pred_fallthru
        _
      // Predicated region
      $region17: #{patch_expanding_concat.1} parent=11 // pred_check
        %p251 = pneg %p163
      $region18: #{patch_expanding_concat.1} parent=11 // pred_check_branch
        %253 = sbr.rel (%p251) target = $region20
      $region19: #{patch_expanding_concat.1} parent=11 // pred_region
        _
      $region20: #{patch_expanding_concat.1} parent=11 // pred_fallthru
        _
      // Predicated region
      $region21: #{patch_expanding_concat.1} parent=11 // pred_check
        %p254 = pneg %p184
      $region22: #{patch_expanding_concat.1} parent=11 // pred_check_branch
        %256 = sbr.rel (%p254) target = $region24
      $region23: #{patch_expanding_concat.1} parent=11 // pred_region
        _
      $region24: #{patch_expanding_concat.1} parent=11 // pred_fallthru
        _
      // Predicated region
      $region25: #{patch_expanding_concat.1} parent=11 // pred_check
        %p257 = pneg %p205
      $region26: #{patch_expanding_concat.1} parent=11 // pred_check_branch
        %259 = sbr.rel (%p257) target = $region28
      $region27: #{patch_expanding_concat.1} parent=11 // pred_region
        _
      $region28: #{patch_expanding_concat.1} parent=11 // pred_fallthru
        _
    $region12: #{patch_expanding_concat.1} parent=5 // pred_fallthru
      _
    %p260 = scmp.lt.s32.totalorder %s13, 8
    // Predicated region
    $region29: #{patch_expanding_concat.1} parent=5 // pred_check
      %p261 = pneg %p260
    $region30: #{patch_expanding_concat.1} parent=5 // pred_check_branch
      %263 = sbr.rel (%p261) target = $region32
    $region31: #{patch_expanding_concat.1} parent=5 // pred_region
      // Predicated region
      $region33: #{patch_expanding_concat.1} parent=31 // pred_check
        %p264 = pneg %p53
      $region34: #{patch_expanding_concat.1} parent=31 // pred_check_branch
        %266 = sbr.rel (%p264) target = $region36
      $region35: #{patch_expanding_concat.1} parent=31 // pred_region
        %s267 = ssub.s32 %s21, 1
        %p268 = scmp.gt.s32.totalorder %s267, 0
        %s269 = scalar_select %p268, %s267, 0
        %p270 = scmp.lt.s32.totalorder %s20, 1
        %s271 = scalar_select %p270, %s20, 1
        %p272 = scmp.lt.s32.totalorder %s269, 3
        %s273 = scalar_select %p272, %s269, 3
        %s274 = smul.addr %s273, 4
        %s275 = smul.addr %s271, 16
        %s276 = sadd.s32 %s274, %s275
        %s277 = smul.addr %s276, 2
        %s278 = scalar_lea.vmem %s0, %s277
        %s279 = ssub.s32 %s21, 1
        %p280 = scmp.gt.s32.totalorder %s279, 0
        %s281 = scalar_select %p280, %s279, 0
      $region36: #{patch_expanding_concat.1} parent=31 // pred_fallthru
        _
      // Predicated region
      $region37: #{patch_expanding_concat.1} parent=31 // pred_check
        %p282 = pneg %p81
      $region38: #{patch_expanding_concat.1} parent=31 // pred_check_branch
        %284 = sbr.rel (%p282) target = $region40
      $region39: #{patch_expanding_concat.1} parent=31 // pred_region
        %p285 = scmp.lt.s32.totalorder %s20, 1
        %s286 = scalar_select %p285, %s20, 1
        %p287 = scmp.lt.s32.totalorder %s21, 3
        %s288 = scalar_select %p287, %s21, 3
        %s289 = smul.addr %s288, 4
        %s290 = smul.addr %s286, 16
        %s291 = sadd.s32 %s289, %s290
        %s292 = smul.addr %s291, 2
        %s293 = scalar_lea.vmem %s1, %s292
      $region40: #{patch_expanding_concat.1} parent=31 // pred_fallthru
        _
      // Predicated region
      $region41: #{patch_expanding_concat.1} parent=31 // pred_check
        %p294 = pneg %p115
      $region42: #{patch_expanding_concat.1} parent=31 // pred_check_branch
        %296 = sbr.rel (%p294) target = $region44
      $region43: #{patch_expanding_concat.1} parent=31 // pred_region
        %s297 = sadd.s32 %s21, 1
        %p298 = scmp.lt.s32.totalorder %s297, 3
        %s299 = scalar_select %p298, %s297, 3
        %p300 = scmp.lt.s32.totalorder %s20, 1
        %s301 = scalar_select %p300, %s20, 1
        %p302 = scmp.lt.s32.totalorder %s299, 3
        %s303 = scalar_select %p302, %s299, 3
        %s304 = smul.addr %s303, 4
        %s305 = smul.addr %s301, 16
        %s306 = sadd.s32 %s304, %s305
        %s307 = smul.addr %s306, 2
        %s308 = scalar_lea.vmem %s2, %s307
        %s309 = sadd.s32 %s21, 1
        %p310 = scmp.lt.s32.totalorder %s309, 3
        %s311 = scalar_select %p310, %s309, 3
      $region44: #{patch_expanding_concat.1} parent=31 // pred_fallthru
        _
    $region32: #{patch_expanding_concat.1} parent=5 // pred_fallthru
      _
    %p312 = scmp.le.s32.totalorder 1, %s13
    %p313 = scmp.lt.s32.totalorder %s13, 9
    %p314 = pnand %p312, %p313
    %p315 = pneg %p314
    // Predicated region
    $region45: #{patch_expanding_concat.1} parent=5 // pred_check
      _
    $region46: #{patch_expanding_concat.1} parent=5 // pred_check_branch
      %317 = sbr.rel (%p314) target = $region48
    $region47: #{patch_expanding_concat.1} parent=5 // pred_region
      %s318 = ssub.s32 %s13, 1
      %s319 = ssub.s32 %s23, 1
      %p320 = scmp.gt.s32.totalorder %s319, 0
      %s321 = scalar_select %p320, %s319, 0
      %p322 = scmp.lt.s32.totalorder %s22, 1
      %s323 = scalar_select %p322, %s22, 1
      %p324 = scmp.lt.s32.totalorder %s321, 3
      %s325 = scalar_select %p324, %s321, 3
      %s326 = smul.addr %s325, 4
      %s327 = smul.addr %s323, 16
      %s328 = sadd.s32 %s326, %s327
      %s329 = smul.addr %s328, 2
      %s330 = scalar_lea.vmem %s0, %s329
      %p331 = pneg %p59
      %p332 = pneg %p56
      %p333 = scmp.lt.s32.totalorder %s22, 1
      %s334 = scalar_select %p333, %s22, 1
      %p335 = scmp.lt.s32.totalorder %s23, 3
      %s336 = scalar_select %p335, %s23, 3
      %s337 = smul.addr %s336, 4
      %s338 = smul.addr %s334, 16
      %s339 = sadd.s32 %s337, %s338
      %s340 = smul.addr %s339, 2
      %s341 = scalar_lea.vmem %s1, %s340
      %p342 = pneg %p87
      %p343 = pneg %p84
      %s344 = sadd.s32 %s23, 1
      %p345 = scmp.lt.s32.totalorder %s344, 3
      %s346 = scalar_select %p345, %s344, 3
      %p347 = scmp.lt.s32.totalorder %s22, 1
      %s348 = scalar_select %p347, %s22, 1
      %p349 = scmp.lt.s32.totalorder %s346, 3
      %s350 = scalar_select %p349, %s346, 3
      %s351 = smul.addr %s350, 4
      %s352 = smul.addr %s348, 16
      %s353 = sadd.s32 %s351, %s352
      %s354 = smul.addr %s353, 2
      %s355 = scalar_lea.vmem %s2, %s354
      %p356 = pneg %p121
      %p357 = pneg %p118
      %p358 = pneg %p142
      %p359 = pneg %p139
      %p360 = pneg %p163
      %p361 = pneg %p160
      %p362 = pneg %p184
      %p363 = pneg %p181
      %p364 = pneg %p205
      %p365 = pneg %p202
      %p366 = pneg %p233
      %p367 = pneg %p230
      %s368 = smul.u32 2, %s23
      %p369 = scmp.lt.s32.totalorder %s22, 1
      %s370 = scalar_select %p369, %s22, 1
      %p371 = scmp.lt.s32.totalorder %s368, 7
      %s372 = scalar_select %p371, %s368, 7
      %s373 = smul.addr %s370, 8
      %s374 = sadd.s32 %s372, %s373
      %s375 = smul.addr %s374, 8
      %s376 = scalar_lea.vmem %s7, %s375
      %s377 = ssub.s32 %s23, 1
      %p378 = scmp.gt.s32.totalorder %s377, 0
      %s379 = scalar_select %p378, %s377, 0
      %p380 = scmp.lt.s32.totalorder %s22, 1
      %s381 = scalar_select %p380, %s22, 1
      %p382 = scmp.lt.s32.totalorder %s379, 3
      %s383 = scalar_select %p382, %s379, 3
      %s384 = smul.addr %s383, 4
      %s385 = smul.addr %s381, 16
      %s386 = sadd.s32 %s384, %s385
      %s387 = smul.addr %s386, 2
      %s388 = scalar_lea.vmem %s0, %s387
      %s389 = ssub.s32 %s23, 1
      %p390 = scmp.gt.s32.totalorder %s389, 0
      %s391 = scalar_select %p390, %s389, 0
      %p392 = scmp.lt.s32.totalorder %s22, 1
      %s393 = scalar_select %p392, %s22, 1
      %p394 = scmp.lt.s32.totalorder %s23, 3
      %s395 = scalar_select %p394, %s23, 3
      %s396 = smul.addr %s395, 4
      %s397 = smul.addr %s393, 16
      %s398 = sadd.s32 %s396, %s397
      %s399 = smul.addr %s398, 2
      %s400 = scalar_lea.vmem %s1, %s399
      %s401 = sadd.s32 %s23, 1
      %p402 = scmp.lt.s32.totalorder %s401, 3
      %s403 = scalar_select %p402, %s401, 3
      %p404 = scmp.lt.s32.totalorder %s22, 1
      %s405 = scalar_select %p404, %s22, 1
      %p406 = scmp.lt.s32.totalorder %s403, 3
      %s407 = scalar_select %p406, %s403, 3
      %s408 = smul.addr %s407, 4
      %s409 = smul.addr %s405, 16
      %s410 = sadd.s32 %s408, %s409
      %s411 = smul.addr %s410, 2
      %s412 = scalar_lea.vmem %s2, %s411
      %s413 = sadd.s32 %s23, 1
      %p414 = scmp.lt.s32.totalorder %s413, 3
      %s415 = scalar_select %p414, %s413, 3
      %s416 = smul.u32 2, %s23
      %p417 = scmp.lt.s32.totalorder %s22, 1
      %s418 = scalar_select %p417, %s22, 1
      %p419 = scmp.lt.s32.totalorder %s416, 7
      %s420 = scalar_select %p419, %s416, 7
      %s421 = smul.addr %s418, 8
      %s422 = sadd.s32 %s420, %s421
      %s423 = smul.addr %s422, 8
      %s424 = scalar_lea.vmem %s7, %s423
      %s425 = smul.u32 2, %s23
      %v427 = vld [vmem:[%s388] sm:$0x3]
      %v428 = vld [vmem:[%s388 + $0x2] sm:$0x3]
      %v429 = vld [vmem:[%s388 + $0x4] sm:$0x3]
      %v430 = vld [vmem:[%s388 + $0x6] sm:$0x3]
      %v431 = vunpack.c.l.bf16 %v427
      %v432 = vunpack.c.l.bf16 %v428
      %v433 = vunpack.c.l.bf16 %v429
      %v434 = vunpack.c.l.bf16 %v430
      %v439 = vrot.slane %v431, 7
      %v440 = vrot.slane %v432, 7
      %v441 = vrot.slane %v433, 7
      %v442 = vrot.slane %v434, 7
      %vm447 = vcmask 1040384
      %v448 = vsel %vm447, %v431, %v439
      %v449 = vsel %vm447, %v432, %v440
      %v450 = vsel %vm447, %v433, %v441
      %v451 = vsel %vm447, %v434, %v442
      %v452 = vrot.slane %v431, 1
      %v453 = vrot.slane %v432, 1
      %v454 = vrot.slane %v433, 1
      %v455 = vrot.slane %v434, 1
      %vm460 = vcmask 1042432
      %v461 = vsel %vm460, %v452, %v431
      %v462 = vsel %vm460, %v453, %v432
      %v463 = vsel %vm460, %v454, %v433
      %v464 = vsel %vm460, %v455, %v434
      %v465 = vmul.f32 %v448, 0.25
      %v466 = vmul.f32 %v449, 0.25
      %v467 = vmul.f32 %v450, 0.25
      %v468 = vmul.f32 %v451, 0.25
      %v469 = vmul.f32 %v431, 0.75
      %v470 = vmul.f32 %v432, 0.75
      %v471 = vmul.f32 %v433, 0.75
      %v472 = vmul.f32 %v434, 0.75
      %v473 = vadd.f32 %v465, %v469
      %v474 = vadd.f32 %v466, %v470
      %v475 = vadd.f32 %v467, %v471
      %v476 = vadd.f32 %v468, %v472
      %v477 = vmul.f32 %v461, 0.25
      %v478 = vmul.f32 %v462, 0.25
      %v479 = vmul.f32 %v463, 0.25
      %v480 = vmul.f32 %v464, 0.25
      %v481 = vadd.f32 %v469, %v477
      %v482 = vadd.f32 %v470, %v478
      %v483 = vadd.f32 %v471, %v479
      %v484 = vadd.f32 %v472, %v480
      %v490 = vunpack.c.l.s4 1966171168
      %v491 = vunpack.c.0.s8 %v490
      %v492 = vlaneseq
      %v493 = vshrl.u32 %v492, 7
      %v494 = vsub.s32 %v491, %v493
      %v495 = vrot.slane %v473, %v494
      %v496 = vcombine.high %v495, %v495
      %v498 = vunpack.c.l.s4 1966171168
      %v499 = vunpack.c.0.s8 %v498
      %v500 = vlaneseq
      %v501 = vshrl.u32 %v500, 7
      %v502 = vsub.s32 %v499, %v501
      %v503 = vrot.slane %v495, %v502
      %v505 = vunpack.c.l.s4 1966171168
      %v506 = vunpack.c.0.s8 %v505
      %v507 = vlaneseq
      %v508 = vshrl.u32 %v507, 7
      %v509 = vsub.s32 %v506, %v508
      %v510 = vrot.slane %v496, %v509
      %v511 = vcombine.high %v503, %v503
      %v512 = vcombine.high %v510, %v510
      %v514 = vunpack.c.l.s4 1966171168
      %v515 = vunpack.c.0.s8 %v514
      %v516 = vlaneseq
      %v517 = vshrl.u32 %v516, 7
      %v518 = vsub.s32 %v515, %v517
      %v519 = vrot.slane %v474, %v518
      %v520 = vcombine.high %v519, %v519
      %v522 = vunpack.c.l.s4 1966171168
      %v523 = vunpack.c.0.s8 %v522
      %v524 = vlaneseq
      %v525 = vshrl.u32 %v524, 7
      %v526 = vsub.s32 %v523, %v525
      %v527 = vrot.slane %v519, %v526
      %v529 = vunpack.c.l.s4 1966171168
      %v530 = vunpack.c.0.s8 %v529
      %v531 = vlaneseq
      %v532 = vshrl.u32 %v531, 7
      %v533 = vsub.s32 %v530, %v532
      %v534 = vrot.slane %v520, %v533
      %v535 = vcombine.high %v527, %v527
      %v536 = vcombine.high %v534, %v534
      %v538 = vunpack.c.l.s4 1966171168
      %v539 = vunpack.c.0.s8 %v538
      %v540 = vlaneseq
      %v541 = vshrl.u32 %v540, 7
      %v542 = vsub.s32 %v539, %v541
      %v543 = vrot.slane %v475, %v542
      %v544 = vcombine.high %v543, %v543
      %v546 = vunpack.c.l.s4 1966171168
      %v547 = vunpack.c.0.s8 %v546
      %v548 = vlaneseq
      %v549 = vshrl.u32 %v548, 7
      %v550 = vsub.s32 %v547, %v549
      %v551 = vrot.slane %v543, %v550
      %v553 = vunpack.c.l.s4 1966171168
      %v554 = vunpack.c.0.s8 %v553
      %v555 = vlaneseq
      %v556 = vshrl.u32 %v555, 7
      %v557 = vsub.s32 %v554, %v556
      %v558 = vrot.slane %v544, %v557
      %v559 = vcombine.high %v551, %v551
      %v560 = vcombine.high %v558, %v558
      %v562 = vunpack.c.l.s4 1966171168
      %v563 = vunpack.c.0.s8 %v562
      %v564 = vlaneseq
      %v565 = vshrl.u32 %v564, 7
      %v566 = vsub.s32 %v563, %v565
      %v567 = vrot.slane %v476, %v566
      %v568 = vcombine.high %v567, %v567
      %v570 = vunpack.c.l.s4 1966171168
      %v571 = vunpack.c.0.s8 %v570
      %v572 = vlaneseq
      %v573 = vshrl.u32 %v572, 7
      %v574 = vsub.s32 %v571, %v573
      %v575 = vrot.slane %v567, %v574
      %v577 = vunpack.c.l.s4 1966171168
      %v578 = vunpack.c.0.s8 %v577
      %v579 = vlaneseq
      %v580 = vshrl.u32 %v579, 7
      %v581 = vsub.s32 %v578, %v580
      %v582 = vrot.slane %v568, %v581
      %v583 = vcombine.high %v575, %v575
      %v584 = vcombine.high %v582, %v582
      %v606 = vunpack.c.l.s4 1966171168
      %v607 = vunpack.c.0.s8 %v606
      %v608 = vlaneseq
      %v609 = vshrl.u32 %v608, 7
      %v610 = vsub.s32 %v607, %v609
      %v611 = vrot.slane %v481, %v610
      %v612 = vcombine.high %v611, %v611
      %v614 = vunpack.c.l.s4 1966171168
      %v615 = vunpack.c.0.s8 %v614
      %v616 = vlaneseq
      %v617 = vshrl.u32 %v616, 7
      %v618 = vsub.s32 %v615, %v617
      %v619 = vrot.slane %v611, %v618
      %v621 = vunpack.c.l.s4 1966171168
      %v622 = vunpack.c.0.s8 %v621
      %v623 = vlaneseq
      %v624 = vshrl.u32 %v623, 7
      %v625 = vsub.s32 %v622, %v624
      %v626 = vrot.slane %v612, %v625
      %v627 = vcombine.high %v619, %v619
      %v628 = vcombine.high %v626, %v626
      %v630 = vunpack.c.l.s4 1966171168
      %v631 = vunpack.c.0.s8 %v630
      %v632 = vlaneseq
      %v633 = vshrl.u32 %v632, 7
      %v634 = vsub.s32 %v631, %v633
      %v635 = vrot.slane %v482, %v634
      %v636 = vcombine.high %v635, %v635
      %v638 = vunpack.c.l.s4 1966171168
      %v639 = vunpack.c.0.s8 %v638
      %v640 = vlaneseq
      %v641 = vshrl.u32 %v640, 7
      %v642 = vsub.s32 %v639, %v641
      %v643 = vrot.slane %v635, %v642
      %v645 = vunpack.c.l.s4 1966171168
      %v646 = vunpack.c.0.s8 %v645
      %v647 = vlaneseq
      %v648 = vshrl.u32 %v647, 7
      %v649 = vsub.s32 %v646, %v648
      %v650 = vrot.slane %v636, %v649
      %v651 = vcombine.high %v643, %v643
      %v652 = vcombine.high %v650, %v650
      %v654 = vunpack.c.l.s4 1966171168
      %v655 = vunpack.c.0.s8 %v654
      %v656 = vlaneseq
      %v657 = vshrl.u32 %v656, 7
      %v658 = vsub.s32 %v655, %v657
      %v659 = vrot.slane %v483, %v658
      %v660 = vcombine.high %v659, %v659
      %v662 = vunpack.c.l.s4 1966171168
      %v663 = vunpack.c.0.s8 %v662
      %v664 = vlaneseq
      %v665 = vshrl.u32 %v664, 7
      %v666 = vsub.s32 %v663, %v665
      %v667 = vrot.slane %v659, %v666
      %v669 = vunpack.c.l.s4 1966171168
      %v670 = vunpack.c.0.s8 %v669
      %v671 = vlaneseq
      %v672 = vshrl.u32 %v671, 7
      %v673 = vsub.s32 %v670, %v672
      %v674 = vrot.slane %v660, %v673
      %v675 = vcombine.high %v667, %v667
      %v676 = vcombine.high %v674, %v674
      %v678 = vunpack.c.l.s4 1966171168
      %v679 = vunpack.c.0.s8 %v678
      %v680 = vlaneseq
      %v681 = vshrl.u32 %v680, 7
      %v682 = vsub.s32 %v679, %v681
      %v683 = vrot.slane %v484, %v682
      %v684 = vcombine.high %v683, %v683
      %v686 = vunpack.c.l.s4 1966171168
      %v687 = vunpack.c.0.s8 %v686
      %v688 = vlaneseq
      %v689 = vshrl.u32 %v688, 7
      %v690 = vsub.s32 %v687, %v689
      %v691 = vrot.slane %v683, %v690
      %v693 = vunpack.c.l.s4 1966171168
      %v694 = vunpack.c.0.s8 %v693
      %v695 = vlaneseq
      %v696 = vshrl.u32 %v695, 7
      %v697 = vsub.s32 %v694, %v696
      %v698 = vrot.slane %v684, %v697
      %v699 = vcombine.high %v691, %v691
      %v700 = vcombine.high %v698, %v698
      %v701 = vlaneseq
      %v702 = vshrl.u32 %v701, 7
      %v703 = vsub.s32 0, %v702
      %v704 = vrot.slane %v619, %v703
      %v705 = vlaneseq
      %v706 = vshrl.u32 %v705, 7
      %v707 = vsub.s32 0, %v706
      %v708 = vrot.slane %v626, %v707
      %v709 = vlaneseq
      %v710 = vshrl.u32 %v709, 7
      %v711 = vsub.s32 0, %v710
      %v712 = vrot.slane %v627, %v711
      %v713 = vlaneseq
      %v714 = vshrl.u32 %v713, 7
      %v715 = vsub.s32 0, %v714
      %v716 = vrot.slane %v628, %v715
      %v717 = vlaneseq
      %v718 = vshrl.u32 %v717, 7
      %v719 = vsub.s32 0, %v718
      %v720 = vrot.slane %v643, %v719
      %v721 = vlaneseq
      %v722 = vshrl.u32 %v721, 7
      %v723 = vsub.s32 0, %v722
      %v724 = vrot.slane %v650, %v723
      %v725 = vlaneseq
      %v726 = vshrl.u32 %v725, 7
      %v727 = vsub.s32 0, %v726
      %v728 = vrot.slane %v651, %v727
      %v729 = vlaneseq
      %v730 = vshrl.u32 %v729, 7
      %v731 = vsub.s32 0, %v730
      %v732 = vrot.slane %v652, %v731
      %v733 = vlaneseq
      %v734 = vshrl.u32 %v733, 7
      %v735 = vsub.s32 0, %v734
      %v736 = vrot.slane %v667, %v735
      %v737 = vlaneseq
      %v738 = vshrl.u32 %v737, 7
      %v739 = vsub.s32 0, %v738
      %v740 = vrot.slane %v674, %v739
      %v741 = vlaneseq
      %v742 = vshrl.u32 %v741, 7
      %v743 = vsub.s32 0, %v742
      %v744 = vrot.slane %v675, %v743
      %v745 = vlaneseq
      %v746 = vshrl.u32 %v745, 7
      %v747 = vsub.s32 0, %v746
      %v748 = vrot.slane %v676, %v747
      %v749 = vlaneseq
      %v750 = vshrl.u32 %v749, 7
      %v751 = vsub.s32 0, %v750
      %v752 = vrot.slane %v691, %v751
      %v753 = vlaneseq
      %v754 = vshrl.u32 %v753, 7
      %v755 = vsub.s32 0, %v754
      %v756 = vrot.slane %v698, %v755
      %v757 = vlaneseq
      %v758 = vshrl.u32 %v757, 7
      %v759 = vsub.s32 0, %v758
      %v760 = vrot.slane %v699, %v759
      %v761 = vlaneseq
      %v762 = vshrl.u32 %v761, 7
      %v763 = vsub.s32 0, %v762
      %v764 = vrot.slane %v700, %v763
      %v781 = vsel %vm447, %v503, %v704
      %v782 = vsel %vm447, %v510, %v708
      %v783 = vsel %vm447, %v511, %v712
      %v784 = vsel %vm447, %v512, %v716
      %v785 = vsel %vm447, %v527, %v720
      %v786 = vsel %vm447, %v534, %v724
      %v787 = vsel %vm447, %v535, %v728
      %v788 = vsel %vm447, %v536, %v732
      %v789 = vsel %vm447, %v551, %v736
      %v790 = vsel %vm447, %v558, %v740
      %v791 = vsel %vm447, %v559, %v744
      %v792 = vsel %vm447, %v560, %v748
      %v793 = vsel %vm447, %v575, %v752
      %v794 = vsel %vm447, %v582, %v756
      %v795 = vsel %vm447, %v583, %v760
      %v796 = vsel %vm447, %v584, %v764
      %v797 = vmul.f32 %v781, 0.25
      %v798 = vmul.f32 %v782, 0.25
      %v799 = vmul.f32 %v783, 0.25
      %v800 = vmul.f32 %v784, 0.25
      %v801 = vmul.f32 %v785, 0.25
      %v802 = vmul.f32 %v786, 0.25
      %v803 = vmul.f32 %v787, 0.25
      %v804 = vmul.f32 %v788, 0.25
      %v805 = vmul.f32 %v789, 0.25
      %v806 = vmul.f32 %v790, 0.25
      %v807 = vmul.f32 %v791, 0.25
      %v808 = vmul.f32 %v792, 0.25
      %v809 = vmul.f32 %v781, 0.75
      %v810 = vmul.f32 %v782, 0.75
      %v811 = vmul.f32 %v783, 0.75
      %v812 = vmul.f32 %v784, 0.75
      %v813 = vmul.f32 %v785, 0.75
      %v814 = vmul.f32 %v786, 0.75
      %v815 = vmul.f32 %v787, 0.75
      %v816 = vmul.f32 %v788, 0.75
      %v817 = vmul.f32 %v789, 0.75
      %v818 = vmul.f32 %v790, 0.75
      %v819 = vmul.f32 %v791, 0.75
      %v820 = vmul.f32 %v792, 0.75
      %v821 = vmul.f32 %v793, 0.75
      %v822 = vmul.f32 %v794, 0.75
      %v823 = vmul.f32 %v795, 0.75
      %v824 = vmul.f32 %v796, 0.75
      %v825 = vadd.f32 %v797, %v809
      %v826 = vadd.f32 %v798, %v810
      %v827 = vadd.f32 %v799, %v811
      %v828 = vadd.f32 %v800, %v812
      %v829 = vadd.f32 %v797, %v813
      %v830 = vadd.f32 %v798, %v814
      %v831 = vadd.f32 %v799, %v815
      %v832 = vadd.f32 %v800, %v816
      %v833 = vadd.f32 %v801, %v817
      %v834 = vadd.f32 %v802, %v818
      %v835 = vadd.f32 %v803, %v819
      %v836 = vadd.f32 %v804, %v820
      %v837 = vadd.f32 %v805, %v821
      %v838 = vadd.f32 %v806, %v822
      %v839 = vadd.f32 %v807, %v823
      %v840 = vadd.f32 %v808, %v824
      %v841 = vmul.f32 %v793, 0.25
      %v842 = vmul.f32 %v794, 0.25
      %v843 = vmul.f32 %v795, 0.25
      %v844 = vmul.f32 %v796, 0.25
      %v845 = vadd.f32 %v809, %v801
      %v846 = vadd.f32 %v810, %v802
      %v847 = vadd.f32 %v811, %v803
      %v848 = vadd.f32 %v812, %v804
      %v849 = vadd.f32 %v813, %v805
      %v850 = vadd.f32 %v814, %v806
      %v851 = vadd.f32 %v815, %v807
      %v852 = vadd.f32 %v816, %v808
      %v853 = vadd.f32 %v817, %v841
      %v854 = vadd.f32 %v818, %v842
      %v855 = vadd.f32 %v819, %v843
      %v856 = vadd.f32 %v820, %v844
      %v857 = vadd.f32 %v821, %v841
      %v858 = vadd.f32 %v822, %v842
      %v859 = vadd.f32 %v823, %v843
      %v860 = vadd.f32 %v824, %v844
      %v861 = vld [vmem:[%s400] sm:$0x3]
      %v862 = vld [vmem:[%s400 + $0x2] sm:$0x3]
      %v863 = vld [vmem:[%s400 + $0x4] sm:$0x3]
      %v864 = vld [vmem:[%s400 + $0x6] sm:$0x3]
      %v865 = vunpack.c.l.bf16 %v861
      %v866 = vunpack.c.l.bf16 %v862
      %v867 = vunpack.c.l.bf16 %v863
      %v868 = vunpack.c.l.bf16 %v864
      %v873 = vrot.slane %v865, 7
      %v874 = vrot.slane %v866, 7
      %v875 = vrot.slane %v867, 7
      %v876 = vrot.slane %v868, 7
      %v881 = vsel %vm447, %v865, %v873
      %v882 = vsel %vm447, %v866, %v874
      %v883 = vsel %vm447, %v867, %v875
      %v884 = vsel %vm447, %v868, %v876
      %v885 = vrot.slane %v865, 1
      %v886 = vrot.slane %v866, 1
      %v887 = vrot.slane %v867, 1
      %v888 = vrot.slane %v868, 1
      %v893 = vsel %vm460, %v885, %v865
      %v894 = vsel %vm460, %v886, %v866
      %v895 = vsel %vm460, %v887, %v867
      %v896 = vsel %vm460, %v888, %v868
      %v897 = vmul.f32 %v881, 0.25
      %v898 = vmul.f32 %v882, 0.25
      %v899 = vmul.f32 %v883, 0.25
      %v900 = vmul.f32 %v884, 0.25
      %v901 = vmul.f32 %v865, 0.75
      %v902 = vmul.f32 %v866, 0.75
      %v903 = vmul.f32 %v867, 0.75
      %v904 = vmul.f32 %v868, 0.75
      %v905 = vadd.f32 %v897, %v901
      %v906 = vadd.f32 %v898, %v902
      %v907 = vadd.f32 %v899, %v903
      %v908 = vadd.f32 %v900, %v904
      %v909 = vmul.f32 %v893, 0.25
      %v910 = vmul.f32 %v894, 0.25
      %v911 = vmul.f32 %v895, 0.25
      %v912 = vmul.f32 %v896, 0.25
      %v913 = vadd.f32 %v901, %v909
      %v914 = vadd.f32 %v902, %v910
      %v915 = vadd.f32 %v903, %v911
      %v916 = vadd.f32 %v904, %v912
      %v922 = vunpack.c.l.s4 1966171168
      %v923 = vunpack.c.0.s8 %v922
      %v924 = vlaneseq
      %v925 = vshrl.u32 %v924, 7
      %v926 = vsub.s32 %v923, %v925
      %v927 = vrot.slane %v905, %v926
      %v928 = vcombine.high %v927, %v927
      %v930 = vunpack.c.l.s4 1966171168
      %v931 = vunpack.c.0.s8 %v930
      %v932 = vlaneseq
      %v933 = vshrl.u32 %v932, 7
      %v934 = vsub.s32 %v931, %v933
      %v935 = vrot.slane %v927, %v934
      %v937 = vunpack.c.l.s4 1966171168
      %v938 = vunpack.c.0.s8 %v937
      %v939 = vlaneseq
      %v940 = vshrl.u32 %v939, 7
      %v941 = vsub.s32 %v938, %v940
      %v942 = vrot.slane %v928, %v941
      %v943 = vcombine.high %v935, %v935
      %v944 = vcombine.high %v942, %v942
      %v946 = vunpack.c.l.s4 1966171168
      %v947 = vunpack.c.0.s8 %v946
      %v948 = vlaneseq
      %v949 = vshrl.u32 %v948, 7
      %v950 = vsub.s32 %v947, %v949
      %v951 = vrot.slane %v906, %v950
      %v952 = vcombine.high %v951, %v951
      %v954 = vunpack.c.l.s4 1966171168
      %v955 = vunpack.c.0.s8 %v954
      %v956 = vlaneseq
      %v957 = vshrl.u32 %v956, 7
      %v958 = vsub.s32 %v955, %v957
      %v959 = vrot.slane %v951, %v958
      %v961 = vunpack.c.l.s4 1966171168
      %v962 = vunpack.c.0.s8 %v961
      %v963 = vlaneseq
      %v964 = vshrl.u32 %v963, 7
      %v965 = vsub.s32 %v962, %v964
      %v966 = vrot.slane %v952, %v965
      %v967 = vcombine.high %v959, %v959
      %v968 = vcombine.high %v966, %v966
      %v970 = vunpack.c.l.s4 1966171168
      %v971 = vunpack.c.0.s8 %v970
      %v972 = vlaneseq
      %v973 = vshrl.u32 %v972, 7
      %v974 = vsub.s32 %v971, %v973
      %v975 = vrot.slane %v907, %v974
      %v976 = vcombine.high %v975, %v975
      %v978 = vunpack.c.l.s4 1966171168
      %v979 = vunpack.c.0.s8 %v978
      %v980 = vlaneseq
      %v981 = vshrl.u32 %v980, 7
      %v982 = vsub.s32 %v979, %v981
      %v983 = vrot.slane %v975, %v982
      %v985 = vunpack.c.l.s4 1966171168
      %v986 = vunpack.c.0.s8 %v985
      %v987 = vlaneseq
      %v988 = vshrl.u32 %v987, 7
      %v989 = vsub.s32 %v986, %v988
      %v990 = vrot.slane %v976, %v989
      %v991 = vcombine.high %v983, %v983
      %v992 = vcombine.high %v990, %v990
      %v994 = vunpack.c.l.s4 1966171168
      %v995 = vunpack.c.0.s8 %v994
      %v996 = vlaneseq
      %v997 = vshrl.u32 %v996, 7
      %v998 = vsub.s32 %v995, %v997
      %v999 = vrot.slane %v908, %v998
      %v1000 = vcombine.high %v999, %v999
      %v1002 = vunpack.c.l.s4 1966171168
      %v1003 = vunpack.c.0.s8 %v1002
      %v1004 = vlaneseq
      %v1005 = vshrl.u32 %v1004, 7
      %v1006 = vsub.s32 %v1003, %v1005
      %v1007 = vrot.slane %v999, %v1006
      %v1009 = vunpack.c.l.s4 1966171168
      %v1010 = vunpack.c.0.s8 %v1009
      %v1011 = vlaneseq
      %v1012 = vshrl.u32 %v1011, 7
      %v1013 = vsub.s32 %v1010, %v1012
      %v1014 = vrot.slane %v1000, %v1013
      %v1015 = vcombine.high %v1007, %v1007
      %v1016 = vcombine.high %v1014, %v1014
      %v1038 = vunpack.c.l.s4 1966171168
      %v1039 = vunpack.c.0.s8 %v1038
      %v1040 = vlaneseq
      %v1041 = vshrl.u32 %v1040, 7
      %v1042 = vsub.s32 %v1039, %v1041
      %v1043 = vrot.slane %v913, %v1042
      %v1044 = vcombine.high %v1043, %v1043
      %v1046 = vunpack.c.l.s4 1966171168
      %v1047 = vunpack.c.0.s8 %v1046
      %v1048 = vlaneseq
      %v1049 = vshrl.u32 %v1048, 7
      %v1050 = vsub.s32 %v1047, %v1049
      %v1051 = vrot.slane %v1043, %v1050
      %v1053 = vunpack.c.l.s4 1966171168
      %v1054 = vunpack.c.0.s8 %v1053
      %v1055 = vlaneseq
      %v1056 = vshrl.u32 %v1055, 7
      %v1057 = vsub.s32 %v1054, %v1056
      %v1058 = vrot.slane %v1044, %v1057
      %v1059 = vcombine.high %v1051, %v1051
      %v1060 = vcombine.high %v1058, %v1058
      %v1062 = vunpack.c.l.s4 1966171168
      %v1063 = vunpack.c.0.s8 %v1062
      %v1064 = vlaneseq
      %v1065 = vshrl.u32 %v1064, 7
      %v1066 = vsub.s32 %v1063, %v1065
      %v1067 = vrot.slane %v914, %v1066
      %v1068 = vcombine.high %v1067, %v1067
      %v1070 = vunpack.c.l.s4 1966171168
      %v1071 = vunpack.c.0.s8 %v1070
      %v1072 = vlaneseq
      %v1073 = vshrl.u32 %v1072, 7
      %v1074 = vsub.s32 %v1071, %v1073
      %v1075 = vrot.slane %v1067, %v1074
      %v1077 = vunpack.c.l.s4 1966171168
      %v1078 = vunpack.c.0.s8 %v1077
      %v1079 = vlaneseq
      %v1080 = vshrl.u32 %v1079, 7
      %v1081 = vsub.s32 %v1078, %v1080
      %v1082 = vrot.slane %v1068, %v1081
      %v1083 = vcombine.high %v1075, %v1075
      %v1084 = vcombine.high %v1082, %v1082
      %v1086 = vunpack.c.l.s4 1966171168
      %v1087 = vunpack.c.0.s8 %v1086
      %v1088 = vlaneseq
      %v1089 = vshrl.u32 %v1088, 7
      %v1090 = vsub.s32 %v1087, %v1089
      %v1091 = vrot.slane %v915, %v1090
      %v1092 = vcombine.high %v1091, %v1091
      %v1094 = vunpack.c.l.s4 1966171168
      %v1095 = vunpack.c.0.s8 %v1094
      %v1096 = vlaneseq
      %v1097 = vshrl.u32 %v1096, 7
      %v1098 = vsub.s32 %v1095, %v1097
      %v1099 = vrot.slane %v1091, %v1098
      %v1101 = vunpack.c.l.s4 1966171168
      %v1102 = vunpack.c.0.s8 %v1101
      %v1103 = vlaneseq
      %v1104 = vshrl.u32 %v1103, 7
      %v1105 = vsub.s32 %v1102, %v1104
      %v1106 = vrot.slane %v1092, %v1105
      %v1107 = vcombine.high %v1099, %v1099
      %v1108 = vcombine.high %v1106, %v1106
      %v1110 = vunpack.c.l.s4 1966171168
      %v1111 = vunpack.c.0.s8 %v1110
      %v1112 = vlaneseq
      %v1113 = vshrl.u32 %v1112, 7
      %v1114 = vsub.s32 %v1111, %v1113
      %v1115 = vrot.slane %v916, %v1114
      %v1116 = vcombine.high %v1115, %v1115
      %v1118 = vunpack.c.l.s4 1966171168
      %v1119 = vunpack.c.0.s8 %v1118
      %v1120 = vlaneseq
      %v1121 = vshrl.u32 %v1120, 7
      %v1122 = vsub.s32 %v1119, %v1121
      %v1123 = vrot.slane %v1115, %v1122
      %v1125 = vunpack.c.l.s4 1966171168
      %v1126 = vunpack.c.0.s8 %v1125
      %v1127 = vlaneseq
      %v1128 = vshrl.u32 %v1127, 7
      %v1129 = vsub.s32 %v1126, %v1128
      %v1130 = vrot.slane %v1116, %v1129
      %v1131 = vcombine.high %v1123, %v1123
      %v1132 = vcombine.high %v1130, %v1130
      %v1133 = vlaneseq
      %v1134 = vshrl.u32 %v1133, 7
      %v1135 = vsub.s32 0, %v1134
      %v1136 = vrot.slane %v1051, %v1135
      %v1137 = vlaneseq
      %v1138 = vshrl.u32 %v1137, 7
      %v1139 = vsub.s32 0, %v1138
      %v1140 = vrot.slane %v1058, %v1139
      %v1141 = vlaneseq
      %v1142 = vshrl.u32 %v1141, 7
      %v1143 = vsub.s32 0, %v1142
      %v1144 = vrot.slane %v1059, %v1143
      %v1145 = vlaneseq
      %v1146 = vshrl.u32 %v1145, 7
      %v1147 = vsub.s32 0, %v1146
      %v1148 = vrot.slane %v1060, %v1147
      %v1149 = vlaneseq
      %v1150 = vshrl.u32 %v1149, 7
      %v1151 = vsub.s32 0, %v1150
      %v1152 = vrot.slane %v1075, %v1151
      %v1153 = vlaneseq
      %v1154 = vshrl.u32 %v1153, 7
      %v1155 = vsub.s32 0, %v1154
      %v1156 = vrot.slane %v1082, %v1155
      %v1157 = vlaneseq
      %v1158 = vshrl.u32 %v1157, 7
      %v1159 = vsub.s32 0, %v1158
      %v1160 = vrot.slane %v1083, %v1159
      %v1161 = vlaneseq
      %v1162 = vshrl.u32 %v1161, 7
      %v1163 = vsub.s32 0, %v1162
      %v1164 = vrot.slane %v1084, %v1163
      %v1165 = vlaneseq
      %v1166 = vshrl.u32 %v1165, 7
      %v1167 = vsub.s32 0, %v1166
      %v1168 = vrot.slane %v1099, %v1167
      %v1169 = vlaneseq
      %v1170 = vshrl.u32 %v1169, 7
      %v1171 = vsub.s32 0, %v1170
      %v1172 = vrot.slane %v1106, %v1171
      %v1173 = vlaneseq
      %v1174 = vshrl.u32 %v1173, 7
      %v1175 = vsub.s32 0, %v1174
      %v1176 = vrot.slane %v1107, %v1175
      %v1177 = vlaneseq
      %v1178 = vshrl.u32 %v1177, 7
      %v1179 = vsub.s32 0, %v1178
      %v1180 = vrot.slane %v1108, %v1179
      %v1181 = vlaneseq
      %v1182 = vshrl.u32 %v1181, 7
      %v1183 = vsub.s32 0, %v1182
      %v1184 = vrot.slane %v1123, %v1183
      %v1185 = vlaneseq
      %v1186 = vshrl.u32 %v1185, 7
      %v1187 = vsub.s32 0, %v1186
      %v1188 = vrot.slane %v1130, %v1187
      %v1189 = vlaneseq
      %v1190 = vshrl.u32 %v1189, 7
      %v1191 = vsub.s32 0, %v1190
      %v1192 = vrot.slane %v1131, %v1191
      %v1193 = vlaneseq
      %v1194 = vshrl.u32 %v1193, 7
      %v1195 = vsub.s32 0, %v1194
      %v1196 = vrot.slane %v1132, %v1195
      %v1213 = vsel %vm447, %v935, %v1136
      %v1214 = vsel %vm447, %v942, %v1140
      %v1215 = vsel %vm447, %v943, %v1144
      %v1216 = vsel %vm447, %v944, %v1148
      %v1217 = vsel %vm447, %v959, %v1152
      %v1218 = vsel %vm447, %v966, %v1156
      %v1219 = vsel %vm447, %v967, %v1160
      %v1220 = vsel %vm447, %v968, %v1164
      %v1221 = vsel %vm447, %v983, %v1168
      %v1222 = vsel %vm447, %v990, %v1172
      %v1223 = vsel %vm447, %v991, %v1176
      %v1224 = vsel %vm447, %v992, %v1180
      %v1225 = vsel %vm447, %v1007, %v1184
      %v1226 = vsel %vm447, %v1014, %v1188
      %v1227 = vsel %vm447, %v1015, %v1192
      %v1228 = vsel %vm447, %v1016, %v1196
      %v1229 = vmul.f32 %v1213, 0.25
      %v1230 = vmul.f32 %v1214, 0.25
      %v1231 = vmul.f32 %v1215, 0.25
      %v1232 = vmul.f32 %v1216, 0.25
      %v1233 = vmul.f32 %v1217, 0.25
      %v1234 = vmul.f32 %v1218, 0.25
      %v1235 = vmul.f32 %v1219, 0.25
      %v1236 = vmul.f32 %v1220, 0.25
      %v1237 = vmul.f32 %v1221, 0.25
      %v1238 = vmul.f32 %v1222, 0.25
      %v1239 = vmul.f32 %v1223, 0.25
      %v1240 = vmul.f32 %v1224, 0.25
      %v1241 = vmul.f32 %v1213, 0.75
      %v1242 = vmul.f32 %v1214, 0.75
      %v1243 = vmul.f32 %v1215, 0.75
      %v1244 = vmul.f32 %v1216, 0.75
      %v1245 = vmul.f32 %v1217, 0.75
      %v1246 = vmul.f32 %v1218, 0.75
      %v1247 = vmul.f32 %v1219, 0.75
      %v1248 = vmul.f32 %v1220, 0.75
      %v1249 = vmul.f32 %v1221, 0.75
      %v1250 = vmul.f32 %v1222, 0.75
      %v1251 = vmul.f32 %v1223, 0.75
      %v1252 = vmul.f32 %v1224, 0.75
      %v1253 = vmul.f32 %v1225, 0.75
      %v1254 = vmul.f32 %v1226, 0.75
      %v1255 = vmul.f32 %v1227, 0.75
      %v1256 = vmul.f32 %v1228, 0.75
      %v1257 = vadd.f32 %v1229, %v1241
      %v1258 = vadd.f32 %v1230, %v1242
      %v1259 = vadd.f32 %v1231, %v1243
      %v1260 = vadd.f32 %v1232, %v1244
      %v1261 = vadd.f32 %v1229, %v1245
      %v1262 = vadd.f32 %v1230, %v1246
      %v1263 = vadd.f32 %v1231, %v1247
      %v1264 = vadd.f32 %v1232, %v1248
      %v1265 = vadd.f32 %v1233, %v1249
      %v1266 = vadd.f32 %v1234, %v1250
      %v1267 = vadd.f32 %v1235, %v1251
      %v1268 = vadd.f32 %v1236, %v1252
      %v1269 = vadd.f32 %v1237, %v1253
      %v1270 = vadd.f32 %v1238, %v1254
      %v1271 = vadd.f32 %v1239, %v1255
      %v1272 = vadd.f32 %v1240, %v1256
      %v1273 = vmul.f32 %v1225, 0.25
      %v1274 = vmul.f32 %v1226, 0.25
      %v1275 = vmul.f32 %v1227, 0.25
      %v1276 = vmul.f32 %v1228, 0.25
      %v1277 = vadd.f32 %v1241, %v1233
      %v1278 = vadd.f32 %v1242, %v1234
      %v1279 = vadd.f32 %v1243, %v1235
      %v1280 = vadd.f32 %v1244, %v1236
      %v1281 = vadd.f32 %v1245, %v1237
      %v1282 = vadd.f32 %v1246, %v1238
      %v1283 = vadd.f32 %v1247, %v1239
      %v1284 = vadd.f32 %v1248, %v1240
      %v1285 = vadd.f32 %v1249, %v1273
      %v1286 = vadd.f32 %v1250, %v1274
      %v1287 = vadd.f32 %v1251, %v1275
      %v1288 = vadd.f32 %v1252, %v1276
      %v1289 = vadd.f32 %v1253, %v1273
      %v1290 = vadd.f32 %v1254, %v1274
      %v1291 = vadd.f32 %v1255, %v1275
      %v1292 = vadd.f32 %v1256, %v1276
      %v1293 = vld [vmem:[%s412] sm:$0x3]
      %v1294 = vld [vmem:[%s412 + $0x2] sm:$0x3]
      %v1295 = vld [vmem:[%s412 + $0x4] sm:$0x3]
      %v1296 = vld [vmem:[%s412 + $0x6] sm:$0x3]
      %v1297 = vunpack.c.l.bf16 %v1293
      %v1298 = vunpack.c.l.bf16 %v1294
      %v1299 = vunpack.c.l.bf16 %v1295
      %v1300 = vunpack.c.l.bf16 %v1296
      %v1305 = vrot.slane %v1297, 7
      %v1306 = vrot.slane %v1298, 7
      %v1307 = vrot.slane %v1299, 7
      %v1308 = vrot.slane %v1300, 7
      %v1313 = vsel %vm447, %v1297, %v1305
      %v1314 = vsel %vm447, %v1298, %v1306
      %v1315 = vsel %vm447, %v1299, %v1307
      %v1316 = vsel %vm447, %v1300, %v1308
      %v1317 = vrot.slane %v1297, 1
      %v1318 = vrot.slane %v1298, 1
      %v1319 = vrot.slane %v1299, 1
      %v1320 = vrot.slane %v1300, 1
      %v1325 = vsel %vm460, %v1317, %v1297
      %v1326 = vsel %vm460, %v1318, %v1298
      %v1327 = vsel %vm460, %v1319, %v1299
      %v1328 = vsel %vm460, %v1320, %v1300
      %v1329 = vmul.f32 %v1313, 0.25
      %v1330 = vmul.f32 %v1314, 0.25
      %v1331 = vmul.f32 %v1315, 0.25
      %v1332 = vmul.f32 %v1316, 0.25
      %v1333 = vmul.f32 %v1297, 0.75
      %v1334 = vmul.f32 %v1298, 0.75
      %v1335 = vmul.f32 %v1299, 0.75
      %v1336 = vmul.f32 %v1300, 0.75
      %v1337 = vadd.f32 %v1329, %v1333
      %v1338 = vadd.f32 %v1330, %v1334
      %v1339 = vadd.f32 %v1331, %v1335
      %v1340 = vadd.f32 %v1332, %v1336
      %v1341 = vmul.f32 %v1325, 0.25
      %v1342 = vmul.f32 %v1326, 0.25
      %v1343 = vmul.f32 %v1327, 0.25
      %v1344 = vmul.f32 %v1328, 0.25
      %v1345 = vadd.f32 %v1333, %v1341
      %v1346 = vadd.f32 %v1334, %v1342
      %v1347 = vadd.f32 %v1335, %v1343
      %v1348 = vadd.f32 %v1336, %v1344
      %v1354 = vunpack.c.l.s4 1966171168
      %v1355 = vunpack.c.0.s8 %v1354
      %v1356 = vlaneseq
      %v1357 = vshrl.u32 %v1356, 7
      %v1358 = vsub.s32 %v1355, %v1357
      %v1359 = vrot.slane %v1337, %v1358
      %v1360 = vcombine.high %v1359, %v1359
      %v1362 = vunpack.c.l.s4 1966171168
      %v1363 = vunpack.c.0.s8 %v1362
      %v1364 = vlaneseq
      %v1365 = vshrl.u32 %v1364, 7
      %v1366 = vsub.s32 %v1363, %v1365
      %v1367 = vrot.slane %v1359, %v1366
      %v1369 = vunpack.c.l.s4 1966171168
      %v1370 = vunpack.c.0.s8 %v1369
      %v1371 = vlaneseq
      %v1372 = vshrl.u32 %v1371, 7
      %v1373 = vsub.s32 %v1370, %v1372
      %v1374 = vrot.slane %v1360, %v1373
      %v1375 = vcombine.high %v1367, %v1367
      %v1376 = vcombine.high %v1374, %v1374
      %v1378 = vunpack.c.l.s4 1966171168
      %v1379 = vunpack.c.0.s8 %v1378
      %v1380 = vlaneseq
      %v1381 = vshrl.u32 %v1380, 7
      %v1382 = vsub.s32 %v1379, %v1381
      %v1383 = vrot.slane %v1338, %v1382
      %v1384 = vcombine.high %v1383, %v1383
      %v1386 = vunpack.c.l.s4 1966171168
      %v1387 = vunpack.c.0.s8 %v1386
      %v1388 = vlaneseq
      %v1389 = vshrl.u32 %v1388, 7
      %v1390 = vsub.s32 %v1387, %v1389
      %v1391 = vrot.slane %v1383, %v1390
      %v1393 = vunpack.c.l.s4 1966171168
      %v1394 = vunpack.c.0.s8 %v1393
      %v1395 = vlaneseq
      %v1396 = vshrl.u32 %v1395, 7
      %v1397 = vsub.s32 %v1394, %v1396
      %v1398 = vrot.slane %v1384, %v1397
      %v1399 = vcombine.high %v1391, %v1391
      %v1400 = vcombine.high %v1398, %v1398
      %v1402 = vunpack.c.l.s4 1966171168
      %v1403 = vunpack.c.0.s8 %v1402
      %v1404 = vlaneseq
      %v1405 = vshrl.u32 %v1404, 7
      %v1406 = vsub.s32 %v1403, %v1405
      %v1407 = vrot.slane %v1339, %v1406
      %v1408 = vcombine.high %v1407, %v1407
      %v1410 = vunpack.c.l.s4 1966171168
      %v1411 = vunpack.c.0.s8 %v1410
      %v1412 = vlaneseq
      %v1413 = vshrl.u32 %v1412, 7
      %v1414 = vsub.s32 %v1411, %v1413
      %v1415 = vrot.slane %v1407, %v1414
      %v1417 = vunpack.c.l.s4 1966171168
      %v1418 = vunpack.c.0.s8 %v1417
      %v1419 = vlaneseq
      %v1420 = vshrl.u32 %v1419, 7
      %v1421 = vsub.s32 %v1418, %v1420
      %v1422 = vrot.slane %v1408, %v1421
      %v1423 = vcombine.high %v1415, %v1415
      %v1424 = vcombine.high %v1422, %v1422
      %v1426 = vunpack.c.l.s4 1966171168
      %v1427 = vunpack.c.0.s8 %v1426
      %v1428 = vlaneseq
      %v1429 = vshrl.u32 %v1428, 7
      %v1430 = vsub.s32 %v1427, %v1429
      %v1431 = vrot.slane %v1340, %v1430
      %v1432 = vcombine.high %v1431, %v1431
      %v1434 = vunpack.c.l.s4 1966171168
      %v1435 = vunpack.c.0.s8 %v1434
      %v1436 = vlaneseq
      %v1437 = vshrl.u32 %v1436, 7
      %v1438 = vsub.s32 %v1435, %v1437
      %v1439 = vrot.slane %v1431, %v1438
      %v1441 = vunpack.c.l.s4 1966171168
      %v1442 = vunpack.c.0.s8 %v1441
      %v1443 = vlaneseq
      %v1444 = vshrl.u32 %v1443, 7
      %v1445 = vsub.s32 %v1442, %v1444
      %v1446 = vrot.slane %v1432, %v1445
      %v1447 = vcombine.high %v1439, %v1439
      %v1448 = vcombine.high %v1446, %v1446
      %v1470 = vunpack.c.l.s4 1966171168
      %v1471 = vunpack.c.0.s8 %v1470
      %v1472 = vlaneseq
      %v1473 = vshrl.u32 %v1472, 7
      %v1474 = vsub.s32 %v1471, %v1473
      %v1475 = vrot.slane %v1345, %v1474
      %v1476 = vcombine.high %v1475, %v1475
      %v1478 = vunpack.c.l.s4 1966171168
      %v1479 = vunpack.c.0.s8 %v1478
      %v1480 = vlaneseq
      %v1481 = vshrl.u32 %v1480, 7
      %v1482 = vsub.s32 %v1479, %v1481
      %v1483 = vrot.slane %v1475, %v1482
      %v1485 = vunpack.c.l.s4 1966171168
      %v1486 = vunpack.c.0.s8 %v1485
      %v1487 = vlaneseq
      %v1488 = vshrl.u32 %v1487, 7
      %v1489 = vsub.s32 %v1486, %v1488
      %v1490 = vrot.slane %v1476, %v1489
      %v1491 = vcombine.high %v1483, %v1483
      %v1492 = vcombine.high %v1490, %v1490
      %v1494 = vunpack.c.l.s4 1966171168
      %v1495 = vunpack.c.0.s8 %v1494
      %v1496 = vlaneseq
      %v1497 = vshrl.u32 %v1496, 7
      %v1498 = vsub.s32 %v1495, %v1497
      %v1499 = vrot.slane %v1346, %v1498
      %v1500 = vcombine.high %v1499, %v1499
      %v1502 = vunpack.c.l.s4 1966171168
      %v1503 = vunpack.c.0.s8 %v1502
      %v1504 = vlaneseq
      %v1505 = vshrl.u32 %v1504, 7
      %v1506 = vsub.s32 %v1503, %v1505
      %v1507 = vrot.slane %v1499, %v1506
      %v1509 = vunpack.c.l.s4 1966171168
      %v1510 = vunpack.c.0.s8 %v1509
      %v1511 = vlaneseq
      %v1512 = vshrl.u32 %v1511, 7
      %v1513 = vsub.s32 %v1510, %v1512
      %v1514 = vrot.slane %v1500, %v1513
      %v1515 = vcombine.high %v1507, %v1507
      %v1516 = vcombine.high %v1514, %v1514
      %v1518 = vunpack.c.l.s4 1966171168
      %v1519 = vunpack.c.0.s8 %v1518
      %v1520 = vlaneseq
      %v1521 = vshrl.u32 %v1520, 7
      %v1522 = vsub.s32 %v1519, %v1521
      %v1523 = vrot.slane %v1347, %v1522
      %v1524 = vcombine.high %v1523, %v1523
      %v1526 = vunpack.c.l.s4 1966171168
      %v1527 = vunpack.c.0.s8 %v1526
      %v1528 = vlaneseq
      %v1529 = vshrl.u32 %v1528, 7
      %v1530 = vsub.s32 %v1527, %v1529
      %v1531 = vrot.slane %v1523, %v1530
      %v1533 = vunpack.c.l.s4 1966171168
      %v1534 = vunpack.c.0.s8 %v1533
      %v1535 = vlaneseq
      %v1536 = vshrl.u32 %v1535, 7
      %v1537 = vsub.s32 %v1534, %v1536
      %v1538 = vrot.slane %v1524, %v1537
      %v1539 = vcombine.high %v1531, %v1531
      %v1540 = vcombine.high %v1538, %v1538
      %v1542 = vunpack.c.l.s4 1966171168
      %v1543 = vunpack.c.0.s8 %v1542
      %v1544 = vlaneseq
      %v1545 = vshrl.u32 %v1544, 7
      %v1546 = vsub.s32 %v1543, %v1545
      %v1547 = vrot.slane %v1348, %v1546
      %v1548 = vcombine.high %v1547, %v1547
      %v1550 = vunpack.c.l.s4 1966171168
      %v1551 = vunpack.c.0.s8 %v1550
      %v1552 = vlaneseq
      %v1553 = vshrl.u32 %v1552, 7
      %v1554 = vsub.s32 %v1551, %v1553
      %v1555 = vrot.slane %v1547, %v1554
      %v1557 = vunpack.c.l.s4 1966171168
      %v1558 = vunpack.c.0.s8 %v1557
      %v1559 = vlaneseq
      %v1560 = vshrl.u32 %v1559, 7
      %v1561 = vsub.s32 %v1558, %v1560
      %v1562 = vrot.slane %v1548, %v1561
      %v1563 = vcombine.high %v1555, %v1555
      %v1564 = vcombine.high %v1562, %v1562
      %v1565 = vlaneseq
      %v1566 = vshrl.u32 %v1565, 7
      %v1567 = vsub.s32 0, %v1566
      %v1568 = vrot.slane %v1483, %v1567
      %v1569 = vlaneseq
      %v1570 = vshrl.u32 %v1569, 7
      %v1571 = vsub.s32 0, %v1570
      %v1572 = vrot.slane %v1490, %v1571
      %v1573 = vlaneseq
      %v1574 = vshrl.u32 %v1573, 7
      %v1575 = vsub.s32 0, %v1574
      %v1576 = vrot.slane %v1491, %v1575
      %v1577 = vlaneseq
      %v1578 = vshrl.u32 %v1577, 7
      %v1579 = vsub.s32 0, %v1578
      %v1580 = vrot.slane %v1492, %v1579
      %v1581 = vlaneseq
      %v1582 = vshrl.u32 %v1581, 7
      %v1583 = vsub.s32 0, %v1582
      %v1584 = vrot.slane %v1507, %v1583
      %v1585 = vlaneseq
      %v1586 = vshrl.u32 %v1585, 7
      %v1587 = vsub.s32 0, %v1586
      %v1588 = vrot.slane %v1514, %v1587
      %v1589 = vlaneseq
      %v1590 = vshrl.u32 %v1589, 7
      %v1591 = vsub.s32 0, %v1590
      %v1592 = vrot.slane %v1515, %v1591
      %v1593 = vlaneseq
      %v1594 = vshrl.u32 %v1593, 7
      %v1595 = vsub.s32 0, %v1594
      %v1596 = vrot.slane %v1516, %v1595
      %v1597 = vlaneseq
      %v1598 = vshrl.u32 %v1597, 7
      %v1599 = vsub.s32 0, %v1598
      %v1600 = vrot.slane %v1531, %v1599
      %v1601 = vlaneseq
      %v1602 = vshrl.u32 %v1601, 7
      %v1603 = vsub.s32 0, %v1602
      %v1604 = vrot.slane %v1538, %v1603
      %v1605 = vlaneseq
      %v1606 = vshrl.u32 %v1605, 7
      %v1607 = vsub.s32 0, %v1606
      %v1608 = vrot.slane %v1539, %v1607
      %v1609 = vlaneseq
      %v1610 = vshrl.u32 %v1609, 7
      %v1611 = vsub.s32 0, %v1610
      %v1612 = vrot.slane %v1540, %v1611
      %v1613 = vlaneseq
      %v1614 = vshrl.u32 %v1613, 7
      %v1615 = vsub.s32 0, %v1614
      %v1616 = vrot.slane %v1555, %v1615
      %v1617 = vlaneseq
      %v1618 = vshrl.u32 %v1617, 7
      %v1619 = vsub.s32 0, %v1618
      %v1620 = vrot.slane %v1562, %v1619
      %v1621 = vlaneseq
      %v1622 = vshrl.u32 %v1621, 7
      %v1623 = vsub.s32 0, %v1622
      %v1624 = vrot.slane %v1563, %v1623
      %v1625 = vlaneseq
      %v1626 = vshrl.u32 %v1625, 7
      %v1627 = vsub.s32 0, %v1626
      %v1628 = vrot.slane %v1564, %v1627
      %v1645 = vsel %vm447, %v1367, %v1568
      %v1646 = vsel %vm447, %v1374, %v1572
      %v1647 = vsel %vm447, %v1375, %v1576
      %v1648 = vsel %vm447, %v1376, %v1580
      %v1649 = vsel %vm447, %v1391, %v1584
      %v1650 = vsel %vm447, %v1398, %v1588
      %v1651 = vsel %vm447, %v1399, %v1592
      %v1652 = vsel %vm447, %v1400, %v1596
      %v1653 = vsel %vm447, %v1415, %v1600
      %v1654 = vsel %vm447, %v1422, %v1604
      %v1655 = vsel %vm447, %v1423, %v1608
      %v1656 = vsel %vm447, %v1424, %v1612
      %v1657 = vsel %vm447, %v1439, %v1616
      %v1658 = vsel %vm447, %v1446, %v1620
      %v1659 = vsel %vm447, %v1447, %v1624
      %v1660 = vsel %vm447, %v1448, %v1628
      %v1661 = vmul.f32 %v1645, 0.25
      %v1662 = vmul.f32 %v1646, 0.25
      %v1663 = vmul.f32 %v1647, 0.25
      %v1664 = vmul.f32 %v1648, 0.25
      %v1665 = vmul.f32 %v1649, 0.25
      %v1666 = vmul.f32 %v1650, 0.25
      %v1667 = vmul.f32 %v1651, 0.25
      %v1668 = vmul.f32 %v1652, 0.25
      %v1669 = vmul.f32 %v1653, 0.25
      %v1670 = vmul.f32 %v1654, 0.25
      %v1671 = vmul.f32 %v1655, 0.25
      %v1672 = vmul.f32 %v1656, 0.25
      %v1673 = vmul.f32 %v1645, 0.75
      %v1674 = vmul.f32 %v1646, 0.75
      %v1675 = vmul.f32 %v1647, 0.75
      %v1676 = vmul.f32 %v1648, 0.75
      %v1677 = vmul.f32 %v1649, 0.75
      %v1678 = vmul.f32 %v1650, 0.75
      %v1679 = vmul.f32 %v1651, 0.75
      %v1680 = vmul.f32 %v1652, 0.75
      %v1681 = vmul.f32 %v1653, 0.75
      %v1682 = vmul.f32 %v1654, 0.75
      %v1683 = vmul.f32 %v1655, 0.75
      %v1684 = vmul.f32 %v1656, 0.75
      %v1685 = vmul.f32 %v1657, 0.75
      %v1686 = vmul.f32 %v1658, 0.75
      %v1687 = vmul.f32 %v1659, 0.75
      %v1688 = vmul.f32 %v1660, 0.75
      %v1689 = vadd.f32 %v1661, %v1673
      %v1690 = vadd.f32 %v1662, %v1674
      %v1691 = vadd.f32 %v1663, %v1675
      %v1692 = vadd.f32 %v1664, %v1676
      %v1693 = vadd.f32 %v1661, %v1677
      %v1694 = vadd.f32 %v1662, %v1678
      %v1695 = vadd.f32 %v1663, %v1679
      %v1696 = vadd.f32 %v1664, %v1680
      %v1697 = vadd.f32 %v1665, %v1681
      %v1698 = vadd.f32 %v1666, %v1682
      %v1699 = vadd.f32 %v1667, %v1683
      %v1700 = vadd.f32 %v1668, %v1684
      %v1701 = vadd.f32 %v1669, %v1685
      %v1702 = vadd.f32 %v1670, %v1686
      %v1703 = vadd.f32 %v1671, %v1687
      %v1704 = vadd.f32 %v1672, %v1688
      %v1705 = vmul.f32 %v1657, 0.25
      %v1706 = vmul.f32 %v1658, 0.25
      %v1707 = vmul.f32 %v1659, 0.25
      %v1708 = vmul.f32 %v1660, 0.25
      %v1709 = vadd.f32 %v1673, %v1665
      %v1710 = vadd.f32 %v1674, %v1666
      %v1711 = vadd.f32 %v1675, %v1667
      %v1712 = vadd.f32 %v1676, %v1668
      %v1713 = vadd.f32 %v1677, %v1669
      %v1714 = vadd.f32 %v1678, %v1670
      %v1715 = vadd.f32 %v1679, %v1671
      %v1716 = vadd.f32 %v1680, %v1672
      %v1717 = vadd.f32 %v1681, %v1705
      %v1718 = vadd.f32 %v1682, %v1706
      %v1719 = vadd.f32 %v1683, %v1707
      %v1720 = vadd.f32 %v1684, %v1708
      %v1721 = vadd.f32 %v1685, %v1705
      %v1722 = vadd.f32 %v1686, %v1706
      %v1723 = vadd.f32 %v1687, %v1707
      %v1724 = vadd.f32 %v1688, %v1708
      %p1725 = scmp.gt.s32.totalorder %s23, 0
      %s1726 = scalar_select %p1725, 1, 0
      %s1727 = scvt.s32.f32 %s1726
      %p1728 = scmp.lt.s32.totalorder %s23, 3
      %s1729 = scalar_select %p1728, 1, 0
      %s1730 = scvt.s32.f32 %s1729
      %v1731 = vmul.f32 %v825, 0.75
      %v1732 = vmul.f32 %v826, 0.75
      %v1733 = vmul.f32 %v827, 0.75
      %v1734 = vmul.f32 %v828, 0.75
      %v1735 = vmul.f32 %v845, 0.75
      %v1736 = vmul.f32 %v846, 0.75
      %v1737 = vmul.f32 %v847, 0.75
      %v1738 = vmul.f32 %v848, 0.75
      %v1739 = vmul.f32 %v829, 0.75
      %v1740 = vmul.f32 %v830, 0.75
      %v1741 = vmul.f32 %v831, 0.75
      %v1742 = vmul.f32 %v832, 0.75
      %v1743 = vmul.f32 %v849, 0.75
      %v1744 = vmul.f32 %v850, 0.75
      %v1745 = vmul.f32 %v851, 0.75
      %v1746 = vmul.f32 %v852, 0.75
      %v1747 = vmul.f32 %v833, 0.75
      %v1748 = vmul.f32 %v834, 0.75
      %v1749 = vmul.f32 %v835, 0.75
      %v1750 = vmul.f32 %v836, 0.75
      %v1751 = vmul.f32 %v853, 0.75
      %v1752 = vmul.f32 %v854, 0.75
      %v1753 = vmul.f32 %v855, 0.75
      %v1754 = vmul.f32 %v856, 0.75
      %v1755 = vmul.f32 %v837, 0.75
      %v1756 = vmul.f32 %v838, 0.75
      %v1757 = vmul.f32 %v839, 0.75
      %v1758 = vmul.f32 %v840, 0.75
      %v1759 = vmul.f32 %v857, 0.75
      %v1760 = vmul.f32 %v858, 0.75
      %v1761 = vmul.f32 %v859, 0.75
      %v1762 = vmul.f32 %v860, 0.75
      %v1763 = vmul.f32 %v1257, 0.25
      %v1764 = vmul.f32 %v1258, 0.25
      %v1765 = vmul.f32 %v1259, 0.25
      %v1766 = vmul.f32 %v1260, 0.25
      %v1767 = vmul.f32 %v1277, 0.25
      %v1768 = vmul.f32 %v1278, 0.25
      %v1769 = vmul.f32 %v1279, 0.25
      %v1770 = vmul.f32 %v1280, 0.25
      %v1771 = vmul.f32 %v1261, 0.25
      %v1772 = vmul.f32 %v1262, 0.25
      %v1773 = vmul.f32 %v1263, 0.25
      %v1774 = vmul.f32 %v1264, 0.25
      %v1775 = vmul.f32 %v1281, 0.25
      %v1776 = vmul.f32 %v1282, 0.25
      %v1777 = vmul.f32 %v1283, 0.25
      %v1778 = vmul.f32 %v1284, 0.25
      %v1779 = vmul.f32 %v1265, 0.25
      %v1780 = vmul.f32 %v1266, 0.25
      %v1781 = vmul.f32 %v1267, 0.25
      %v1782 = vmul.f32 %v1268, 0.25
      %v1783 = vmul.f32 %v1285, 0.25
      %v1784 = vmul.f32 %v1286, 0.25
      %v1785 = vmul.f32 %v1287, 0.25
      %v1786 = vmul.f32 %v1288, 0.25
      %v1787 = vmul.f32 %v1269, 0.25
      %v1788 = vmul.f32 %v1270, 0.25
      %v1789 = vmul.f32 %v1271, 0.25
      %v1790 = vmul.f32 %v1272, 0.25
      %v1791 = vmul.f32 %v1289, 0.25
      %v1792 = vmul.f32 %v1290, 0.25
      %v1793 = vmul.f32 %v1291, 0.25
      %v1794 = vmul.f32 %v1292, 0.25
      %v1795 = vadd.f32 %v1731, %v1763
      %v1796 = vadd.f32 %v1732, %v1764
      %v1797 = vadd.f32 %v1733, %v1765
      %v1798 = vadd.f32 %v1734, %v1766
      %v1799 = vadd.f32 %v1735, %v1767
      %v1800 = vadd.f32 %v1736, %v1768
      %v1801 = vadd.f32 %v1737, %v1769
      %v1802 = vadd.f32 %v1738, %v1770
      %v1803 = vadd.f32 %v1739, %v1771
      %v1804 = vadd.f32 %v1740, %v1772
      %v1805 = vadd.f32 %v1741, %v1773
      %v1806 = vadd.f32 %v1742, %v1774
      %v1807 = vadd.f32 %v1743, %v1775
      %v1808 = vadd.f32 %v1744, %v1776
      %v1809 = vadd.f32 %v1745, %v1777
      %v1810 = vadd.f32 %v1746, %v1778
      %v1811 = vadd.f32 %v1747, %v1779
      %v1812 = vadd.f32 %v1748, %v1780
      %v1813 = vadd.f32 %v1749, %v1781
      %v1814 = vadd.f32 %v1750, %v1782
      %v1815 = vadd.f32 %v1751, %v1783
      %v1816 = vadd.f32 %v1752, %v1784
      %v1817 = vadd.f32 %v1753, %v1785
      %v1818 = vadd.f32 %v1754, %v1786
      %v1819 = vadd.f32 %v1755, %v1787
      %v1820 = vadd.f32 %v1756, %v1788
      %v1821 = vadd.f32 %v1757, %v1789
      %v1822 = vadd.f32 %v1758, %v1790
      %v1823 = vadd.f32 %v1759, %v1791
      %v1824 = vadd.f32 %v1760, %v1792
      %v1825 = vadd.f32 %v1761, %v1793
      %v1826 = vadd.f32 %v1762, %v1794
      %v1827 = vstv %s1727
      %v1828 = vmul.f32 %v1795, %v1827
      %v1829 = vmul.f32 %v1796, %v1827
      %v1830 = vmul.f32 %v1797, %v1827
      %v1831 = vmul.f32 %v1798, %v1827
      %v1832 = vmul.f32 %v1799, %v1827
      %v1833 = vmul.f32 %v1800, %v1827
      %v1834 = vmul.f32 %v1801, %v1827
      %v1835 = vmul.f32 %v1802, %v1827
      %v1836 = vmul.f32 %v1803, %v1827
      %v1837 = vmul.f32 %v1804, %v1827
      %v1838 = vmul.f32 %v1805, %v1827
      %v1839 = vmul.f32 %v1806, %v1827
      %v1840 = vmul.f32 %v1807, %v1827
      %v1841 = vmul.f32 %v1808, %v1827
      %v1842 = vmul.f32 %v1809, %v1827
      %v1843 = vmul.f32 %v1810, %v1827
      %v1844 = vmul.f32 %v1811, %v1827
      %v1845 = vmul.f32 %v1812, %v1827
      %v1846 = vmul.f32 %v1813, %v1827
      %v1847 = vmul.f32 %v1814, %v1827
      %v1848 = vmul.f32 %v1815, %v1827
      %v1849 = vmul.f32 %v1816, %v1827
      %v1850 = vmul.f32 %v1817, %v1827
      %v1851 = vmul.f32 %v1818, %v1827
      %v1852 = vmul.f32 %v1819, %v1827
      %v1853 = vmul.f32 %v1820, %v1827
      %v1854 = vmul.f32 %v1821, %v1827
      %v1855 = vmul.f32 %v1822, %v1827
      %v1856 = vmul.f32 %v1823, %v1827
      %v1857 = vmul.f32 %v1824, %v1827
      %v1858 = vmul.f32 %v1825, %v1827
      %v1859 = vmul.f32 %v1826, %v1827
      %v1860 = vmul.f32 %v825, 0.25
      %v1861 = vmul.f32 %v826, 0.25
      %v1862 = vmul.f32 %v827, 0.25
      %v1863 = vmul.f32 %v828, 0.25
      %v1864 = vmul.f32 %v845, 0.25
      %v1865 = vmul.f32 %v846, 0.25
      %v1866 = vmul.f32 %v847, 0.25
      %v1867 = vmul.f32 %v848, 0.25
      %v1868 = vmul.f32 %v829, 0.25
      %v1869 = vmul.f32 %v830, 0.25
      %v1870 = vmul.f32 %v831, 0.25
      %v1871 = vmul.f32 %v832, 0.25
      %v1872 = vmul.f32 %v849, 0.25
      %v1873 = vmul.f32 %v850, 0.25
      %v1874 = vmul.f32 %v851, 0.25
      %v1875 = vmul.f32 %v852, 0.25
      %v1876 = vmul.f32 %v833, 0.25
      %v1877 = vmul.f32 %v834, 0.25
      %v1878 = vmul.f32 %v835, 0.25
      %v1879 = vmul.f32 %v836, 0.25
      %v1880 = vmul.f32 %v853, 0.25
      %v1881 = vmul.f32 %v854, 0.25
      %v1882 = vmul.f32 %v855, 0.25
      %v1883 = vmul.f32 %v856, 0.25
      %v1884 = vmul.f32 %v837, 0.25
      %v1885 = vmul.f32 %v838, 0.25
      %v1886 = vmul.f32 %v839, 0.25
      %v1887 = vmul.f32 %v840, 0.25
      %v1888 = vmul.f32 %v857, 0.25
      %v1889 = vmul.f32 %v858, 0.25
      %v1890 = vmul.f32 %v859, 0.25
      %v1891 = vmul.f32 %v860, 0.25
      %v1892 = vmul.f32 %v1257, 0.75
      %v1893 = vmul.f32 %v1258, 0.75
      %v1894 = vmul.f32 %v1259, 0.75
      %v1895 = vmul.f32 %v1260, 0.75
      %v1896 = vmul.f32 %v1277, 0.75
      %v1897 = vmul.f32 %v1278, 0.75
      %v1898 = vmul.f32 %v1279, 0.75
      %v1899 = vmul.f32 %v1280, 0.75
      %v1900 = vmul.f32 %v1261, 0.75
      %v1901 = vmul.f32 %v1262, 0.75
      %v1902 = vmul.f32 %v1263, 0.75
      %v1903 = vmul.f32 %v1264, 0.75
      %v1904 = vmul.f32 %v1281, 0.75
      %v1905 = vmul.f32 %v1282, 0.75
      %v1906 = vmul.f32 %v1283, 0.75
      %v1907 = vmul.f32 %v1284, 0.75
      %v1908 = vmul.f32 %v1265, 0.75
      %v1909 = vmul.f32 %v1266, 0.75
      %v1910 = vmul.f32 %v1267, 0.75
      %v1911 = vmul.f32 %v1268, 0.75
      %v1912 = vmul.f32 %v1285, 0.75
      %v1913 = vmul.f32 %v1286, 0.75
      %v1914 = vmul.f32 %v1287, 0.75
      %v1915 = vmul.f32 %v1288, 0.75
      %v1916 = vmul.f32 %v1269, 0.75
      %v1917 = vmul.f32 %v1270, 0.75
      %v1918 = vmul.f32 %v1271, 0.75
      %v1919 = vmul.f32 %v1272, 0.75
      %v1920 = vmul.f32 %v1289, 0.75
      %v1921 = vmul.f32 %v1290, 0.75
      %v1922 = vmul.f32 %v1291, 0.75
      %v1923 = vmul.f32 %v1292, 0.75
      %v1924 = vadd.f32 %v1860, %v1892
      %v1925 = vadd.f32 %v1861, %v1893
      %v1926 = vadd.f32 %v1862, %v1894
      %v1927 = vadd.f32 %v1863, %v1895
      %v1928 = vadd.f32 %v1864, %v1896
      %v1929 = vadd.f32 %v1865, %v1897
      %v1930 = vadd.f32 %v1866, %v1898
      %v1931 = vadd.f32 %v1867, %v1899
      %v1932 = vadd.f32 %v1868, %v1900
      %v1933 = vadd.f32 %v1869, %v1901
      %v1934 = vadd.f32 %v1870, %v1902
      %v1935 = vadd.f32 %v1871, %v1903
      %v1936 = vadd.f32 %v1872, %v1904
      %v1937 = vadd.f32 %v1873, %v1905
      %v1938 = vadd.f32 %v1874, %v1906
      %v1939 = vadd.f32 %v1875, %v1907
      %v1940 = vadd.f32 %v1876, %v1908
      %v1941 = vadd.f32 %v1877, %v1909
      %v1942 = vadd.f32 %v1878, %v1910
      %v1943 = vadd.f32 %v1879, %v1911
      %v1944 = vadd.f32 %v1880, %v1912
      %v1945 = vadd.f32 %v1881, %v1913
      %v1946 = vadd.f32 %v1882, %v1914
      %v1947 = vadd.f32 %v1883, %v1915
      %v1948 = vadd.f32 %v1884, %v1916
      %v1949 = vadd.f32 %v1885, %v1917
      %v1950 = vadd.f32 %v1886, %v1918
      %v1951 = vadd.f32 %v1887, %v1919
      %v1952 = vadd.f32 %v1888, %v1920
      %v1953 = vadd.f32 %v1889, %v1921
      %v1954 = vadd.f32 %v1890, %v1922
      %v1955 = vadd.f32 %v1891, %v1923
      %v1956 = vmul.f32 %v1689, 0.25
      %v1957 = vmul.f32 %v1690, 0.25
      %v1958 = vmul.f32 %v1691, 0.25
      %v1959 = vmul.f32 %v1692, 0.25
      %v1960 = vmul.f32 %v1709, 0.25
      %v1961 = vmul.f32 %v1710, 0.25
      %v1962 = vmul.f32 %v1711, 0.25
      %v1963 = vmul.f32 %v1712, 0.25
      %v1964 = vmul.f32 %v1693, 0.25
      %v1965 = vmul.f32 %v1694, 0.25
      %v1966 = vmul.f32 %v1695, 0.25
      %v1967 = vmul.f32 %v1696, 0.25
      %v1968 = vmul.f32 %v1713, 0.25
      %v1969 = vmul.f32 %v1714, 0.25
      %v1970 = vmul.f32 %v1715, 0.25
      %v1971 = vmul.f32 %v1716, 0.25
      %v1972 = vmul.f32 %v1697, 0.25
      %v1973 = vmul.f32 %v1698, 0.25
      %v1974 = vmul.f32 %v1699, 0.25
      %v1975 = vmul.f32 %v1700, 0.25
      %v1976 = vmul.f32 %v1717, 0.25
      %v1977 = vmul.f32 %v1718, 0.25
      %v1978 = vmul.f32 %v1719, 0.25
      %v1979 = vmul.f32 %v1720, 0.25
      %v1980 = vmul.f32 %v1701, 0.25
      %v1981 = vmul.f32 %v1702, 0.25
      %v1982 = vmul.f32 %v1703, 0.25
      %v1983 = vmul.f32 %v1704, 0.25
      %v1984 = vmul.f32 %v1721, 0.25
      %v1985 = vmul.f32 %v1722, 0.25
      %v1986 = vmul.f32 %v1723, 0.25
      %v1987 = vmul.f32 %v1724, 0.25
      %v1988 = vadd.f32 %v1892, %v1956
      %v1989 = vadd.f32 %v1893, %v1957
      %v1990 = vadd.f32 %v1894, %v1958
      %v1991 = vadd.f32 %v1895, %v1959
      %v1992 = vadd.f32 %v1896, %v1960
      %v1993 = vadd.f32 %v1897, %v1961
      %v1994 = vadd.f32 %v1898, %v1962
      %v1995 = vadd.f32 %v1899, %v1963
      %v1996 = vadd.f32 %v1900, %v1964
      %v1997 = vadd.f32 %v1901, %v1965
      %v1998 = vadd.f32 %v1902, %v1966
      %v1999 = vadd.f32 %v1903, %v1967
      %v2000 = vadd.f32 %v1904, %v1968
      %v2001 = vadd.f32 %v1905, %v1969
      %v2002 = vadd.f32 %v1906, %v1970
      %v2003 = vadd.f32 %v1907, %v1971
      %v2004 = vadd.f32 %v1908, %v1972
      %v2005 = vadd.f32 %v1909, %v1973
      %v2006 = vadd.f32 %v1910, %v1974
      %v2007 = vadd.f32 %v1911, %v1975
      %v2008 = vadd.f32 %v1912, %v1976
      %v2009 = vadd.f32 %v1913, %v1977
      %v2010 = vadd.f32 %v1914, %v1978
      %v2011 = vadd.f32 %v1915, %v1979
      %v2012 = vadd.f32 %v1916, %v1980
      %v2013 = vadd.f32 %v1917, %v1981
      %v2014 = vadd.f32 %v1918, %v1982
      %v2015 = vadd.f32 %v1919, %v1983
      %v2016 = vadd.f32 %v1920, %v1984
      %v2017 = vadd.f32 %v1921, %v1985
      %v2018 = vadd.f32 %v1922, %v1986
      %v2019 = vadd.f32 %v1923, %v1987
      %v2020 = vmul.f32 %v1689, 0.75
      %v2021 = vmul.f32 %v1690, 0.75
      %v2022 = vmul.f32 %v1691, 0.75
      %v2023 = vmul.f32 %v1692, 0.75
      %v2024 = vmul.f32 %v1709, 0.75
      %v2025 = vmul.f32 %v1710, 0.75
      %v2026 = vmul.f32 %v1711, 0.75
      %v2027 = vmul.f32 %v1712, 0.75
      %v2028 = vmul.f32 %v1693, 0.75
      %v2029 = vmul.f32 %v1694, 0.75
      %v2030 = vmul.f32 %v1695, 0.75
      %v2031 = vmul.f32 %v1696, 0.75
      %v2032 = vmul.f32 %v1713, 0.75
      %v2033 = vmul.f32 %v1714, 0.75
      %v2034 = vmul.f32 %v1715, 0.75
      %v2035 = vmul.f32 %v1716, 0.75
      %v2036 = vmul.f32 %v1697, 0.75
      %v2037 = vmul.f32 %v1698, 0.75
      %v2038 = vmul.f32 %v1699, 0.75
      %v2039 = vmul.f32 %v1700, 0.75
      %v2040 = vmul.f32 %v1717, 0.75
      %v2041 = vmul.f32 %v1718, 0.75
      %v2042 = vmul.f32 %v1719, 0.75
      %v2043 = vmul.f32 %v1720, 0.75
      %v2044 = vmul.f32 %v1701, 0.75
      %v2045 = vmul.f32 %v1702, 0.75
      %v2046 = vmul.f32 %v1703, 0.75
      %v2047 = vmul.f32 %v1704, 0.75
      %v2048 = vmul.f32 %v1721, 0.75
      %v2049 = vmul.f32 %v1722, 0.75
      %v2050 = vmul.f32 %v1723, 0.75
      %v2051 = vmul.f32 %v1724, 0.75
      %v2052 = vadd.f32 %v1763, %v2020
      %v2053 = vadd.f32 %v1764, %v2021
      %v2054 = vadd.f32 %v1765, %v2022
      %v2055 = vadd.f32 %v1766, %v2023
      %v2056 = vadd.f32 %v1767, %v2024
      %v2057 = vadd.f32 %v1768, %v2025
      %v2058 = vadd.f32 %v1769, %v2026
      %v2059 = vadd.f32 %v1770, %v2027
      %v2060 = vadd.f32 %v1771, %v2028
      %v2061 = vadd.f32 %v1772, %v2029
      %v2062 = vadd.f32 %v1773, %v2030
      %v2063 = vadd.f32 %v1774, %v2031
      %v2064 = vadd.f32 %v1775, %v2032
      %v2065 = vadd.f32 %v1776, %v2033
      %v2066 = vadd.f32 %v1777, %v2034
      %v2067 = vadd.f32 %v1778, %v2035
      %v2068 = vadd.f32 %v1779, %v2036
      %v2069 = vadd.f32 %v1780, %v2037
      %v2070 = vadd.f32 %v1781, %v2038
      %v2071 = vadd.f32 %v1782, %v2039
      %v2072 = vadd.f32 %v1783, %v2040
      %v2073 = vadd.f32 %v1784, %v2041
      %v2074 = vadd.f32 %v1785, %v2042
      %v2075 = vadd.f32 %v1786, %v2043
      %v2076 = vadd.f32 %v1787, %v2044
      %v2077 = vadd.f32 %v1788, %v2045
      %v2078 = vadd.f32 %v1789, %v2046
      %v2079 = vadd.f32 %v1790, %v2047
      %v2080 = vadd.f32 %v1791, %v2048
      %v2081 = vadd.f32 %v1792, %v2049
      %v2082 = vadd.f32 %v1793, %v2050
      %v2083 = vadd.f32 %v1794, %v2051
      %v2084 = vstv %s1730
      %v2085 = vmul.f32 %v2052, %v2084
      %v2086 = vmul.f32 %v2053, %v2084
      %v2087 = vmul.f32 %v2054, %v2084
      %v2088 = vmul.f32 %v2055, %v2084
      %v2089 = vmul.f32 %v2056, %v2084
      %v2090 = vmul.f32 %v2057, %v2084
      %v2091 = vmul.f32 %v2058, %v2084
      %v2092 = vmul.f32 %v2059, %v2084
      %v2093 = vmul.f32 %v2060, %v2084
      %v2094 = vmul.f32 %v2061, %v2084
      %v2095 = vmul.f32 %v2062, %v2084
      %v2096 = vmul.f32 %v2063, %v2084
      %v2097 = vmul.f32 %v2064, %v2084
      %v2098 = vmul.f32 %v2065, %v2084
      %v2099 = vmul.f32 %v2066, %v2084
      %v2100 = vmul.f32 %v2067, %v2084
      %v2101 = vmul.f32 %v2068, %v2084
      %v2102 = vmul.f32 %v2069, %v2084
      %v2103 = vmul.f32 %v2070, %v2084
      %v2104 = vmul.f32 %v2071, %v2084
      %v2105 = vmul.f32 %v2072, %v2084
      %v2106 = vmul.f32 %v2073, %v2084
      %v2107 = vmul.f32 %v2074, %v2084
      %v2108 = vmul.f32 %v2075, %v2084
      %v2109 = vmul.f32 %v2076, %v2084
      %v2110 = vmul.f32 %v2077, %v2084
      %v2111 = vmul.f32 %v2078, %v2084
      %v2112 = vmul.f32 %v2079, %v2084
      %v2113 = vmul.f32 %v2080, %v2084
      %v2114 = vmul.f32 %v2081, %v2084
      %v2115 = vmul.f32 %v2082, %v2084
      %v2116 = vmul.f32 %v2083, %v2084
      %v2149 = vcombine.low %v1828, %v1829
      %v2150 = vcombine.low %v1830, %v1831
      %v2152 = vunpack.c.l.s4 1983009808
      %v2153 = vunpack.c.0.s8 %v2152
      %v2154 = vlaneseq
      %v2155 = vshrl.u32 %v2154, 7
      %v2156 = vsub.s32 %v2153, %v2155
      %v2157 = vrot.slane %v2149, %v2156
      %v2159 = vunpack.c.l.s4 1983009808
      %v2160 = vunpack.c.0.s8 %v2159
      %v2161 = vlaneseq
      %v2162 = vshrl.u32 %v2161, 7
      %v2163 = vsub.s32 %v2160, %v2162
      %v2164 = vrot.slane %v2150, %v2163
      %v2165 = vcombine.low %v2157, %v2164
      %v2166 = vcombine.low %v1832, %v1833
      %v2167 = vcombine.low %v1834, %v1835
      %v2169 = vunpack.c.l.s4 1983009808
      %v2170 = vunpack.c.0.s8 %v2169
      %v2171 = vlaneseq
      %v2172 = vshrl.u32 %v2171, 7
      %v2173 = vsub.s32 %v2170, %v2172
      %v2174 = vrot.slane %v2166, %v2173
      %v2176 = vunpack.c.l.s4 1983009808
      %v2177 = vunpack.c.0.s8 %v2176
      %v2178 = vlaneseq
      %v2179 = vshrl.u32 %v2178, 7
      %v2180 = vsub.s32 %v2177, %v2179
      %v2181 = vrot.slane %v2167, %v2180
      %v2182 = vcombine.low %v2174, %v2181
      %v2183 = vcombine.low %v1836, %v1837
      %v2184 = vcombine.low %v1838, %v1839
      %v2186 = vunpack.c.l.s4 1983009808
      %v2187 = vunpack.c.0.s8 %v2186
      %v2188 = vlaneseq
      %v2189 = vshrl.u32 %v2188, 7
      %v2190 = vsub.s32 %v2187, %v2189
      %v2191 = vrot.slane %v2183, %v2190
      %v2193 = vunpack.c.l.s4 1983009808
      %v2194 = vunpack.c.0.s8 %v2193
      %v2195 = vlaneseq
      %v2196 = vshrl.u32 %v2195, 7
      %v2197 = vsub.s32 %v2194, %v2196
      %v2198 = vrot.slane %v2184, %v2197
      %v2199 = vcombine.low %v2191, %v2198
      %v2200 = vcombine.low %v1840, %v1841
      %v2201 = vcombine.low %v1842, %v1843
      %v2203 = vunpack.c.l.s4 1983009808
      %v2204 = vunpack.c.0.s8 %v2203
      %v2205 = vlaneseq
      %v2206 = vshrl.u32 %v2205, 7
      %v2207 = vsub.s32 %v2204, %v2206
      %v2208 = vrot.slane %v2200, %v2207
      %v2210 = vunpack.c.l.s4 1983009808
      %v2211 = vunpack.c.0.s8 %v2210
      %v2212 = vlaneseq
      %v2213 = vshrl.u32 %v2212, 7
      %v2214 = vsub.s32 %v2211, %v2213
      %v2215 = vrot.slane %v2201, %v2214
      %v2216 = vcombine.low %v2208, %v2215
      %v2217 = vcombine.low %v1844, %v1845
      %v2218 = vcombine.low %v1846, %v1847
      %v2220 = vunpack.c.l.s4 1983009808
      %v2221 = vunpack.c.0.s8 %v2220
      %v2222 = vlaneseq
      %v2223 = vshrl.u32 %v2222, 7
      %v2224 = vsub.s32 %v2221, %v2223
      %v2225 = vrot.slane %v2217, %v2224
      %v2227 = vunpack.c.l.s4 1983009808
      %v2228 = vunpack.c.0.s8 %v2227
      %v2229 = vlaneseq
      %v2230 = vshrl.u32 %v2229, 7
      %v2231 = vsub.s32 %v2228, %v2230
      %v2232 = vrot.slane %v2218, %v2231
      %v2233 = vcombine.low %v2225, %v2232
      %v2234 = vcombine.low %v1848, %v1849
      %v2235 = vcombine.low %v1850, %v1851
      %v2237 = vunpack.c.l.s4 1983009808
      %v2238 = vunpack.c.0.s8 %v2237
      %v2239 = vlaneseq
      %v2240 = vshrl.u32 %v2239, 7
      %v2241 = vsub.s32 %v2238, %v2240
      %v2242 = vrot.slane %v2234, %v2241
      %v2244 = vunpack.c.l.s4 1983009808
      %v2245 = vunpack.c.0.s8 %v2244
      %v2246 = vlaneseq
      %v2247 = vshrl.u32 %v2246, 7
      %v2248 = vsub.s32 %v2245, %v2247
      %v2249 = vrot.slane %v2235, %v2248
      %v2250 = vcombine.low %v2242, %v2249
      %v2251 = vcombine.low %v1852, %v1853
      %v2252 = vcombine.low %v1854, %v1855
      %v2254 = vunpack.c.l.s4 1983009808
      %v2255 = vunpack.c.0.s8 %v2254
      %v2256 = vlaneseq
      %v2257 = vshrl.u32 %v2256, 7
      %v2258 = vsub.s32 %v2255, %v2257
      %v2259 = vrot.slane %v2251, %v2258
      %v2261 = vunpack.c.l.s4 1983009808
      %v2262 = vunpack.c.0.s8 %v2261
      %v2263 = vlaneseq
      %v2264 = vshrl.u32 %v2263, 7
      %v2265 = vsub.s32 %v2262, %v2264
      %v2266 = vrot.slane %v2252, %v2265
      %v2267 = vcombine.low %v2259, %v2266
      %v2268 = vcombine.low %v1856, %v1857
      %v2269 = vcombine.low %v1858, %v1859
      %v2271 = vunpack.c.l.s4 1983009808
      %v2272 = vunpack.c.0.s8 %v2271
      %v2273 = vlaneseq
      %v2274 = vshrl.u32 %v2273, 7
      %v2275 = vsub.s32 %v2272, %v2274
      %v2276 = vrot.slane %v2268, %v2275
      %v2278 = vunpack.c.l.s4 1983009808
      %v2279 = vunpack.c.0.s8 %v2278
      %v2280 = vlaneseq
      %v2281 = vshrl.u32 %v2280, 7
      %v2282 = vsub.s32 %v2279, %v2281
      %v2283 = vrot.slane %v2269, %v2282
      %v2284 = vcombine.low %v2276, %v2283
      %v2293 = vpack.c.bf16 %v2165, %v2165
      %v2294 = vpack.c.bf16 %v2182, %v2182
      %v2295 = vpack.c.bf16 %v2199, %v2199
      %v2296 = vpack.c.bf16 %v2216, %v2216
      %v2297 = vpack.c.bf16 %v2233, %v2233
      %v2298 = vpack.c.bf16 %v2250, %v2250
      %v2299 = vpack.c.bf16 %v2267, %v2267
      %v2300 = vpack.c.bf16 %v2284, %v2284
      %v2302 = vshrl.u32 0, 16
      %v2304 = vrot.slane %v2302, 7
      %v2305 = vshll.u32 0, 16
      %v2307 = vor.u32 %v2304, %v2305
      %v2309 = vshrl.u32 %v2293, 16
      %v2311 = vrot.slane %v2309, 7
      %v2312 = vshll.u32 %v2293, 16
      %v2314 = vor.u32 %v2311, %v2312
      %v2316 = vshrl.u32 %v2294, 16
      %v2318 = vrot.slane %v2316, 7
      %v2319 = vshll.u32 %v2294, 16
      %v2321 = vor.u32 %v2318, %v2319
      %v2323 = vshrl.u32 %v2295, 16
      %v2325 = vrot.slane %v2323, 7
      %v2326 = vshll.u32 %v2295, 16
      %v2328 = vor.u32 %v2325, %v2326
      %v2330 = vshrl.u32 %v2296, 16
      %v2332 = vrot.slane %v2330, 7
      %v2333 = vshll.u32 %v2296, 16
      %v2335 = vor.u32 %v2332, %v2333
      %v2337 = vshrl.u32 %v2297, 16
      %v2339 = vrot.slane %v2337, 7
      %v2340 = vshll.u32 %v2297, 16
      %v2342 = vor.u32 %v2339, %v2340
      %v2344 = vshrl.u32 %v2298, 16
      %v2346 = vrot.slane %v2344, 7
      %v2347 = vshll.u32 %v2298, 16
      %v2349 = vor.u32 %v2346, %v2347
      %v2351 = vshrl.u32 %v2299, 16
      %v2353 = vrot.slane %v2351, 7
      %v2354 = vshll.u32 %v2299, 16
      %v2356 = vor.u32 %v2353, %v2354
      %v2358 = vshrl.u32 %v2300, 16
      %v2360 = vrot.slane %v2358, 7
      %v2361 = vshll.u32 %v2300, 16
      %v2363 = vor.u32 %v2360, %v2361
      %vm2373 = vcmask 1040384
      %vm2374 = vsmask.f32 256
      %vm2375 = vmand %vm2373, %vm2374
      %v2376 = vsel %vm2375, 0, %v2307
      %v2377 = vsel %vm2375, 0, %v2314
      %v2378 = vsel %vm2375, 0, %v2321
      %v2379 = vsel %vm2375, 0, %v2328
      %v2380 = vsel %vm2375, 0, %v2335
      %v2381 = vsel %vm2375, 0, %v2342
      %v2382 = vsel %vm2375, 0, %v2349
      %v2383 = vsel %vm2375, 0, %v2356
      %v2384 = vsel %vm2375, 0, %v2363
      %vm2385 = vcmask 1044480
      %vm2386 = vsmask.f32 4352
      %vm2387 = vmand %vm2385, %vm2386
      %v2388 = vsel %vm2387, %v2376, 0
      %v2389 = vsel %vm2387, %v2377, 0
      %v2390 = vsel %vm2387, %v2378, 0
      %v2391 = vsel %vm2387, %v2379, 0
      %v2392 = vsel %vm2387, %v2380, 0
      %v2393 = vsel %vm2387, %v2381, 0
      %v2394 = vsel %vm2387, %v2382, 0
      %v2395 = vsel %vm2387, %v2383, 0
      %v2396 = vsel %vm2387, %v2384, 0
      %v2398 = vshrl.u32 %v2388, 16
      %v2400 = vshll.u32 %v2388, 16
      %v2402 = vrot.slane %v2400, 1
      %v2403 = vor.u32 %v2398, %v2402
      %v2405 = vshrl.u32 %v2389, 16
      %v2407 = vshll.u32 %v2389, 16
      %v2409 = vrot.slane %v2407, 1
      %v2410 = vor.u32 %v2405, %v2409
      %v2412 = vshrl.u32 %v2390, 16
      %v2414 = vshll.u32 %v2390, 16
      %v2416 = vrot.slane %v2414, 1
      %v2417 = vor.u32 %v2412, %v2416
      %v2419 = vshrl.u32 %v2391, 16
      %v2421 = vshll.u32 %v2391, 16
      %v2423 = vrot.slane %v2421, 1
      %v2424 = vor.u32 %v2419, %v2423
      %v2426 = vshrl.u32 %v2392, 16
      %v2428 = vshll.u32 %v2392, 16
      %v2430 = vrot.slane %v2428, 1
      %v2431 = vor.u32 %v2426, %v2430
      %v2433 = vshrl.u32 %v2393, 16
      %v2435 = vshll.u32 %v2393, 16
      %v2437 = vrot.slane %v2435, 1
      %v2438 = vor.u32 %v2433, %v2437
      %v2440 = vshrl.u32 %v2394, 16
      %v2442 = vshll.u32 %v2394, 16
      %v2444 = vrot.slane %v2442, 1
      %v2445 = vor.u32 %v2440, %v2444
      %v2447 = vshrl.u32 %v2395, 16
      %v2449 = vshll.u32 %v2395, 16
      %v2451 = vrot.slane %v2449, 1
      %v2452 = vor.u32 %v2447, %v2451
      %2453 = vrot.lane.b32.xlu0 %v2403, 32
      %v2454 = vpop.permute.xlu0 %2453
      %2455 = vrot.lane.b32.xlu0 %v2410, 32
      %v2456 = vpop.permute.xlu0 %2455
      %2457 = vrot.lane.b32.xlu0 %v2417, 32
      %v2458 = vpop.permute.xlu0 %2457
      %2459 = vrot.lane.b32.xlu0 %v2424, 32
      %v2460 = vpop.permute.xlu0 %2459
      %2461 = vrot.lane.b32.xlu0 %v2431, 32
      %v2462 = vpop.permute.xlu0 %2461
      %2463 = vrot.lane.b32.xlu0 %v2438, 32
      %v2464 = vpop.permute.xlu0 %2463
      %2465 = vrot.lane.b32.xlu0 %v2445, 32
      %v2466 = vpop.permute.xlu0 %2465
      %2467 = vrot.lane.b32.xlu0 %v2452, 32
      %v2468 = vpop.permute.xlu0 %2467
      %v2477 = vrot.slane %v2388, 1
      %v2478 = vrot.slane %v2389, 1
      %v2479 = vrot.slane %v2390, 1
      %v2480 = vrot.slane %v2391, 1
      %v2481 = vrot.slane %v2392, 1
      %v2482 = vrot.slane %v2393, 1
      %v2483 = vrot.slane %v2394, 1
      %v2484 = vrot.slane %v2395, 1
      %2485 = vrot.lane.b32.xlu0 %v2477, 64
      %v2486 = vpop.permute.xlu0 %2485
      %2487 = vrot.lane.b32.xlu0 %v2478, 64
      %v2488 = vpop.permute.xlu0 %2487
      %2489 = vrot.lane.b32.xlu0 %v2479, 64
      %v2490 = vpop.permute.xlu0 %2489
      %2491 = vrot.lane.b32.xlu0 %v2480, 64
      %v2492 = vpop.permute.xlu0 %2491
      %2493 = vrot.lane.b32.xlu0 %v2481, 64
      %v2494 = vpop.permute.xlu0 %2493
      %2495 = vrot.lane.b32.xlu0 %v2482, 64
      %v2496 = vpop.permute.xlu0 %2495
      %2497 = vrot.lane.b32.xlu0 %v2483, 64
      %v2498 = vpop.permute.xlu0 %2497
      %2499 = vrot.lane.b32.xlu0 %v2484, 64
      %v2500 = vpop.permute.xlu0 %2499
      %2502 = vrot.lane.b32.xlu0 %v2389, 96
      %v2503 = vpop.permute.xlu0 %2502
      %2504 = vrot.lane.b32.xlu0 %v2390, 96
      %v2505 = vpop.permute.xlu0 %2504
      %2506 = vrot.lane.b32.xlu0 %v2391, 96
      %v2507 = vpop.permute.xlu0 %2506
      %2508 = vrot.lane.b32.xlu0 %v2392, 96
      %v2509 = vpop.permute.xlu0 %2508
      %2510 = vrot.lane.b32.xlu0 %v2393, 96
      %v2511 = vpop.permute.xlu0 %2510
      %2512 = vrot.lane.b32.xlu0 %v2394, 96
      %v2513 = vpop.permute.xlu0 %2512
      %2514 = vrot.lane.b32.xlu0 %v2395, 96
      %v2515 = vpop.permute.xlu0 %2514
      %2516 = vrot.lane.b32.xlu0 %v2396, 96
      %v2517 = vpop.permute.xlu0 %2516
      %v2519 = vshrl.u32 %v2396, 16
      %v2521 = vshll.u32 %v2396, 16
      %v2523 = vrot.slane %v2521, 1
      %v2524 = vor.u32 %v2519, %v2523
      %v2525 = vrot.slane %v2396, 1
      %2526 = vrot.lane.b32.xlu0 %v2478, 32
      %v2527 = vpop.permute.xlu0 %2526
      %2528 = vrot.lane.b32.xlu0 %v2479, 32
      %v2529 = vpop.permute.xlu0 %2528
      %2530 = vrot.lane.b32.xlu0 %v2480, 32
      %v2531 = vpop.permute.xlu0 %2530
      %2532 = vrot.lane.b32.xlu0 %v2481, 32
      %v2533 = vpop.permute.xlu0 %2532
      %2534 = vrot.lane.b32.xlu0 %v2482, 32
      %v2535 = vpop.permute.xlu0 %2534
      %2536 = vrot.lane.b32.xlu0 %v2483, 32
      %v2537 = vpop.permute.xlu0 %2536
      %2538 = vrot.lane.b32.xlu0 %v2484, 32
      %v2539 = vpop.permute.xlu0 %2538
      %2540 = vrot.lane.b32.xlu0 %v2525, 32
      %v2541 = vpop.permute.xlu0 %2540
      %2542 = vrot.lane.b32.xlu0 %v2390, 64
      %v2543 = vpop.permute.xlu0 %2542
      %2544 = vrot.lane.b32.xlu0 %v2391, 64
      %v2545 = vpop.permute.xlu0 %2544
      %2546 = vrot.lane.b32.xlu0 %v2392, 64
      %v2547 = vpop.permute.xlu0 %2546
      %2548 = vrot.lane.b32.xlu0 %v2393, 64
      %v2549 = vpop.permute.xlu0 %2548
      %2550 = vrot.lane.b32.xlu0 %v2394, 64
      %v2551 = vpop.permute.xlu0 %2550
      %2552 = vrot.lane.b32.xlu0 %v2395, 64
      %v2553 = vpop.permute.xlu0 %2552
      %2554 = vrot.lane.b32.xlu0 %v2396, 64
      %v2555 = vpop.permute.xlu0 %2554
      %2556 = vrot.lane.b32.xlu0 %v2388, 64
      %v2557 = vpop.permute.xlu0 %2556
      %2558 = vrot.lane.b32.xlu0 %v2417, 96
      %v2559 = vpop.permute.xlu0 %2558
      %2560 = vrot.lane.b32.xlu0 %v2424, 96
      %v2561 = vpop.permute.xlu0 %2560
      %2562 = vrot.lane.b32.xlu0 %v2431, 96
      %v2563 = vpop.permute.xlu0 %2562
      %2564 = vrot.lane.b32.xlu0 %v2438, 96
      %v2565 = vpop.permute.xlu0 %2564
      %2566 = vrot.lane.b32.xlu0 %v2445, 96
      %v2567 = vpop.permute.xlu0 %2566
      %2568 = vrot.lane.b32.xlu0 %v2452, 96
      %v2569 = vpop.permute.xlu0 %2568
      %2570 = vrot.lane.b32.xlu0 %v2524, 96
      %v2571 = vpop.permute.xlu0 %2570
      %2572 = vrot.lane.b32.xlu0 %v2403, 96
      %v2573 = vpop.permute.xlu0 %2572
      %vm2574 = vcmask 261120
      %v2576 = vsel %vm2574, %v2388, %v2454
      %v2578 = vsel %vm2574, %v2389, %v2456
      %v2580 = vsel %vm2574, %v2390, %v2458
      %v2582 = vsel %vm2574, %v2391, %v2460
      %v2584 = vsel %vm2574, %v2392, %v2462
      %v2586 = vsel %vm2574, %v2393, %v2464
      %v2588 = vsel %vm2574, %v2394, %v2466
      %v2590 = vsel %vm2574, %v2395, %v2468
      %vm2591 = vcmask 523264
      %v2593 = vsel %vm2591, %v2576, %v2486
      %v2595 = vsel %vm2591, %v2578, %v2488
      %v2597 = vsel %vm2591, %v2580, %v2490
      %v2599 = vsel %vm2591, %v2582, %v2492
      %v2601 = vsel %vm2591, %v2584, %v2494
      %v2603 = vsel %vm2591, %v2586, %v2496
      %v2605 = vsel %vm2591, %v2588, %v2498
      %v2607 = vsel %vm2591, %v2590, %v2500
      %vm2608 = vcmask 785408
      %v2610 = vsel %vm2608, %v2593, %v2503
      %v2612 = vsel %vm2608, %v2595, %v2505
      %v2614 = vsel %vm2608, %v2597, %v2507
      %v2616 = vsel %vm2608, %v2599, %v2509
      %v2618 = vsel %vm2608, %v2601, %v2511
      %v2620 = vsel %vm2608, %v2603, %v2513
      %v2622 = vsel %vm2608, %v2605, %v2515
      %v2624 = vsel %vm2608, %v2607, %v2517
      %v2627 = vsel %vm2574, %v2410, %v2527
      %v2630 = vsel %vm2574, %v2417, %v2529
      %v2633 = vsel %vm2574, %v2424, %v2531
      %v2636 = vsel %vm2574, %v2431, %v2533
      %v2639 = vsel %vm2574, %v2438, %v2535
      %v2642 = vsel %vm2574, %v2445, %v2537
      %v2645 = vsel %vm2574, %v2452, %v2539
      %v2648 = vsel %vm2574, %v2524, %v2541
      %v2650 = vsel %vm2591, %v2627, %v2543
      %v2652 = vsel %vm2591, %v2630, %v2545
      %v2654 = vsel %vm2591, %v2633, %v2547
      %v2656 = vsel %vm2591, %v2636, %v2549
      %v2658 = vsel %vm2591, %v2639, %v2551
      %v2660 = vsel %vm2591, %v2642, %v2553
      %v2662 = vsel %vm2591, %v2645, %v2555
      %v2664 = vsel %vm2591, %v2648, %v2557
      %v2666 = vsel %vm2608, %v2650, %v2559
      %v2668 = vsel %vm2608, %v2652, %v2561
      %v2670 = vsel %vm2608, %v2654, %v2563
      %v2672 = vsel %vm2608, %v2656, %v2565
      %v2674 = vsel %vm2608, %v2658, %v2567
      %v2676 = vsel %vm2608, %v2660, %v2569
      %v2678 = vsel %vm2608, %v2662, %v2571
      %v2680 = vsel %vm2608, %v2664, %v2573
      %v2697 = vunpack.c.l.b16 %v2610
      %v2698 = vunpack.c.l.b16 %v2666
      %v2699 = vunpack.c.l.b16 %v2479
      %v2700 = vunpack.c.l.b16 %v2612
      %v2701 = vunpack.c.l.b16 %v2668
      %v2702 = vunpack.c.l.b16 %v2480
      %v2703 = vunpack.c.l.b16 %v2614
      %v2704 = vunpack.c.l.b16 %v2670
      %v2705 = vunpack.c.l.b16 %v2481
      %v2706 = vunpack.c.l.b16 %v2616
      %v2707 = vunpack.c.l.b16 %v2672
      %v2708 = vunpack.c.l.b16 %v2482
      %v2709 = vunpack.c.l.b16 %v2618
      %v2710 = vunpack.c.l.b16 %v2674
      %v2711 = vunpack.c.l.b16 %v2483
      %v2712 = vunpack.c.l.b16 %v2620
      %v2713 = vunpack.c.l.b16 %v2676
      %v2714 = vunpack.c.l.b16 %v2484
      %v2715 = vunpack.c.l.b16 %v2622
      %v2716 = vunpack.c.l.b16 %v2678
      %v2717 = vunpack.c.l.b16 %v2525
      %v2718 = vunpack.c.l.b16 %v2624
      %v2719 = vunpack.c.l.b16 %v2680
      %v2720 = vunpack.c.l.b16 %v2477
      %v2753 = vcombine.low %v1924, %v1925
      %v2754 = vcombine.low %v1926, %v1927
      %v2756 = vunpack.c.l.s4 1983009808
      %v2757 = vunpack.c.0.s8 %v2756
      %v2758 = vlaneseq
      %v2759 = vshrl.u32 %v2758, 7
      %v2760 = vsub.s32 %v2757, %v2759
      %v2761 = vrot.slane %v2753, %v2760
      %v2763 = vunpack.c.l.s4 1983009808
      %v2764 = vunpack.c.0.s8 %v2763
      %v2765 = vlaneseq
      %v2766 = vshrl.u32 %v2765, 7
      %v2767 = vsub.s32 %v2764, %v2766
      %v2768 = vrot.slane %v2754, %v2767
      %v2769 = vcombine.low %v2761, %v2768
      %v2770 = vcombine.low %v1928, %v1929
      %v2771 = vcombine.low %v1930, %v1931
      %v2773 = vunpack.c.l.s4 1983009808
      %v2774 = vunpack.c.0.s8 %v2773
      %v2775 = vlaneseq
      %v2776 = vshrl.u32 %v2775, 7
      %v2777 = vsub.s32 %v2774, %v2776
      %v2778 = vrot.slane %v2770, %v2777
      %v2780 = vunpack.c.l.s4 1983009808
      %v2781 = vunpack.c.0.s8 %v2780
      %v2782 = vlaneseq
      %v2783 = vshrl.u32 %v2782, 7
      %v2784 = vsub.s32 %v2781, %v2783
      %v2785 = vrot.slane %v2771, %v2784
      %v2786 = vcombine.low %v2778, %v2785
      %v2787 = vcombine.low %v1932, %v1933
      %v2788 = vcombine.low %v1934, %v1935
      %v2790 = vunpack.c.l.s4 1983009808
      %v2791 = vunpack.c.0.s8 %v2790
      %v2792 = vlaneseq
      %v2793 = vshrl.u32 %v2792, 7
      %v2794 = vsub.s32 %v2791, %v2793
      %v2795 = vrot.slane %v2787, %v2794
      %v2797 = vunpack.c.l.s4 1983009808
      %v2798 = vunpack.c.0.s8 %v2797
      %v2799 = vlaneseq
      %v2800 = vshrl.u32 %v2799, 7
      %v2801 = vsub.s32 %v2798, %v2800
      %v2802 = vrot.slane %v2788, %v2801
      %v2803 = vcombine.low %v2795, %v2802
      %v2804 = vcombine.low %v1936, %v1937
      %v2805 = vcombine.low %v1938, %v1939
      %v2807 = vunpack.c.l.s4 1983009808
      %v2808 = vunpack.c.0.s8 %v2807
      %v2809 = vlaneseq
      %v2810 = vshrl.u32 %v2809, 7
      %v2811 = vsub.s32 %v2808, %v2810
      %v2812 = vrot.slane %v2804, %v2811
      %v2814 = vunpack.c.l.s4 1983009808
      %v2815 = vunpack.c.0.s8 %v2814
      %v2816 = vlaneseq
      %v2817 = vshrl.u32 %v2816, 7
      %v2818 = vsub.s32 %v2815, %v2817
      %v2819 = vrot.slane %v2805, %v2818
      %v2820 = vcombine.low %v2812, %v2819
      %v2821 = vcombine.low %v1940, %v1941
      %v2822 = vcombine.low %v1942, %v1943
      %v2824 = vunpack.c.l.s4 1983009808
      %v2825 = vunpack.c.0.s8 %v2824
      %v2826 = vlaneseq
      %v2827 = vshrl.u32 %v2826, 7
      %v2828 = vsub.s32 %v2825, %v2827
      %v2829 = vrot.slane %v2821, %v2828
      %v2831 = vunpack.c.l.s4 1983009808
      %v2832 = vunpack.c.0.s8 %v2831
      %v2833 = vlaneseq
      %v2834 = vshrl.u32 %v2833, 7
      %v2835 = vsub.s32 %v2832, %v2834
      %v2836 = vrot.slane %v2822, %v2835
      %v2837 = vcombine.low %v2829, %v2836
      %v2838 = vcombine.low %v1944, %v1945
      %v2839 = vcombine.low %v1946, %v1947
      %v2841 = vunpack.c.l.s4 1983009808
      %v2842 = vunpack.c.0.s8 %v2841
      %v2843 = vlaneseq
      %v2844 = vshrl.u32 %v2843, 7
      %v2845 = vsub.s32 %v2842, %v2844
      %v2846 = vrot.slane %v2838, %v2845
      %v2848 = vunpack.c.l.s4 1983009808
      %v2849 = vunpack.c.0.s8 %v2848
      %v2850 = vlaneseq
      %v2851 = vshrl.u32 %v2850, 7
      %v2852 = vsub.s32 %v2849, %v2851
      %v2853 = vrot.slane %v2839, %v2852
      %v2854 = vcombine.low %v2846, %v2853
      %v2855 = vcombine.low %v1948, %v1949
      %v2856 = vcombine.low %v1950, %v1951
      %v2858 = vunpack.c.l.s4 1983009808
      %v2859 = vunpack.c.0.s8 %v2858
      %v2860 = vlaneseq
      %v2861 = vshrl.u32 %v2860, 7
      %v2862 = vsub.s32 %v2859, %v2861
      %v2863 = vrot.slane %v2855, %v2862
      %v2865 = vunpack.c.l.s4 1983009808
      %v2866 = vunpack.c.0.s8 %v2865
      %v2867 = vlaneseq
      %v2868 = vshrl.u32 %v2867, 7
      %v2869 = vsub.s32 %v2866, %v2868
      %v2870 = vrot.slane %v2856, %v2869
      %v2871 = vcombine.low %v2863, %v2870
      %v2872 = vcombine.low %v1952, %v1953
      %v2873 = vcombine.low %v1954, %v1955
      %v2875 = vunpack.c.l.s4 1983009808
      %v2876 = vunpack.c.0.s8 %v2875
      %v2877 = vlaneseq
      %v2878 = vshrl.u32 %v2877, 7
      %v2879 = vsub.s32 %v2876, %v2878
      %v2880 = vrot.slane %v2872, %v2879
      %v2882 = vunpack.c.l.s4 1983009808
      %v2883 = vunpack.c.0.s8 %v2882
      %v2884 = vlaneseq
      %v2885 = vshrl.u32 %v2884, 7
      %v2886 = vsub.s32 %v2883, %v2885
      %v2887 = vrot.slane %v2873, %v2886
      %v2888 = vcombine.low %v2880, %v2887
      %v2897 = vpack.c.bf16 %v2769, %v2769
      %v2898 = vpack.c.bf16 %v2786, %v2786
      %v2899 = vpack.c.bf16 %v2803, %v2803
      %v2900 = vpack.c.bf16 %v2820, %v2820
      %v2901 = vpack.c.bf16 %v2837, %v2837
      %v2902 = vpack.c.bf16 %v2854, %v2854
      %v2903 = vpack.c.bf16 %v2871, %v2871
      %v2904 = vpack.c.bf16 %v2888, %v2888
      %v2906 = vshrl.u32 %v2897, 16
      %v2908 = vrot.slane %v2906, 7
      %v2909 = vshll.u32 %v2897, 16
      %v2911 = vor.u32 %v2908, %v2909
      %v2913 = vshrl.u32 %v2898, 16
      %v2915 = vrot.slane %v2913, 7
      %v2916 = vshll.u32 %v2898, 16
      %v2918 = vor.u32 %v2915, %v2916
      %v2920 = vshrl.u32 %v2899, 16
      %v2922 = vrot.slane %v2920, 7
      %v2923 = vshll.u32 %v2899, 16
      %v2925 = vor.u32 %v2922, %v2923
      %v2927 = vshrl.u32 %v2900, 16
      %v2929 = vrot.slane %v2927, 7
      %v2930 = vshll.u32 %v2900, 16
      %v2932 = vor.u32 %v2929, %v2930
      %v2934 = vshrl.u32 %v2901, 16
      %v2936 = vrot.slane %v2934, 7
      %v2937 = vshll.u32 %v2901, 16
      %v2939 = vor.u32 %v2936, %v2937
      %v2941 = vshrl.u32 %v2902, 16
      %v2943 = vrot.slane %v2941, 7
      %v2944 = vshll.u32 %v2902, 16
      %v2946 = vor.u32 %v2943, %v2944
      %v2948 = vshrl.u32 %v2903, 16
      %v2950 = vrot.slane %v2948, 7
      %v2951 = vshll.u32 %v2903, 16
      %v2953 = vor.u32 %v2950, %v2951
      %v2955 = vshrl.u32 %v2904, 16
      %v2957 = vrot.slane %v2955, 7
      %v2958 = vshll.u32 %v2904, 16
      %v2960 = vor.u32 %v2957, %v2958
      %v2969 = vsel %vm2375, 0, %v2911
      %v2970 = vsel %vm2375, 0, %v2918
      %v2971 = vsel %vm2375, 0, %v2925
      %v2972 = vsel %vm2375, 0, %v2932
      %v2973 = vsel %vm2375, 0, %v2939
      %v2974 = vsel %vm2375, 0, %v2946
      %v2975 = vsel %vm2375, 0, %v2953
      %v2976 = vsel %vm2375, 0, %v2960
      %v2977 = vsel %vm2387, %v2969, 0
      %v2978 = vsel %vm2387, %v2970, 0
      %v2979 = vsel %vm2387, %v2971, 0
      %v2980 = vsel %vm2387, %v2972, 0
      %v2981 = vsel %vm2387, %v2973, 0
      %v2982 = vsel %vm2387, %v2974, 0
      %v2983 = vsel %vm2387, %v2975, 0
      %v2984 = vsel %vm2387, %v2976, 0
      %v2986 = vshrl.u32 %v2977, 16
      %v2988 = vshll.u32 %v2977, 16
      %v2990 = vrot.slane %v2988, 1
      %v2991 = vor.u32 %v2986, %v2990
      %v2993 = vshrl.u32 %v2978, 16
      %v2995 = vshll.u32 %v2978, 16
      %v2997 = vrot.slane %v2995, 1
      %v2998 = vor.u32 %v2993, %v2997
      %v3000 = vshrl.u32 %v2979, 16
      %v3002 = vshll.u32 %v2979, 16
      %v3004 = vrot.slane %v3002, 1
      %v3005 = vor.u32 %v3000, %v3004
      %v3007 = vshrl.u32 %v2980, 16
      %v3009 = vshll.u32 %v2980, 16
      %v3011 = vrot.slane %v3009, 1
      %v3012 = vor.u32 %v3007, %v3011
      %v3014 = vshrl.u32 %v2981, 16
      %v3016 = vshll.u32 %v2981, 16
      %v3018 = vrot.slane %v3016, 1
      %v3019 = vor.u32 %v3014, %v3018
      %v3021 = vshrl.u32 %v2982, 16
      %v3023 = vshll.u32 %v2982, 16
      %v3025 = vrot.slane %v3023, 1
      %v3026 = vor.u32 %v3021, %v3025
      %v3028 = vshrl.u32 %v2983, 16
      %v3030 = vshll.u32 %v2983, 16
      %v3032 = vrot.slane %v3030, 1
      %v3033 = vor.u32 %v3028, %v3032
      %3034 = vrot.lane.b32.xlu0 %v2991, 32
      %v3035 = vpop.permute.xlu0 %3034
      %3036 = vrot.lane.b32.xlu0 %v2998, 32
      %v3037 = vpop.permute.xlu0 %3036
      %3038 = vrot.lane.b32.xlu0 %v3005, 32
      %v3039 = vpop.permute.xlu0 %3038
      %3040 = vrot.lane.b32.xlu0 %v3012, 32
      %v3041 = vpop.permute.xlu0 %3040
      %3042 = vrot.lane.b32.xlu0 %v3019, 32
      %v3043 = vpop.permute.xlu0 %3042
      %3044 = vrot.lane.b32.xlu0 %v3026, 32
      %v3045 = vpop.permute.xlu0 %3044
      %3046 = vrot.lane.b32.xlu0 %v3033, 32
      %v3047 = vpop.permute.xlu0 %3046
      %v3055 = vrot.slane %v2977, 1
      %v3056 = vrot.slane %v2978, 1
      %v3057 = vrot.slane %v2979, 1
      %v3058 = vrot.slane %v2980, 1
      %v3059 = vrot.slane %v2981, 1
      %v3060 = vrot.slane %v2982, 1
      %v3061 = vrot.slane %v2983, 1
      %3062 = vrot.lane.b32.xlu0 %v3055, 64
      %v3063 = vpop.permute.xlu0 %3062
      %3064 = vrot.lane.b32.xlu0 %v3056, 64
      %v3065 = vpop.permute.xlu0 %3064
      %3066 = vrot.lane.b32.xlu0 %v3057, 64
      %v3067 = vpop.permute.xlu0 %3066
      %3068 = vrot.lane.b32.xlu0 %v3058, 64
      %v3069 = vpop.permute.xlu0 %3068
      %3070 = vrot.lane.b32.xlu0 %v3059, 64
      %v3071 = vpop.permute.xlu0 %3070
      %3072 = vrot.lane.b32.xlu0 %v3060, 64
      %v3073 = vpop.permute.xlu0 %3072
      %3074 = vrot.lane.b32.xlu0 %v3061, 64
      %v3075 = vpop.permute.xlu0 %3074
      %3077 = vrot.lane.b32.xlu0 %v2977, 96
      %v3078 = vpop.permute.xlu0 %3077
      %3079 = vrot.lane.b32.xlu0 %v2978, 96
      %v3080 = vpop.permute.xlu0 %3079
      %3081 = vrot.lane.b32.xlu0 %v2979, 96
      %v3082 = vpop.permute.xlu0 %3081
      %3083 = vrot.lane.b32.xlu0 %v2980, 96
      %v3084 = vpop.permute.xlu0 %3083
      %3085 = vrot.lane.b32.xlu0 %v2981, 96
      %v3086 = vpop.permute.xlu0 %3085
      %3087 = vrot.lane.b32.xlu0 %v2982, 96
      %v3088 = vpop.permute.xlu0 %3087
      %3089 = vrot.lane.b32.xlu0 %v2983, 96
      %v3090 = vpop.permute.xlu0 %3089
      %3091 = vrot.lane.b32.xlu0 %v2984, 96
      %v3092 = vpop.permute.xlu0 %3091
      %v3094 = vshrl.u32 %v2984, 16
      %v3096 = vshll.u32 %v2984, 16
      %v3098 = vrot.slane %v3096, 1
      %v3099 = vor.u32 %v3094, %v3098
      %v3100 = vrot.slane %v2984, 1
      %3101 = vrot.lane.b32.xlu0 %v3055, 32
      %v3102 = vpop.permute.xlu0 %3101
      %3103 = vrot.lane.b32.xlu0 %v3056, 32
      %v3104 = vpop.permute.xlu0 %3103
      %3105 = vrot.lane.b32.xlu0 %v3057, 32
      %v3106 = vpop.permute.xlu0 %3105
      %3107 = vrot.lane.b32.xlu0 %v3058, 32
      %v3108 = vpop.permute.xlu0 %3107
      %3109 = vrot.lane.b32.xlu0 %v3059, 32
      %v3110 = vpop.permute.xlu0 %3109
      %3111 = vrot.lane.b32.xlu0 %v3060, 32
      %v3112 = vpop.permute.xlu0 %3111
      %3113 = vrot.lane.b32.xlu0 %v3061, 32
      %v3114 = vpop.permute.xlu0 %3113
      %3115 = vrot.lane.b32.xlu0 %v3100, 32
      %v3116 = vpop.permute.xlu0 %3115
      %3117 = vrot.lane.b32.xlu0 %v2978, 64
      %v3118 = vpop.permute.xlu0 %3117
      %3119 = vrot.lane.b32.xlu0 %v2979, 64
      %v3120 = vpop.permute.xlu0 %3119
      %3121 = vrot.lane.b32.xlu0 %v2980, 64
      %v3122 = vpop.permute.xlu0 %3121
      %3123 = vrot.lane.b32.xlu0 %v2981, 64
      %v3124 = vpop.permute.xlu0 %3123
      %3125 = vrot.lane.b32.xlu0 %v2982, 64
      %v3126 = vpop.permute.xlu0 %3125
      %3127 = vrot.lane.b32.xlu0 %v2983, 64
      %v3128 = vpop.permute.xlu0 %3127
      %3129 = vrot.lane.b32.xlu0 %v2984, 64
      %v3130 = vpop.permute.xlu0 %3129
      %3131 = vrot.lane.b32.xlu0 %v2998, 96
      %v3132 = vpop.permute.xlu0 %3131
      %3133 = vrot.lane.b32.xlu0 %v3005, 96
      %v3134 = vpop.permute.xlu0 %3133
      %3135 = vrot.lane.b32.xlu0 %v3012, 96
      %v3136 = vpop.permute.xlu0 %3135
      %3137 = vrot.lane.b32.xlu0 %v3019, 96
      %v3138 = vpop.permute.xlu0 %3137
      %3139 = vrot.lane.b32.xlu0 %v3026, 96
      %v3140 = vpop.permute.xlu0 %3139
      %3141 = vrot.lane.b32.xlu0 %v3033, 96
      %v3142 = vpop.permute.xlu0 %3141
      %3143 = vrot.lane.b32.xlu0 %v3099, 96
      %v3144 = vpop.permute.xlu0 %3143
      %v3146 = vsel %vm2574, %v2977, %v3035
      %v3148 = vsel %vm2574, %v2978, %v3037
      %v3150 = vsel %vm2574, %v2979, %v3039
      %v3152 = vsel %vm2574, %v2980, %v3041
      %v3154 = vsel %vm2574, %v2981, %v3043
      %v3156 = vsel %vm2574, %v2982, %v3045
      %v3158 = vsel %vm2574, %v2983, %v3047
      %v3160 = vsel %vm2591, %v3146, %v3063
      %v3162 = vsel %vm2591, %v3148, %v3065
      %v3164 = vsel %vm2591, %v3150, %v3067
      %v3166 = vsel %vm2591, %v3152, %v3069
      %v3168 = vsel %vm2591, %v3154, %v3071
      %v3170 = vsel %vm2591, %v3156, %v3073
      %v3172 = vsel %vm2591, %v3158, %v3075
      %v3174 = vsel %vm2608, %v2593, %v3078
      %v3176 = vsel %vm2608, %v3160, %v3080
      %v3178 = vsel %vm2608, %v3162, %v3082
      %v3180 = vsel %vm2608, %v3164, %v3084
      %v3182 = vsel %vm2608, %v3166, %v3086
      %v3184 = vsel %vm2608, %v3168, %v3088
      %v3186 = vsel %vm2608, %v3170, %v3090
      %v3188 = vsel %vm2608, %v3172, %v3092
      %v3191 = vsel %vm2574, %v2991, %v3102
      %v3194 = vsel %vm2574, %v2998, %v3104
      %v3197 = vsel %vm2574, %v3005, %v3106
      %v3200 = vsel %vm2574, %v3012, %v3108
      %v3203 = vsel %vm2574, %v3019, %v3110
      %v3206 = vsel %vm2574, %v3026, %v3112
      %v3209 = vsel %vm2574, %v3033, %v3114
      %v3212 = vsel %vm2574, %v3099, %v3116
      %v3214 = vsel %vm2591, %v3191, %v3118
      %v3216 = vsel %vm2591, %v3194, %v3120
      %v3218 = vsel %vm2591, %v3197, %v3122
      %v3220 = vsel %vm2591, %v3200, %v3124
      %v3222 = vsel %vm2591, %v3203, %v3126
      %v3224 = vsel %vm2591, %v3206, %v3128
      %v3226 = vsel %vm2591, %v3209, %v3130
      %v3227 = vsel %vm2591, %v3212, %v2557
      %v3229 = vsel %vm2608, %v3214, %v3132
      %v3231 = vsel %vm2608, %v3216, %v3134
      %v3233 = vsel %vm2608, %v3218, %v3136
      %v3235 = vsel %vm2608, %v3220, %v3138
      %v3237 = vsel %vm2608, %v3222, %v3140
      %v3239 = vsel %vm2608, %v3224, %v3142
      %v3241 = vsel %vm2608, %v3226, %v3144
      %v3242 = vsel %vm2608, %v3227, %v2573
      %v3259 = vunpack.c.l.b16 %v3174
      %v3260 = vunpack.c.l.b16 %v3229
      %v3261 = vunpack.c.l.b16 %v3056
      %v3262 = vunpack.c.l.b16 %v3176
      %v3263 = vunpack.c.l.b16 %v3231
      %v3264 = vunpack.c.l.b16 %v3057
      %v3265 = vunpack.c.l.b16 %v3178
      %v3266 = vunpack.c.l.b16 %v3233
      %v3267 = vunpack.c.l.b16 %v3058
      %v3268 = vunpack.c.l.b16 %v3180
      %v3269 = vunpack.c.l.b16 %v3235
      %v3270 = vunpack.c.l.b16 %v3059
      %v3271 = vunpack.c.l.b16 %v3182
      %v3272 = vunpack.c.l.b16 %v3237
      %v3273 = vunpack.c.l.b16 %v3060
      %v3274 = vunpack.c.l.b16 %v3184
      %v3275 = vunpack.c.l.b16 %v3239
      %v3276 = vunpack.c.l.b16 %v3061
      %v3277 = vunpack.c.l.b16 %v3186
      %v3278 = vunpack.c.l.b16 %v3241
      %v3279 = vunpack.c.l.b16 %v3100
      %v3280 = vunpack.c.l.b16 %v3188
      %v3281 = vunpack.c.l.b16 %v3242
      %v3314 = vcombine.low %v1988, %v1989
      %v3315 = vcombine.low %v1990, %v1991
      %v3317 = vunpack.c.l.s4 1983009808
      %v3318 = vunpack.c.0.s8 %v3317
      %v3319 = vlaneseq
      %v3320 = vshrl.u32 %v3319, 7
      %v3321 = vsub.s32 %v3318, %v3320
      %v3322 = vrot.slane %v3314, %v3321
      %v3324 = vunpack.c.l.s4 1983009808
      %v3325 = vunpack.c.0.s8 %v3324
      %v3326 = vlaneseq
      %v3327 = vshrl.u32 %v3326, 7
      %v3328 = vsub.s32 %v3325, %v3327
      %v3329 = vrot.slane %v3315, %v3328
      %v3330 = vcombine.low %v3322, %v3329
      %v3331 = vcombine.low %v1992, %v1993
      %v3332 = vcombine.low %v1994, %v1995
      %v3334 = vunpack.c.l.s4 1983009808
      %v3335 = vunpack.c.0.s8 %v3334
      %v3336 = vlaneseq
      %v3337 = vshrl.u32 %v3336, 7
      %v3338 = vsub.s32 %v3335, %v3337
      %v3339 = vrot.slane %v3331, %v3338
      %v3341 = vunpack.c.l.s4 1983009808
      %v3342 = vunpack.c.0.s8 %v3341
      %v3343 = vlaneseq
      %v3344 = vshrl.u32 %v3343, 7
      %v3345 = vsub.s32 %v3342, %v3344
      %v3346 = vrot.slane %v3332, %v3345
      %v3347 = vcombine.low %v3339, %v3346
      %v3348 = vcombine.low %v1996, %v1997
      %v3349 = vcombine.low %v1998, %v1999
      %v3351 = vunpack.c.l.s4 1983009808
      %v3352 = vunpack.c.0.s8 %v3351
      %v3353 = vlaneseq
      %v3354 = vshrl.u32 %v3353, 7
      %v3355 = vsub.s32 %v3352, %v3354
      %v3356 = vrot.slane %v3348, %v3355
      %v3358 = vunpack.c.l.s4 1983009808
      %v3359 = vunpack.c.0.s8 %v3358
      %v3360 = vlaneseq
      %v3361 = vshrl.u32 %v3360, 7
      %v3362 = vsub.s32 %v3359, %v3361
      %v3363 = vrot.slane %v3349, %v3362
      %v3364 = vcombine.low %v3356, %v3363
      %v3365 = vcombine.low %v2000, %v2001
      %v3366 = vcombine.low %v2002, %v2003
      %v3368 = vunpack.c.l.s4 1983009808
      %v3369 = vunpack.c.0.s8 %v3368
      %v3370 = vlaneseq
      %v3371 = vshrl.u32 %v3370, 7
      %v3372 = vsub.s32 %v3369, %v3371
      %v3373 = vrot.slane %v3365, %v3372
      %v3375 = vunpack.c.l.s4 1983009808
      %v3376 = vunpack.c.0.s8 %v3375
      %v3377 = vlaneseq
      %v3378 = vshrl.u32 %v3377, 7
      %v3379 = vsub.s32 %v3376, %v3378
      %v3380 = vrot.slane %v3366, %v3379
      %v3381 = vcombine.low %v3373, %v3380
      %v3382 = vcombine.low %v2004, %v2005
      %v3383 = vcombine.low %v2006, %v2007
      %v3385 = vunpack.c.l.s4 1983009808
      %v3386 = vunpack.c.0.s8 %v3385
      %v3387 = vlaneseq
      %v3388 = vshrl.u32 %v3387, 7
      %v3389 = vsub.s32 %v3386, %v3388
      %v3390 = vrot.slane %v3382, %v3389
      %v3392 = vunpack.c.l.s4 1983009808
      %v3393 = vunpack.c.0.s8 %v3392
      %v3394 = vlaneseq
      %v3395 = vshrl.u32 %v3394, 7
      %v3396 = vsub.s32 %v3393, %v3395
      %v3397 = vrot.slane %v3383, %v3396
      %v3398 = vcombine.low %v3390, %v3397
      %v3399 = vcombine.low %v2008, %v2009
      %v3400 = vcombine.low %v2010, %v2011
      %v3402 = vunpack.c.l.s4 1983009808
      %v3403 = vunpack.c.0.s8 %v3402
      %v3404 = vlaneseq
      %v3405 = vshrl.u32 %v3404, 7
      %v3406 = vsub.s32 %v3403, %v3405
      %v3407 = vrot.slane %v3399, %v3406
      %v3409 = vunpack.c.l.s4 1983009808
      %v3410 = vunpack.c.0.s8 %v3409
      %v3411 = vlaneseq
      %v3412 = vshrl.u32 %v3411, 7
      %v3413 = vsub.s32 %v3410, %v3412
      %v3414 = vrot.slane %v3400, %v3413
      %v3415 = vcombine.low %v3407, %v3414
      %v3416 = vcombine.low %v2012, %v2013
      %v3417 = vcombine.low %v2014, %v2015
      %v3419 = vunpack.c.l.s4 1983009808
      %v3420 = vunpack.c.0.s8 %v3419
      %v3421 = vlaneseq
      %v3422 = vshrl.u32 %v3421, 7
      %v3423 = vsub.s32 %v3420, %v3422
      %v3424 = vrot.slane %v3416, %v3423
      %v3426 = vunpack.c.l.s4 1983009808
      %v3427 = vunpack.c.0.s8 %v3426
      %v3428 = vlaneseq
      %v3429 = vshrl.u32 %v3428, 7
      %v3430 = vsub.s32 %v3427, %v3429
      %v3431 = vrot.slane %v3417, %v3430
      %v3432 = vcombine.low %v3424, %v3431
      %v3433 = vcombine.low %v2016, %v2017
      %v3434 = vcombine.low %v2018, %v2019
      %v3436 = vunpack.c.l.s4 1983009808
      %v3437 = vunpack.c.0.s8 %v3436
      %v3438 = vlaneseq
      %v3439 = vshrl.u32 %v3438, 7
      %v3440 = vsub.s32 %v3437, %v3439
      %v3441 = vrot.slane %v3433, %v3440
      %v3443 = vunpack.c.l.s4 1983009808
      %v3444 = vunpack.c.0.s8 %v3443
      %v3445 = vlaneseq
      %v3446 = vshrl.u32 %v3445, 7
      %v3447 = vsub.s32 %v3444, %v3446
      %v3448 = vrot.slane %v3434, %v3447
      %v3449 = vcombine.low %v3441, %v3448
      %v3458 = vpack.c.bf16 %v3330, %v3330
      %v3459 = vpack.c.bf16 %v3347, %v3347
      %v3460 = vpack.c.bf16 %v3364, %v3364
      %v3461 = vpack.c.bf16 %v3381, %v3381
      %v3462 = vpack.c.bf16 %v3398, %v3398
      %v3463 = vpack.c.bf16 %v3415, %v3415
      %v3464 = vpack.c.bf16 %v3432, %v3432
      %v3465 = vpack.c.bf16 %v3449, %v3449
      %v3467 = vshrl.u32 %v3458, 16
      %v3469 = vrot.slane %v3467, 7
      %v3470 = vshll.u32 %v3458, 16
      %v3472 = vor.u32 %v3469, %v3470
      %v3474 = vshrl.u32 %v3459, 16
      %v3476 = vrot.slane %v3474, 7
      %v3477 = vshll.u32 %v3459, 16
      %v3479 = vor.u32 %v3476, %v3477
      %v3481 = vshrl.u32 %v3460, 16
      %v3483 = vrot.slane %v3481, 7
      %v3484 = vshll.u32 %v3460, 16
      %v3486 = vor.u32 %v3483, %v3484
      %v3488 = vshrl.u32 %v3461, 16
      %v3490 = vrot.slane %v3488, 7
      %v3491 = vshll.u32 %v3461, 16
      %v3493 = vor.u32 %v3490, %v3491
      %v3495 = vshrl.u32 %v3462, 16
      %v3497 = vrot.slane %v3495, 7
      %v3498 = vshll.u32 %v3462, 16
      %v3500 = vor.u32 %v3497, %v3498
      %v3502 = vshrl.u32 %v3463, 16
      %v3504 = vrot.slane %v3502, 7
      %v3505 = vshll.u32 %v3463, 16
      %v3507 = vor.u32 %v3504, %v3505
      %v3509 = vshrl.u32 %v3464, 16
      %v3511 = vrot.slane %v3509, 7
      %v3512 = vshll.u32 %v3464, 16
      %v3514 = vor.u32 %v3511, %v3512
      %v3516 = vshrl.u32 %v3465, 16
      %v3518 = vrot.slane %v3516, 7
      %v3519 = vshll.u32 %v3465, 16
      %v3521 = vor.u32 %v3518, %v3519
      %v3530 = vsel %vm2375, 0, %v3472
      %v3531 = vsel %vm2375, 0, %v3479
      %v3532 = vsel %vm2375, 0, %v3486
      %v3533 = vsel %vm2375, 0, %v3493
      %v3534 = vsel %vm2375, 0, %v3500
      %v3535 = vsel %vm2375, 0, %v3507
      %v3536 = vsel %vm2375, 0, %v3514
      %v3537 = vsel %vm2375, 0, %v3521
      %v3538 = vsel %vm2387, %v3530, 0
      %v3539 = vsel %vm2387, %v3531, 0
      %v3540 = vsel %vm2387, %v3532, 0
      %v3541 = vsel %vm2387, %v3533, 0
      %v3542 = vsel %vm2387, %v3534, 0
      %v3543 = vsel %vm2387, %v3535, 0
      %v3544 = vsel %vm2387, %v3536, 0
      %v3545 = vsel %vm2387, %v3537, 0
      %v3547 = vshrl.u32 %v3538, 16
      %v3549 = vshll.u32 %v3538, 16
      %v3551 = vrot.slane %v3549, 1
      %v3552 = vor.u32 %v3547, %v3551
      %v3554 = vshrl.u32 %v3539, 16
      %v3556 = vshll.u32 %v3539, 16
      %v3558 = vrot.slane %v3556, 1
      %v3559 = vor.u32 %v3554, %v3558
      %v3561 = vshrl.u32 %v3540, 16
      %v3563 = vshll.u32 %v3540, 16
      %v3565 = vrot.slane %v3563, 1
      %v3566 = vor.u32 %v3561, %v3565
      %v3568 = vshrl.u32 %v3541, 16
      %v3570 = vshll.u32 %v3541, 16
      %v3572 = vrot.slane %v3570, 1
      %v3573 = vor.u32 %v3568, %v3572
      %v3575 = vshrl.u32 %v3542, 16
      %v3577 = vshll.u32 %v3542, 16
      %v3579 = vrot.slane %v3577, 1
      %v3580 = vor.u32 %v3575, %v3579
      %v3582 = vshrl.u32 %v3543, 16
      %v3584 = vshll.u32 %v3543, 16
      %v3586 = vrot.slane %v3584, 1
      %v3587 = vor.u32 %v3582, %v3586
      %v3589 = vshrl.u32 %v3544, 16
      %v3591 = vshll.u32 %v3544, 16
      %v3593 = vrot.slane %v3591, 1
      %v3594 = vor.u32 %v3589, %v3593
      %3595 = vrot.lane.b32.xlu0 %v3552, 32
      %v3596 = vpop.permute.xlu0 %3595
      %3597 = vrot.lane.b32.xlu0 %v3559, 32
      %v3598 = vpop.permute.xlu0 %3597
      %3599 = vrot.lane.b32.xlu0 %v3566, 32
      %v3600 = vpop.permute.xlu0 %3599
      %3601 = vrot.lane.b32.xlu0 %v3573, 32
      %v3602 = vpop.permute.xlu0 %3601
      %3603 = vrot.lane.b32.xlu0 %v3580, 32
      %v3604 = vpop.permute.xlu0 %3603
      %3605 = vrot.lane.b32.xlu0 %v3587, 32
      %v3606 = vpop.permute.xlu0 %3605
      %3607 = vrot.lane.b32.xlu0 %v3594, 32
      %v3608 = vpop.permute.xlu0 %3607
      %v3616 = vrot.slane %v3538, 1
      %v3617 = vrot.slane %v3539, 1
      %v3618 = vrot.slane %v3540, 1
      %v3619 = vrot.slane %v3541, 1
      %v3620 = vrot.slane %v3542, 1
      %v3621 = vrot.slane %v3543, 1
      %v3622 = vrot.slane %v3544, 1
      %3623 = vrot.lane.b32.xlu0 %v3616, 64
      %v3624 = vpop.permute.xlu0 %3623
      %3625 = vrot.lane.b32.xlu0 %v3617, 64
      %v3626 = vpop.permute.xlu0 %3625
      %3627 = vrot.lane.b32.xlu0 %v3618, 64
      %v3628 = vpop.permute.xlu0 %3627
      %3629 = vrot.lane.b32.xlu0 %v3619, 64
      %v3630 = vpop.permute.xlu0 %3629
      %3631 = vrot.lane.b32.xlu0 %v3620, 64
      %v3632 = vpop.permute.xlu0 %3631
      %3633 = vrot.lane.b32.xlu0 %v3621, 64
      %v3634 = vpop.permute.xlu0 %3633
      %3635 = vrot.lane.b32.xlu0 %v3622, 64
      %v3636 = vpop.permute.xlu0 %3635
      %3638 = vrot.lane.b32.xlu0 %v3538, 96
      %v3639 = vpop.permute.xlu0 %3638
      %3640 = vrot.lane.b32.xlu0 %v3539, 96
      %v3641 = vpop.permute.xlu0 %3640
      %3642 = vrot.lane.b32.xlu0 %v3540, 96
      %v3643 = vpop.permute.xlu0 %3642
      %3644 = vrot.lane.b32.xlu0 %v3541, 96
      %v3645 = vpop.permute.xlu0 %3644
      %3646 = vrot.lane.b32.xlu0 %v3542, 96
      %v3647 = vpop.permute.xlu0 %3646
      %3648 = vrot.lane.b32.xlu0 %v3543, 96
      %v3649 = vpop.permute.xlu0 %3648
      %3650 = vrot.lane.b32.xlu0 %v3544, 96
      %v3651 = vpop.permute.xlu0 %3650
      %3652 = vrot.lane.b32.xlu0 %v3545, 96
      %v3653 = vpop.permute.xlu0 %3652
      %v3655 = vshrl.u32 %v3545, 16
      %v3657 = vshll.u32 %v3545, 16
      %v3659 = vrot.slane %v3657, 1
      %v3660 = vor.u32 %v3655, %v3659
      %v3661 = vrot.slane %v3545, 1
      %3662 = vrot.lane.b32.xlu0 %v3616, 32
      %v3663 = vpop.permute.xlu0 %3662
      %3664 = vrot.lane.b32.xlu0 %v3617, 32
      %v3665 = vpop.permute.xlu0 %3664
      %3666 = vrot.lane.b32.xlu0 %v3618, 32
      %v3667 = vpop.permute.xlu0 %3666
      %3668 = vrot.lane.b32.xlu0 %v3619, 32
      %v3669 = vpop.permute.xlu0 %3668
      %3670 = vrot.lane.b32.xlu0 %v3620, 32
      %v3671 = vpop.permute.xlu0 %3670
      %3672 = vrot.lane.b32.xlu0 %v3621, 32
      %v3673 = vpop.permute.xlu0 %3672
      %3674 = vrot.lane.b32.xlu0 %v3622, 32
      %v3675 = vpop.permute.xlu0 %3674
      %3676 = vrot.lane.b32.xlu0 %v3661, 32
      %v3677 = vpop.permute.xlu0 %3676
      %3678 = vrot.lane.b32.xlu0 %v3539, 64
      %v3679 = vpop.permute.xlu0 %3678
      %3680 = vrot.lane.b32.xlu0 %v3540, 64
      %v3681 = vpop.permute.xlu0 %3680
      %3682 = vrot.lane.b32.xlu0 %v3541, 64
      %v3683 = vpop.permute.xlu0 %3682
      %3684 = vrot.lane.b32.xlu0 %v3542, 64
      %v3685 = vpop.permute.xlu0 %3684
      %3686 = vrot.lane.b32.xlu0 %v3543, 64
      %v3687 = vpop.permute.xlu0 %3686
      %3688 = vrot.lane.b32.xlu0 %v3544, 64
      %v3689 = vpop.permute.xlu0 %3688
      %3690 = vrot.lane.b32.xlu0 %v3545, 64
      %v3691 = vpop.permute.xlu0 %3690
      %3692 = vrot.lane.b32.xlu0 %v3559, 96
      %v3693 = vpop.permute.xlu0 %3692
      %3694 = vrot.lane.b32.xlu0 %v3566, 96
      %v3695 = vpop.permute.xlu0 %3694
      %3696 = vrot.lane.b32.xlu0 %v3573, 96
      %v3697 = vpop.permute.xlu0 %3696
      %3698 = vrot.lane.b32.xlu0 %v3580, 96
      %v3699 = vpop.permute.xlu0 %3698
      %3700 = vrot.lane.b32.xlu0 %v3587, 96
      %v3701 = vpop.permute.xlu0 %3700
      %3702 = vrot.lane.b32.xlu0 %v3594, 96
      %v3703 = vpop.permute.xlu0 %3702
      %3704 = vrot.lane.b32.xlu0 %v3660, 96
      %v3705 = vpop.permute.xlu0 %3704
      %v3707 = vsel %vm2574, %v3538, %v3596
      %v3709 = vsel %vm2574, %v3539, %v3598
      %v3711 = vsel %vm2574, %v3540, %v3600
      %v3713 = vsel %vm2574, %v3541, %v3602
      %v3715 = vsel %vm2574, %v3542, %v3604
      %v3717 = vsel %vm2574, %v3543, %v3606
      %v3719 = vsel %vm2574, %v3544, %v3608
      %v3721 = vsel %vm2591, %v3707, %v3624
      %v3723 = vsel %vm2591, %v3709, %v3626
      %v3725 = vsel %vm2591, %v3711, %v3628
      %v3727 = vsel %vm2591, %v3713, %v3630
      %v3729 = vsel %vm2591, %v3715, %v3632
      %v3731 = vsel %vm2591, %v3717, %v3634
      %v3733 = vsel %vm2591, %v3719, %v3636
      %v3735 = vsel %vm2608, %v2593, %v3639
      %v3737 = vsel %vm2608, %v3721, %v3641
      %v3739 = vsel %vm2608, %v3723, %v3643
      %v3741 = vsel %vm2608, %v3725, %v3645
      %v3743 = vsel %vm2608, %v3727, %v3647
      %v3745 = vsel %vm2608, %v3729, %v3649
      %v3747 = vsel %vm2608, %v3731, %v3651
      %v3749 = vsel %vm2608, %v3733, %v3653
      %v3752 = vsel %vm2574, %v3552, %v3663
      %v3755 = vsel %vm2574, %v3559, %v3665
      %v3758 = vsel %vm2574, %v3566, %v3667
      %v3761 = vsel %vm2574, %v3573, %v3669
      %v3764 = vsel %vm2574, %v3580, %v3671
      %v3767 = vsel %vm2574, %v3587, %v3673
      %v3770 = vsel %vm2574, %v3594, %v3675
      %v3773 = vsel %vm2574, %v3660, %v3677
      %v3775 = vsel %vm2591, %v3752, %v3679
      %v3777 = vsel %vm2591, %v3755, %v3681
      %v3779 = vsel %vm2591, %v3758, %v3683
      %v3781 = vsel %vm2591, %v3761, %v3685
      %v3783 = vsel %vm2591, %v3764, %v3687
      %v3785 = vsel %vm2591, %v3767, %v3689
      %v3787 = vsel %vm2591, %v3770, %v3691
      %v3788 = vsel %vm2591, %v3773, %v2557
      %v3790 = vsel %vm2608, %v3775, %v3693
      %v3792 = vsel %vm2608, %v3777, %v3695
      %v3794 = vsel %vm2608, %v3779, %v3697
      %v3796 = vsel %vm2608, %v3781, %v3699
      %v3798 = vsel %vm2608, %v3783, %v3701
      %v3800 = vsel %vm2608, %v3785, %v3703
      %v3802 = vsel %vm2608, %v3787, %v3705
      %v3803 = vsel %vm2608, %v3788, %v2573
      %v3820 = vunpack.c.l.b16 %v3735
      %v3821 = vunpack.c.l.b16 %v3790
      %v3822 = vunpack.c.l.b16 %v3617
      %v3823 = vunpack.c.l.b16 %v3737
      %v3824 = vunpack.c.l.b16 %v3792
      %v3825 = vunpack.c.l.b16 %v3618
      %v3826 = vunpack.c.l.b16 %v3739
      %v3827 = vunpack.c.l.b16 %v3794
      %v3828 = vunpack.c.l.b16 %v3619
      %v3829 = vunpack.c.l.b16 %v3741
      %v3830 = vunpack.c.l.b16 %v3796
      %v3831 = vunpack.c.l.b16 %v3620
      %v3832 = vunpack.c.l.b16 %v3743
      %v3833 = vunpack.c.l.b16 %v3798
      %v3834 = vunpack.c.l.b16 %v3621
      %v3835 = vunpack.c.l.b16 %v3745
      %v3836 = vunpack.c.l.b16 %v3800
      %v3837 = vunpack.c.l.b16 %v3622
      %v3838 = vunpack.c.l.b16 %v3747
      %v3839 = vunpack.c.l.b16 %v3802
      %v3840 = vunpack.c.l.b16 %v3661
      %v3841 = vunpack.c.l.b16 %v3749
      %v3842 = vunpack.c.l.b16 %v3803
      %v3875 = vcombine.low %v2085, %v2086
      %v3876 = vcombine.low %v2087, %v2088
      %v3878 = vunpack.c.l.s4 1983009808
      %v3879 = vunpack.c.0.s8 %v3878
      %v3880 = vlaneseq
      %v3881 = vshrl.u32 %v3880, 7
      %v3882 = vsub.s32 %v3879, %v3881
      %v3883 = vrot.slane %v3875, %v3882
      %v3885 = vunpack.c.l.s4 1983009808
      %v3886 = vunpack.c.0.s8 %v3885
      %v3887 = vlaneseq
      %v3888 = vshrl.u32 %v3887, 7
      %v3889 = vsub.s32 %v3886, %v3888
      %v3890 = vrot.slane %v3876, %v3889
      %v3891 = vcombine.low %v3883, %v3890
      %v3892 = vcombine.low %v2089, %v2090
      %v3893 = vcombine.low %v2091, %v2092
      %v3895 = vunpack.c.l.s4 1983009808
      %v3896 = vunpack.c.0.s8 %v3895
      %v3897 = vlaneseq
      %v3898 = vshrl.u32 %v3897, 7
      %v3899 = vsub.s32 %v3896, %v3898
      %v3900 = vrot.slane %v3892, %v3899
      %v3902 = vunpack.c.l.s4 1983009808
      %v3903 = vunpack.c.0.s8 %v3902
      %v3904 = vlaneseq
      %v3905 = vshrl.u32 %v3904, 7
      %v3906 = vsub.s32 %v3903, %v3905
      %v3907 = vrot.slane %v3893, %v3906
      %v3908 = vcombine.low %v3900, %v3907
      %v3909 = vcombine.low %v2093, %v2094
      %v3910 = vcombine.low %v2095, %v2096
      %v3912 = vunpack.c.l.s4 1983009808
      %v3913 = vunpack.c.0.s8 %v3912
      %v3914 = vlaneseq
      %v3915 = vshrl.u32 %v3914, 7
      %v3916 = vsub.s32 %v3913, %v3915
      %v3917 = vrot.slane %v3909, %v3916
      %v3919 = vunpack.c.l.s4 1983009808
      %v3920 = vunpack.c.0.s8 %v3919
      %v3921 = vlaneseq
      %v3922 = vshrl.u32 %v3921, 7
      %v3923 = vsub.s32 %v3920, %v3922
      %v3924 = vrot.slane %v3910, %v3923
      %v3925 = vcombine.low %v3917, %v3924
      %v3926 = vcombine.low %v2097, %v2098
      %v3927 = vcombine.low %v2099, %v2100
      %v3929 = vunpack.c.l.s4 1983009808
      %v3930 = vunpack.c.0.s8 %v3929
      %v3931 = vlaneseq
      %v3932 = vshrl.u32 %v3931, 7
      %v3933 = vsub.s32 %v3930, %v3932
      %v3934 = vrot.slane %v3926, %v3933
      %v3936 = vunpack.c.l.s4 1983009808
      %v3937 = vunpack.c.0.s8 %v3936
      %v3938 = vlaneseq
      %v3939 = vshrl.u32 %v3938, 7
      %v3940 = vsub.s32 %v3937, %v3939
      %v3941 = vrot.slane %v3927, %v3940
      %v3942 = vcombine.low %v3934, %v3941
      %v3943 = vcombine.low %v2101, %v2102
      %v3944 = vcombine.low %v2103, %v2104
      %v3946 = vunpack.c.l.s4 1983009808
      %v3947 = vunpack.c.0.s8 %v3946
      %v3948 = vlaneseq
      %v3949 = vshrl.u32 %v3948, 7
      %v3950 = vsub.s32 %v3947, %v3949
      %v3951 = vrot.slane %v3943, %v3950
      %v3953 = vunpack.c.l.s4 1983009808
      %v3954 = vunpack.c.0.s8 %v3953
      %v3955 = vlaneseq
      %v3956 = vshrl.u32 %v3955, 7
      %v3957 = vsub.s32 %v3954, %v3956
      %v3958 = vrot.slane %v3944, %v3957
      %v3959 = vcombine.low %v3951, %v3958
      %v3960 = vcombine.low %v2105, %v2106
      %v3961 = vcombine.low %v2107, %v2108
      %v3963 = vunpack.c.l.s4 1983009808
      %v3964 = vunpack.c.0.s8 %v3963
      %v3965 = vlaneseq
      %v3966 = vshrl.u32 %v3965, 7
      %v3967 = vsub.s32 %v3964, %v3966
      %v3968 = vrot.slane %v3960, %v3967
      %v3970 = vunpack.c.l.s4 1983009808
      %v3971 = vunpack.c.0.s8 %v3970
      %v3972 = vlaneseq
      %v3973 = vshrl.u32 %v3972, 7
      %v3974 = vsub.s32 %v3971, %v3973
      %v3975 = vrot.slane %v3961, %v3974
      %v3976 = vcombine.low %v3968, %v3975
      %v3977 = vcombine.low %v2109, %v2110
      %v3978 = vcombine.low %v2111, %v2112
      %v3980 = vunpack.c.l.s4 1983009808
      %v3981 = vunpack.c.0.s8 %v3980
      %v3982 = vlaneseq
      %v3983 = vshrl.u32 %v3982, 7
      %v3984 = vsub.s32 %v3981, %v3983
      %v3985 = vrot.slane %v3977, %v3984
      %v3987 = vunpack.c.l.s4 1983009808
      %v3988 = vunpack.c.0.s8 %v3987
      %v3989 = vlaneseq
      %v3990 = vshrl.u32 %v3989, 7
      %v3991 = vsub.s32 %v3988, %v3990
      %v3992 = vrot.slane %v3978, %v3991
      %v3993 = vcombine.low %v3985, %v3992
      %v3994 = vcombine.low %v2113, %v2114
      %v3995 = vcombine.low %v2115, %v2116
      %v3997 = vunpack.c.l.s4 1983009808
      %v3998 = vunpack.c.0.s8 %v3997
      %v3999 = vlaneseq
      %v4000 = vshrl.u32 %v3999, 7
      %v4001 = vsub.s32 %v3998, %v4000
      %v4002 = vrot.slane %v3994, %v4001
      %v4004 = vunpack.c.l.s4 1983009808
      %v4005 = vunpack.c.0.s8 %v4004
      %v4006 = vlaneseq
      %v4007 = vshrl.u32 %v4006, 7
      %v4008 = vsub.s32 %v4005, %v4007
      %v4009 = vrot.slane %v3995, %v4008
      %v4010 = vcombine.low %v4002, %v4009
      %v4019 = vpack.c.bf16 %v3891, %v3891
      %v4020 = vpack.c.bf16 %v3908, %v3908
      %v4021 = vpack.c.bf16 %v3925, %v3925
      %v4022 = vpack.c.bf16 %v3942, %v3942
      %v4023 = vpack.c.bf16 %v3959, %v3959
      %v4024 = vpack.c.bf16 %v3976, %v3976
      %v4025 = vpack.c.bf16 %v3993, %v3993
      %v4026 = vpack.c.bf16 %v4010, %v4010
      %v4028 = vshrl.u32 %v4019, 16
      %v4030 = vrot.slane %v4028, 7
      %v4031 = vshll.u32 %v4019, 16
      %v4033 = vor.u32 %v4030, %v4031
      %v4035 = vshrl.u32 %v4020, 16
      %v4037 = vrot.slane %v4035, 7
      %v4038 = vshll.u32 %v4020, 16
      %v4040 = vor.u32 %v4037, %v4038
      %v4042 = vshrl.u32 %v4021, 16
      %v4044 = vrot.slane %v4042, 7
      %v4045 = vshll.u32 %v4021, 16
      %v4047 = vor.u32 %v4044, %v4045
      %v4049 = vshrl.u32 %v4022, 16
      %v4051 = vrot.slane %v4049, 7
      %v4052 = vshll.u32 %v4022, 16
      %v4054 = vor.u32 %v4051, %v4052
      %v4056 = vshrl.u32 %v4023, 16
      %v4058 = vrot.slane %v4056, 7
      %v4059 = vshll.u32 %v4023, 16
      %v4061 = vor.u32 %v4058, %v4059
      %v4063 = vshrl.u32 %v4024, 16
      %v4065 = vrot.slane %v4063, 7
      %v4066 = vshll.u32 %v4024, 16
      %v4068 = vor.u32 %v4065, %v4066
      %v4070 = vshrl.u32 %v4025, 16
      %v4072 = vrot.slane %v4070, 7
      %v4073 = vshll.u32 %v4025, 16
      %v4075 = vor.u32 %v4072, %v4073
      %v4077 = vshrl.u32 %v4026, 16
      %v4079 = vrot.slane %v4077, 7
      %v4080 = vshll.u32 %v4026, 16
      %v4082 = vor.u32 %v4079, %v4080
      %v4091 = vsel %vm2375, 0, %v4033
      %v4092 = vsel %vm2375, 0, %v4040
      %v4093 = vsel %vm2375, 0, %v4047
      %v4094 = vsel %vm2375, 0, %v4054
      %v4095 = vsel %vm2375, 0, %v4061
      %v4096 = vsel %vm2375, 0, %v4068
      %v4097 = vsel %vm2375, 0, %v4075
      %v4098 = vsel %vm2375, 0, %v4082
      %v4099 = vsel %vm2387, %v4091, 0
      %v4100 = vsel %vm2387, %v4092, 0
      %v4101 = vsel %vm2387, %v4093, 0
      %v4102 = vsel %vm2387, %v4094, 0
      %v4103 = vsel %vm2387, %v4095, 0
      %v4104 = vsel %vm2387, %v4096, 0
      %v4105 = vsel %vm2387, %v4097, 0
      %v4106 = vsel %vm2387, %v4098, 0
      %v4108 = vshrl.u32 %v4099, 16
      %v4110 = vshll.u32 %v4099, 16
      %v4112 = vrot.slane %v4110, 1
      %v4113 = vor.u32 %v4108, %v4112
      %v4115 = vshrl.u32 %v4100, 16
      %v4117 = vshll.u32 %v4100, 16
      %v4119 = vrot.slane %v4117, 1
      %v4120 = vor.u32 %v4115, %v4119
      %v4122 = vshrl.u32 %v4101, 16
      %v4124 = vshll.u32 %v4101, 16
      %v4126 = vrot.slane %v4124, 1
      %v4127 = vor.u32 %v4122, %v4126
      %v4129 = vshrl.u32 %v4102, 16
      %v4131 = vshll.u32 %v4102, 16
      %v4133 = vrot.slane %v4131, 1
      %v4134 = vor.u32 %v4129, %v4133
      %v4136 = vshrl.u32 %v4103, 16
      %v4138 = vshll.u32 %v4103, 16
      %v4140 = vrot.slane %v4138, 1
      %v4141 = vor.u32 %v4136, %v4140
      %v4143 = vshrl.u32 %v4104, 16
      %v4145 = vshll.u32 %v4104, 16
      %v4147 = vrot.slane %v4145, 1
      %v4148 = vor.u32 %v4143, %v4147
      %v4150 = vshrl.u32 %v4105, 16
      %v4152 = vshll.u32 %v4105, 16
      %v4154 = vrot.slane %v4152, 1
      %v4155 = vor.u32 %v4150, %v4154
      %4156 = vrot.lane.b32.xlu0 %v4113, 32
      %v4157 = vpop.permute.xlu0 %4156
      %4158 = vrot.lane.b32.xlu0 %v4120, 32
      %v4159 = vpop.permute.xlu0 %4158
      %4160 = vrot.lane.b32.xlu0 %v4127, 32
      %v4161 = vpop.permute.xlu0 %4160
      %4162 = vrot.lane.b32.xlu0 %v4134, 32
      %v4163 = vpop.permute.xlu0 %4162
      %4164 = vrot.lane.b32.xlu0 %v4141, 32
      %v4165 = vpop.permute.xlu0 %4164
      %4166 = vrot.lane.b32.xlu0 %v4148, 32
      %v4167 = vpop.permute.xlu0 %4166
      %4168 = vrot.lane.b32.xlu0 %v4155, 32
      %v4169 = vpop.permute.xlu0 %4168
      %v4177 = vrot.slane %v4099, 1
      %v4178 = vrot.slane %v4100, 1
      %v4179 = vrot.slane %v4101, 1
      %v4180 = vrot.slane %v4102, 1
      %v4181 = vrot.slane %v4103, 1
      %v4182 = vrot.slane %v4104, 1
      %v4183 = vrot.slane %v4105, 1
      %4184 = vrot.lane.b32.xlu0 %v4177, 64
      %v4185 = vpop.permute.xlu0 %4184
      %4186 = vrot.lane.b32.xlu0 %v4178, 64
      %v4187 = vpop.permute.xlu0 %4186
      %4188 = vrot.lane.b32.xlu0 %v4179, 64
      %v4189 = vpop.permute.xlu0 %4188
      %4190 = vrot.lane.b32.xlu0 %v4180, 64
      %v4191 = vpop.permute.xlu0 %4190
      %4192 = vrot.lane.b32.xlu0 %v4181, 64
      %v4193 = vpop.permute.xlu0 %4192
      %4194 = vrot.lane.b32.xlu0 %v4182, 64
      %v4195 = vpop.permute.xlu0 %4194
      %4196 = vrot.lane.b32.xlu0 %v4183, 64
      %v4197 = vpop.permute.xlu0 %4196
      %4199 = vrot.lane.b32.xlu0 %v4099, 96
      %v4200 = vpop.permute.xlu0 %4199
      %4201 = vrot.lane.b32.xlu0 %v4100, 96
      %v4202 = vpop.permute.xlu0 %4201
      %4203 = vrot.lane.b32.xlu0 %v4101, 96
      %v4204 = vpop.permute.xlu0 %4203
      %4205 = vrot.lane.b32.xlu0 %v4102, 96
      %v4206 = vpop.permute.xlu0 %4205
      %4207 = vrot.lane.b32.xlu0 %v4103, 96
      %v4208 = vpop.permute.xlu0 %4207
      %4209 = vrot.lane.b32.xlu0 %v4104, 96
      %v4210 = vpop.permute.xlu0 %4209
      %4211 = vrot.lane.b32.xlu0 %v4105, 96
      %v4212 = vpop.permute.xlu0 %4211
      %4213 = vrot.lane.b32.xlu0 %v4106, 96
      %v4214 = vpop.permute.xlu0 %4213
      %v4216 = vshrl.u32 %v4106, 16
      %v4218 = vshll.u32 %v4106, 16
      %v4220 = vrot.slane %v4218, 1
      %v4221 = vor.u32 %v4216, %v4220
      %v4222 = vrot.slane %v4106, 1
      %4223 = vrot.lane.b32.xlu0 %v4177, 32
      %v4224 = vpop.permute.xlu0 %4223
      %4225 = vrot.lane.b32.xlu0 %v4178, 32
      %v4226 = vpop.permute.xlu0 %4225
      %4227 = vrot.lane.b32.xlu0 %v4179, 32
      %v4228 = vpop.permute.xlu0 %4227
      %4229 = vrot.lane.b32.xlu0 %v4180, 32
      %v4230 = vpop.permute.xlu0 %4229
      %4231 = vrot.lane.b32.xlu0 %v4181, 32
      %v4232 = vpop.permute.xlu0 %4231
      %4233 = vrot.lane.b32.xlu0 %v4182, 32
      %v4234 = vpop.permute.xlu0 %4233
      %4235 = vrot.lane.b32.xlu0 %v4183, 32
      %v4236 = vpop.permute.xlu0 %4235
      %4237 = vrot.lane.b32.xlu0 %v4222, 32
      %v4238 = vpop.permute.xlu0 %4237
      %4239 = vrot.lane.b32.xlu0 %v4100, 64
      %v4240 = vpop.permute.xlu0 %4239
      %4241 = vrot.lane.b32.xlu0 %v4101, 64
      %v4242 = vpop.permute.xlu0 %4241
      %4243 = vrot.lane.b32.xlu0 %v4102, 64
      %v4244 = vpop.permute.xlu0 %4243
      %4245 = vrot.lane.b32.xlu0 %v4103, 64
      %v4246 = vpop.permute.xlu0 %4245
      %4247 = vrot.lane.b32.xlu0 %v4104, 64
      %v4248 = vpop.permute.xlu0 %4247
      %4249 = vrot.lane.b32.xlu0 %v4105, 64
      %v4250 = vpop.permute.xlu0 %4249
      %4251 = vrot.lane.b32.xlu0 %v4106, 64
      %v4252 = vpop.permute.xlu0 %4251
      %4253 = vrot.lane.b32.xlu0 %v4120, 96
      %v4254 = vpop.permute.xlu0 %4253
      %4255 = vrot.lane.b32.xlu0 %v4127, 96
      %v4256 = vpop.permute.xlu0 %4255
      %4257 = vrot.lane.b32.xlu0 %v4134, 96
      %v4258 = vpop.permute.xlu0 %4257
      %4259 = vrot.lane.b32.xlu0 %v4141, 96
      %v4260 = vpop.permute.xlu0 %4259
      %4261 = vrot.lane.b32.xlu0 %v4148, 96
      %v4262 = vpop.permute.xlu0 %4261
      %4263 = vrot.lane.b32.xlu0 %v4155, 96
      %v4264 = vpop.permute.xlu0 %4263
      %4265 = vrot.lane.b32.xlu0 %v4221, 96
      %v4266 = vpop.permute.xlu0 %4265
      %v4268 = vsel %vm2574, %v4099, %v4157
      %v4270 = vsel %vm2574, %v4100, %v4159
      %v4272 = vsel %vm2574, %v4101, %v4161
      %v4274 = vsel %vm2574, %v4102, %v4163
      %v4276 = vsel %vm2574, %v4103, %v4165
      %v4278 = vsel %vm2574, %v4104, %v4167
      %v4280 = vsel %vm2574, %v4105, %v4169
      %v4282 = vsel %vm2591, %v4268, %v4185
      %v4284 = vsel %vm2591, %v4270, %v4187
      %v4286 = vsel %vm2591, %v4272, %v4189
      %v4288 = vsel %vm2591, %v4274, %v4191
      %v4290 = vsel %vm2591, %v4276, %v4193
      %v4292 = vsel %vm2591, %v4278, %v4195
      %v4294 = vsel %vm2591, %v4280, %v4197
      %v4296 = vsel %vm2608, %v2593, %v4200
      %v4298 = vsel %vm2608, %v4282, %v4202
      %v4300 = vsel %vm2608, %v4284, %v4204
      %v4302 = vsel %vm2608, %v4286, %v4206
      %v4304 = vsel %vm2608, %v4288, %v4208
      %v4306 = vsel %vm2608, %v4290, %v4210
      %v4308 = vsel %vm2608, %v4292, %v4212
      %v4310 = vsel %vm2608, %v4294, %v4214
      %v4313 = vsel %vm2574, %v4113, %v4224
      %v4316 = vsel %vm2574, %v4120, %v4226
      %v4319 = vsel %vm2574, %v4127, %v4228
      %v4322 = vsel %vm2574, %v4134, %v4230
      %v4325 = vsel %vm2574, %v4141, %v4232
      %v4328 = vsel %vm2574, %v4148, %v4234
      %v4331 = vsel %vm2574, %v4155, %v4236
      %v4334 = vsel %vm2574, %v4221, %v4238
      %v4336 = vsel %vm2591, %v4313, %v4240
      %v4338 = vsel %vm2591, %v4316, %v4242
      %v4340 = vsel %vm2591, %v4319, %v4244
      %v4342 = vsel %vm2591, %v4322, %v4246
      %v4344 = vsel %vm2591, %v4325, %v4248
      %v4346 = vsel %vm2591, %v4328, %v4250
      %v4348 = vsel %vm2591, %v4331, %v4252
      %v4349 = vsel %vm2591, %v4334, %v2557
      %v4351 = vsel %vm2608, %v4336, %v4254
      %v4353 = vsel %vm2608, %v4338, %v4256
      %v4355 = vsel %vm2608, %v4340, %v4258
      %v4357 = vsel %vm2608, %v4342, %v4260
      %v4359 = vsel %vm2608, %v4344, %v4262
      %v4361 = vsel %vm2608, %v4346, %v4264
      %v4363 = vsel %vm2608, %v4348, %v4266
      %v4364 = vsel %vm2608, %v4349, %v2573
      %v4381 = vunpack.c.l.b16 %v4296
      %v4382 = vunpack.c.l.b16 %v4351
      %v4383 = vunpack.c.l.b16 %v4178
      %v4384 = vunpack.c.l.b16 %v4298
      %v4385 = vunpack.c.l.b16 %v4353
      %v4386 = vunpack.c.l.b16 %v4179
      %v4387 = vunpack.c.l.b16 %v4300
      %v4388 = vunpack.c.l.b16 %v4355
      %v4389 = vunpack.c.l.b16 %v4180
      %v4390 = vunpack.c.l.b16 %v4302
      %v4391 = vunpack.c.l.b16 %v4357
      %v4392 = vunpack.c.l.b16 %v4181
      %v4393 = vunpack.c.l.b16 %v4304
      %v4394 = vunpack.c.l.b16 %v4359
      %v4395 = vunpack.c.l.b16 %v4182
      %v4396 = vunpack.c.l.b16 %v4306
      %v4397 = vunpack.c.l.b16 %v4361
      %v4398 = vunpack.c.l.b16 %v4183
      %v4399 = vunpack.c.l.b16 %v4308
      %v4400 = vunpack.c.l.b16 %v4363
      %v4401 = vunpack.c.l.b16 %v4222
      %v4402 = vunpack.c.l.b16 %v4310
      %v4403 = vunpack.c.l.b16 %v4364
      %v4404 = vld [vmem:[%s3] sm:$0xf]
      %v4405 = vld [vmem:[%s3 + $0x4] sm:$0xf]
      %v4406 = vld [vmem:[%s3 + $0x8] sm:$0xf]
      %v4407 = vld [vmem:[%s3 + $0xc] sm:$0xf]
      %v4412 = vcombine.low %v861, %v862
      %v4413 = vcombine.low %v863, %v864
      %v4415 = vunpack.c.l.s4 1983009808
      %v4416 = vunpack.c.0.s8 %v4415
      %v4417 = vlaneseq
      %v4418 = vshrl.u32 %v4417, 7
      %v4419 = vsub.s32 %v4416, %v4418
      %v4420 = vrot.slane %v4412, %v4419
      %v4422 = vunpack.c.l.s4 1983009808
      %v4423 = vunpack.c.0.s8 %v4422
      %v4424 = vlaneseq
      %v4425 = vshrl.u32 %v4424, 7
      %v4426 = vsub.s32 %v4423, %v4425
      %v4427 = vrot.slane %v4413, %v4426
      %v4428 = vcombine.low %v4420, %v4427
      %v4433 = vunpack.c.l.b16 %v4404
      %v4434 = vunpack.c.l.b16 %v4405
      %v4435 = vunpack.c.l.b16 %v4406
      %v4436 = vunpack.c.l.b16 %v4407
      %v4437 = vpack.c.b16 %v4434, %v4433
      %v4438 = vpack.c.b16 %v4436, %v4435
      %v4442 = vsel %vm2574, %v4428, 0
      %4444 = vmatprep.subr.bf16.mxu0 0
      %4445 = vmatpush1.bf16.msra.mxu0 0
      %4446 = vmatprep.subr.bf16.mxu0 0
      %4447 = vmatpush1.bf16.msra.mxu0 0
      %4448 = vmatprep.subr.bf16.mxu0 0
      %4449 = vmatpush1.bf16.msra.mxu0 0
      %4450 = vmatprep.subr.bf16.mxu0 0
      %4451 = vmatpush1.bf16.msra.mxu0 0
      %4452 = vmatprep.subr.bf16.mxu0 0
      %4453 = vmatpush1.bf16.msra.mxu0 0
      %4454 = vmatprep.subr.bf16.mxu0 0
      %4455 = vmatpush1.bf16.msra.mxu0 0
      %4456 = vmatprep.subr.bf16.mxu0 0
      %4457 = vmatpush1.bf16.msra.mxu0 %v4438
      %4458 = vmatprep.subr.bf16.mxu0 0
      %4459 = vmatpush1.bf16.msra.mxu0 %v4437
      %4460 = vmatprep.subr.bf16.mxu0 0
      %4461 = vmatpush2.bf16.msra.mxu0 0
      %4462 = vmatprep.subr.bf16.mxu0 0
      %4463 = vmatpush2.bf16.msra.mxu0 0
      %4464 = vmatprep.subr.bf16.mxu0 0
      %4465 = vmatpush2.bf16.msra.mxu0 0
      %4466 = vmatprep.subr.bf16.mxu0 0
      %4467 = vmatpush2.bf16.msra.mxu0 0
      %4468 = vmatprep.subr.bf16.mxu0 0
      %4469 = vmatpush2.bf16.msra.mxu0 0
      %4470 = vmatprep.subr.bf16.mxu0 0
      %4471 = vmatpush2.bf16.msra.mxu0 0
      %4472 = vmatprep.subr.bf16.mxu0 0
      %4473 = vmatpush2.bf16.msra.mxu0 0
      %4474 = vmatprep.subr.bf16.mxu0 0
      %4475 = vmatpush2.bf16.msra.mxu0 0
      %4476 = vmatprep.mubr.bf16.mxu0 0
      %4477 = vmatmul.mubr.bf16.gmra.mxu0 %v4442
      %v4478 = vpop.f32.mrf.mxu0
      %v4479 = vadd.f32 0.0, %v4478
      %v4480 = vpop.f32.mrf.mxu0
      %v4481 = vpop.f32.mrf.mxu0
      %v4482 = vadd.f32 0.0, %v4481
      %v4483 = vpop.f32.mrf.mxu0
      %4484 = vdwg.mxu0
      %v4485 = vld [vmem:[%s5] sm:$0x1]
      %v4486 = vld [vmem:[%s6] sm:$0x1]
      %v4487 = vld [vmem:[%s4] sm:$0xf]
      %v4488 = vld [vmem:[%s4 + $0x4] sm:$0xf]
      %v4489 = vld [vmem:[%s4 + $0x8] sm:$0xf]
      %v4490 = vld [vmem:[%s4 + $0xc] sm:$0xf]
      %v4491 = vld [vmem:[%s4 + $0x10] sm:$0xf]
      %v4492 = vld [vmem:[%s4 + $0x14] sm:$0xf]
      %v4493 = vld [vmem:[%s4 + $0x18] sm:$0xf]
      %v4494 = vld [vmem:[%s4 + $0x1c] sm:$0xf]
      %v4495 = vld [vmem:[%s4 + $0x20] sm:$0xf]
      %v4496 = vld [vmem:[%s4 + $0x24] sm:$0xf]
      %v4497 = vld [vmem:[%s4 + $0x28] sm:$0xf]
      %v4498 = vld [vmem:[%s4 + $0x2c] sm:$0xf]
      %v4499 = vld [vmem:[%s4 + $0x30] sm:$0xf]
      %v4500 = vld [vmem:[%s4 + $0x34] sm:$0xf]
      %v4501 = vld [vmem:[%s4 + $0x38] sm:$0xf]
      %v4502 = vld [vmem:[%s4 + $0x3c] sm:$0xf]
      %v4503 = vld [vmem:[%s4 + $0x40] sm:$0xf]
      %v4504 = vld [vmem:[%s4 + $0x44] sm:$0xf]
      %v4505 = vld [vmem:[%s4 + $0x48] sm:$0xf]
      %v4506 = vld [vmem:[%s4 + $0x4c] sm:$0xf]
      %v4507 = vld [vmem:[%s4 + $0x50] sm:$0xf]
      %v4508 = vld [vmem:[%s4 + $0x54] sm:$0xf]
      %v4509 = vld [vmem:[%s4 + $0x58] sm:$0xf]
      %v4510 = vld [vmem:[%s4 + $0x5c] sm:$0xf]
      %v4511 = vld [vmem:[%s4 + $0x60] sm:$0xf]
      %v4512 = vld [vmem:[%s4 + $0x64] sm:$0xf]
      %v4513 = vld [vmem:[%s4 + $0x68] sm:$0xf]
      %v4514 = vld [vmem:[%s4 + $0x6c] sm:$0xf]
      %v4515 = vld [vmem:[%s4 + $0x70] sm:$0xf]
      %v4516 = vld [vmem:[%s4 + $0x74] sm:$0xf]
      %v4517 = vld [vmem:[%s4 + $0x78] sm:$0xf]
      %v4518 = vld [vmem:[%s4 + $0x7c] sm:$0xf]
      %v4519 = vld [vmem:[%s4 + $0x80] sm:$0xf]
      %v4520 = vld [vmem:[%s4 + $0x84] sm:$0xf]
      %v4521 = vld [vmem:[%s4 + $0x88] sm:$0xf]
      %v4522 = vld [vmem:[%s4 + $0x8c] sm:$0xf]
      %s4523 = scalar_lea.vmem %s4, 144
      %v4524 = vld [vmem:[%s4523] sm:$0xf]
      %v4525 = vld [vmem:[%s4523 + $0x4] sm:$0xf]
      %v4526 = vld [vmem:[%s4523 + $0x8] sm:$0xf]
      %v4527 = vld [vmem:[%s4523 + $0xc] sm:$0xf]
      %v4528 = vld [vmem:[%s4523 + $0x10] sm:$0xf]
      %v4529 = vld [vmem:[%s4523 + $0x14] sm:$0xf]
      %v4530 = vld [vmem:[%s4523 + $0x18] sm:$0xf]
      %v4531 = vld [vmem:[%s4523 + $0x1c] sm:$0xf]
      %v4532 = vld [vmem:[%s4523 + $0x20] sm:$0xf]
      %v4533 = vld [vmem:[%s4523 + $0x24] sm:$0xf]
      %v4534 = vld [vmem:[%s4523 + $0x28] sm:$0xf]
      %v4535 = vld [vmem:[%s4523 + $0x2c] sm:$0xf]
      %v4536 = vld [vmem:[%s4523 + $0x30] sm:$0xf]
      %v4537 = vld [vmem:[%s4523 + $0x34] sm:$0xf]
      %v4538 = vld [vmem:[%s4523 + $0x38] sm:$0xf]
      %v4539 = vld [vmem:[%s4523 + $0x3c] sm:$0xf]
      %v4540 = vld [vmem:[%s4523 + $0x40] sm:$0xf]
      %v4541 = vld [vmem:[%s4523 + $0x44] sm:$0xf]
      %v4542 = vld [vmem:[%s4523 + $0x48] sm:$0xf]
      %v4543 = vld [vmem:[%s4523 + $0x4c] sm:$0xf]
      %v4544 = vld [vmem:[%s4523 + $0x50] sm:$0xf]
      %v4545 = vld [vmem:[%s4523 + $0x54] sm:$0xf]
      %v4546 = vld [vmem:[%s4523 + $0x58] sm:$0xf]
      %v4547 = vld [vmem:[%s4523 + $0x5c] sm:$0xf]
      %v4548 = vld [vmem:[%s4523 + $0x60] sm:$0xf]
      %v4549 = vld [vmem:[%s4523 + $0x64] sm:$0xf]
      %v4550 = vld [vmem:[%s4523 + $0x68] sm:$0xf]
      %v4551 = vld [vmem:[%s4523 + $0x6c] sm:$0xf]
      %v4552 = vld [vmem:[%s4523 + $0x70] sm:$0xf]
      %v4553 = vld [vmem:[%s4523 + $0x74] sm:$0xf]
      %v4554 = vld [vmem:[%s4523 + $0x78] sm:$0xf]
      %v4555 = vld [vmem:[%s4523 + $0x7c] sm:$0xf]
      %v4556 = vld [vmem:[%s4523 + $0x80] sm:$0xf]
      %v4557 = vld [vmem:[%s4523 + $0x84] sm:$0xf]
      %v4558 = vld [vmem:[%s4523 + $0x88] sm:$0xf]
      %v4559 = vld [vmem:[%s4523 + $0x8c] sm:$0xf]
      %s4560 = scalar_lea.vmem %s4, 288
      %v4561 = vld [vmem:[%s4560] sm:$0xf]
      %v4562 = vld [vmem:[%s4560 + $0x4] sm:$0xf]
      %v4563 = vld [vmem:[%s4560 + $0x8] sm:$0xf]
      %v4564 = vld [vmem:[%s4560 + $0xc] sm:$0xf]
      %v4565 = vld [vmem:[%s4560 + $0x10] sm:$0xf]
      %v4566 = vld [vmem:[%s4560 + $0x14] sm:$0xf]
      %v4567 = vld [vmem:[%s4560 + $0x18] sm:$0xf]
      %v4568 = vld [vmem:[%s4560 + $0x1c] sm:$0xf]
      %v4569 = vld [vmem:[%s4560 + $0x20] sm:$0xf]
      %v4570 = vld [vmem:[%s4560 + $0x24] sm:$0xf]
      %v4571 = vld [vmem:[%s4560 + $0x28] sm:$0xf]
      %v4572 = vld [vmem:[%s4560 + $0x2c] sm:$0xf]
      %v4573 = vld [vmem:[%s4560 + $0x30] sm:$0xf]
      %v4574 = vld [vmem:[%s4560 + $0x34] sm:$0xf]
      %v4575 = vld [vmem:[%s4560 + $0x38] sm:$0xf]
      %v4576 = vld [vmem:[%s4560 + $0x3c] sm:$0xf]
      %v4577 = vld [vmem:[%s4560 + $0x40] sm:$0xf]
      %v4578 = vld [vmem:[%s4560 + $0x44] sm:$0xf]
      %v4579 = vld [vmem:[%s4560 + $0x48] sm:$0xf]
      %v4580 = vld [vmem:[%s4560 + $0x4c] sm:$0xf]
      %v4581 = vld [vmem:[%s4560 + $0x50] sm:$0xf]
      %v4582 = vld [vmem:[%s4560 + $0x54] sm:$0xf]
      %v4583 = vld [vmem:[%s4560 + $0x58] sm:$0xf]
      %v4584 = vld [vmem:[%s4560 + $0x5c] sm:$0xf]
      %v4585 = vld [vmem:[%s4560 + $0x60] sm:$0xf]
      %v4586 = vld [vmem:[%s4560 + $0x64] sm:$0xf]
      %v4587 = vld [vmem:[%s4560 + $0x68] sm:$0xf]
      %v4588 = vld [vmem:[%s4560 + $0x6c] sm:$0xf]
      %v4589 = vld [vmem:[%s4560 + $0x70] sm:$0xf]
      %v4590 = vld [vmem:[%s4560 + $0x74] sm:$0xf]
      %v4591 = vld [vmem:[%s4560 + $0x78] sm:$0xf]
      %v4592 = vld [vmem:[%s4560 + $0x7c] sm:$0xf]
      %v4593 = vld [vmem:[%s4560 + $0x80] sm:$0xf]
      %v4594 = vld [vmem:[%s4560 + $0x84] sm:$0xf]
      %v4595 = vld [vmem:[%s4560 + $0x88] sm:$0xf]
      %v4596 = vld [vmem:[%s4560 + $0x8c] sm:$0xf]
      %v4597 = vpack.c.b16 %v3262, %v3259
      %v4598 = vpack.c.b16 %v3263, %v3260
      %v4599 = vpack.c.b16 %v3264, %v3261
      %v4600 = vpack.c.b16 %v3268, %v3265
      %v4601 = vpack.c.b16 %v3269, %v3266
      %v4602 = vpack.c.b16 %v3270, %v3267
      %v4603 = vpack.c.b16 %v3274, %v3271
      %v4604 = vpack.c.b16 %v3275, %v3272
      %v4605 = vpack.c.b16 %v3276, %v3273
      %v4606 = vpack.c.b16 %v3280, %v3277
      %v4607 = vpack.c.b16 %v3281, %v3278
      %v4608 = vpack.c.b16 %v2720, %v3279
      %v4653 = vunpack.c.l.b16 %v4524
      %v4654 = vunpack.c.l.b16 %v4525
      %v4655 = vunpack.c.l.b16 %v4526
      %v4656 = vunpack.c.l.b16 %v4527
      %v4657 = vunpack.c.l.b16 %v4528
      %v4658 = vunpack.c.l.b16 %v4529
      %v4659 = vunpack.c.l.b16 %v4530
      %v4660 = vunpack.c.l.b16 %v4531
      %v4661 = vunpack.c.l.b16 %v4532
      %v4662 = vunpack.c.l.b16 %v4533
      %v4663 = vunpack.c.l.b16 %v4534
      %v4664 = vunpack.c.l.b16 %v4535
      %v4665 = vunpack.c.l.b16 %v4536
      %v4666 = vunpack.c.l.b16 %v4537
      %v4667 = vunpack.c.l.b16 %v4538
      %v4668 = vunpack.c.l.b16 %v4539
      %v4669 = vunpack.c.l.b16 %v4540
      %v4670 = vunpack.c.l.b16 %v4541
      %v4671 = vunpack.c.l.b16 %v4542
      %v4672 = vunpack.c.l.b16 %v4543
      %v4673 = vunpack.c.l.b16 %v4544
      %v4674 = vunpack.c.l.b16 %v4545
      %v4675 = vunpack.c.l.b16 %v4546
      %v4676 = vunpack.c.l.b16 %v4547
      %v4677 = vunpack.c.l.b16 %v4548
      %v4678 = vunpack.c.l.b16 %v4549
      %v4679 = vunpack.c.l.b16 %v4550
      %v4680 = vunpack.c.l.b16 %v4551
      %v4681 = vunpack.c.l.b16 %v4552
      %v4682 = vunpack.c.l.b16 %v4553
      %v4683 = vunpack.c.l.b16 %v4554
      %v4684 = vunpack.c.l.b16 %v4555
      %v4685 = vunpack.c.l.b16 %v4556
      %v4686 = vunpack.c.l.b16 %v4557
      %v4687 = vunpack.c.l.b16 %v4558
      %v4688 = vunpack.c.l.b16 %v4559
      %v4689 = vpack.c.b16 %v4654, %v4653
      %v4690 = vpack.c.b16 %v4656, %v4655
      %v4691 = vpack.c.b16 %v4658, %v4657
      %v4692 = vpack.c.b16 %v4660, %v4659
      %v4693 = vpack.c.b16 %v4662, %v4661
      %v4694 = vpack.c.b16 %v4664, %v4663
      %v4695 = vpack.c.b16 %v4666, %v4665
      %v4696 = vpack.c.b16 %v4668, %v4667
      %v4697 = vpack.c.b16 %v4670, %v4669
      %v4698 = vpack.c.b16 %v4672, %v4671
      %v4699 = vpack.c.b16 %v4674, %v4673
      %v4700 = vpack.c.b16 %v4676, %v4675
      %v4701 = vpack.c.b16 %v4678, %v4677
      %v4702 = vpack.c.b16 %v4680, %v4679
      %v4703 = vpack.c.b16 %v4682, %v4681
      %v4704 = vpack.c.b16 %v4684, %v4683
      %v4705 = vpack.c.b16 %v4686, %v4685
      %v4706 = vpack.c.b16 %v4688, %v4687
      %v4726 = vsel %vm2574, %v4599, 0
      %v4729 = vsel %vm2574, %v4602, 0
      %v4732 = vsel %vm2574, %v4605, 0
      %v4735 = vsel %vm2574, %v4608, 0
      %4737 = vmatprep.subr.bf16.mxu0 0
      %4738 = vmatpush1.bf16.msra.mxu0 %v4696
      %4739 = vmatprep.subr.bf16.mxu0 0
      %4740 = vmatpush1.bf16.msra.mxu0 %v4695
      %4741 = vmatprep.subr.bf16.mxu0 0
      %4742 = vmatpush1.bf16.msra.mxu0 %v4694
      %4743 = vmatprep.subr.bf16.mxu0 0
      %4744 = vmatpush1.bf16.msra.mxu0 %v4693
      %4745 = vmatprep.subr.bf16.mxu0 0
      %4746 = vmatpush1.bf16.msra.mxu0 %v4692
      %4747 = vmatprep.subr.bf16.mxu0 0
      %4748 = vmatpush1.bf16.msra.mxu0 %v4691
      %4749 = vmatprep.subr.bf16.mxu0 0
      %4750 = vmatpush1.bf16.msra.mxu0 %v4690
      %4751 = vmatprep.subr.bf16.mxu0 0
      %4752 = vmatpush1.bf16.msra.mxu0 %v4689
      %4753 = vmatprep.subr.bf16.mxu0 0
      %4754 = vmatpush2.bf16.msra.mxu0 %v4704
      %4755 = vmatprep.subr.bf16.mxu0 0
      %4756 = vmatpush2.bf16.msra.mxu0 %v4703
      %4757 = vmatprep.subr.bf16.mxu0 0
      %4758 = vmatpush2.bf16.msra.mxu0 %v4702
      %4759 = vmatprep.subr.bf16.mxu0 0
      %4760 = vmatpush2.bf16.msra.mxu0 %v4701
      %4761 = vmatprep.subr.bf16.mxu0 0
      %4762 = vmatpush2.bf16.msra.mxu0 %v4700
      %4763 = vmatprep.subr.bf16.mxu0 0
      %4764 = vmatpush2.bf16.msra.mxu0 %v4699
      %4765 = vmatprep.subr.bf16.mxu0 0
      %4766 = vmatpush2.bf16.msra.mxu0 %v4698
      %4767 = vmatprep.subr.bf16.mxu0 0
      %4768 = vmatpush2.bf16.msra.mxu0 %v4697
      %4769 = vmatprep.mubr.bf16.mxu0 %v4598
      %4770 = vmatmul.mubr.bf16.gmra.mxu0 %v4597
      %v4771 = vpop.f32.mrf.mxu0
      %v4772 = vadd.f32 0.0, %v4771
      %v4773 = vpop.f32.mrf.mxu0
      %v4774 = vpop.f32.mrf.mxu0
      %v4775 = vadd.f32 0.0, %v4774
      %v4776 = vpop.f32.mrf.mxu0
      %4777 = vmatprep.mubr.bf16.mxu0 %v4601
      %4778 = vmatmul.mubr.bf16.gmra.mxu0 %v4600
      %v4779 = vpop.f32.mrf.mxu0
      %v4780 = vadd.f32 0.0, %v4779
      %v4781 = vpop.f32.mrf.mxu0
      %v4782 = vpop.f32.mrf.mxu0
      %v4783 = vadd.f32 0.0, %v4782
      %v4784 = vpop.f32.mrf.mxu0
      %4785 = vmatprep.mubr.bf16.mxu0 %v4604
      %4786 = vmatmul.mubr.bf16.gmra.mxu0 %v4603
      %v4787 = vpop.f32.mrf.mxu0
      %v4788 = vadd.f32 0.0, %v4787
      %v4789 = vpop.f32.mrf.mxu0
      %v4790 = vpop.f32.mrf.mxu0
      %v4791 = vadd.f32 0.0, %v4790
      %v4792 = vpop.f32.mrf.mxu0
      %4793 = vmatprep.mubr.bf16.mxu0 %v4607
      %4794 = vmatmul.mubr.bf16.gmra.mxu0 %v4606
      %v4795 = vpop.f32.mrf.mxu0
      %v4796 = vadd.f32 0.0, %v4795
      %v4797 = vpop.f32.mrf.mxu0
      %v4798 = vpop.f32.mrf.mxu0
      %v4799 = vadd.f32 0.0, %v4798
      %v4800 = vpop.f32.mrf.mxu0
      %4801 = vdwg.mxu0
      %4802 = vmatprep.subr.bf16.mxu0 0
      %4803 = vmatpush1.bf16.msra.mxu0 0
      %4804 = vmatprep.subr.bf16.mxu0 0
      %4805 = vmatpush1.bf16.msra.mxu0 0
      %4806 = vmatprep.subr.bf16.mxu0 0
      %4807 = vmatpush1.bf16.msra.mxu0 0
      %4808 = vmatprep.subr.bf16.mxu0 0
      %4809 = vmatpush1.bf16.msra.mxu0 0
      %4810 = vmatprep.subr.bf16.mxu0 0
      %4811 = vmatpush1.bf16.msra.mxu0 0
      %4812 = vmatprep.subr.bf16.mxu0 0
      %4813 = vmatpush1.bf16.msra.mxu0 0
      %4814 = vmatprep.subr.bf16.mxu0 0
      %4815 = vmatpush1.bf16.msra.mxu0 %v4706
      %4816 = vmatprep.subr.bf16.mxu0 0
      %4817 = vmatpush1.bf16.msra.mxu0 %v4705
      %4818 = vmatprep.subr.bf16.mxu0 0
      %4819 = vmatpush2.bf16.msra.mxu0 0
      %4820 = vmatprep.subr.bf16.mxu0 0
      %4821 = vmatpush2.bf16.msra.mxu0 0
      %4822 = vmatprep.subr.bf16.mxu0 0
      %4823 = vmatpush2.bf16.msra.mxu0 0
      %4824 = vmatprep.subr.bf16.mxu0 0
      %4825 = vmatpush2.bf16.msra.mxu0 0
      %4826 = vmatprep.subr.bf16.mxu0 0
      %4827 = vmatpush2.bf16.msra.mxu0 0
      %4828 = vmatprep.subr.bf16.mxu0 0
      %4829 = vmatpush2.bf16.msra.mxu0 0
      %4830 = vmatprep.subr.bf16.mxu0 0
      %4831 = vmatpush2.bf16.msra.mxu0 0
      %4832 = vmatprep.subr.bf16.mxu0 0
      %4833 = vmatpush2.bf16.msra.mxu0 0
      %4834 = vmatprep.mubr.bf16.mxu0 0
      %4835 = vmatmul.mubr.bf16.gmra.mxu0 %v4726
      %v4836 = vpop.f32.mrf.mxu0
      %v4837 = vadd.f32 %v4772, %v4836
      %v4838 = vpop.f32.mrf.mxu0
      %v4839 = vpop.f32.mrf.mxu0
      %v4840 = vadd.f32 %v4775, %v4839
      %v4841 = vpop.f32.mrf.mxu0
      %4842 = vmatprep.mubr.bf16.mxu0 0
      %4843 = vmatmul.mubr.bf16.gmra.mxu0 %v4729
      %v4844 = vpop.f32.mrf.mxu0
      %v4845 = vadd.f32 %v4780, %v4844
      %v4846 = vpop.f32.mrf.mxu0
      %v4847 = vpop.f32.mrf.mxu0
      %v4848 = vadd.f32 %v4783, %v4847
      %v4849 = vpop.f32.mrf.mxu0
      %4850 = vmatprep.mubr.bf16.mxu0 0
      %4851 = vmatmul.mubr.bf16.gmra.mxu0 %v4732
      %v4852 = vpop.f32.mrf.mxu0
      %v4853 = vadd.f32 %v4788, %v4852
      %v4854 = vpop.f32.mrf.mxu0
      %v4855 = vpop.f32.mrf.mxu0
      %v4856 = vadd.f32 %v4791, %v4855
      %v4857 = vpop.f32.mrf.mxu0
      %4858 = vmatprep.mubr.bf16.mxu0 0
      %4859 = vmatmul.mubr.bf16.gmra.mxu0 %v4735
      %v4860 = vpop.f32.mrf.mxu0
      %v4861 = vadd.f32 %v4796, %v4860
      %v4862 = vpop.f32.mrf.mxu0
      %v4863 = vpop.f32.mrf.mxu0
      %v4864 = vadd.f32 %v4799, %v4863
      %v4865 = vpop.f32.mrf.mxu0
      %4866 = vdwg.mxu0
      %v4867 = vpack.c.b16 %v2700, %v2697
      %v4868 = vpack.c.b16 %v2701, %v2698
      %v4869 = vpack.c.b16 %v2702, %v2699
      %v4870 = vpack.c.b16 %v2706, %v2703
      %v4871 = vpack.c.b16 %v2707, %v2704
      %v4872 = vpack.c.b16 %v2708, %v2705
      %v4873 = vpack.c.b16 %v2712, %v2709
      %v4874 = vpack.c.b16 %v2713, %v2710
      %v4875 = vpack.c.b16 %v2714, %v2711
      %v4876 = vpack.c.b16 %v2718, %v2715
      %v4877 = vpack.c.b16 %v2719, %v2716
      %v4878 = vpack.c.b16 %v2720, %v2717
      %v4923 = vunpack.c.l.b16 %v4487
      %v4924 = vunpack.c.l.b16 %v4488
      %v4925 = vunpack.c.l.b16 %v4489
      %v4926 = vunpack.c.l.b16 %v4490
      %v4927 = vunpack.c.l.b16 %v4491
      %v4928 = vunpack.c.l.b16 %v4492
      %v4929 = vunpack.c.l.b16 %v4493
      %v4930 = vunpack.c.l.b16 %v4494
      %v4931 = vunpack.c.l.b16 %v4495
      %v4932 = vunpack.c.l.b16 %v4496
      %v4933 = vunpack.c.l.b16 %v4497
      %v4934 = vunpack.c.l.b16 %v4498
      %v4935 = vunpack.c.l.b16 %v4499
      %v4936 = vunpack.c.l.b16 %v4500
      %v4937 = vunpack.c.l.b16 %v4501
      %v4938 = vunpack.c.l.b16 %v4502
      %v4939 = vunpack.c.l.b16 %v4503
      %v4940 = vunpack.c.l.b16 %v4504
      %v4941 = vunpack.c.l.b16 %v4505
      %v4942 = vunpack.c.l.b16 %v4506
      %v4943 = vunpack.c.l.b16 %v4507
      %v4944 = vunpack.c.l.b16 %v4508
      %v4945 = vunpack.c.l.b16 %v4509
      %v4946 = vunpack.c.l.b16 %v4510
      %v4947 = vunpack.c.l.b16 %v4511
      %v4948 = vunpack.c.l.b16 %v4512
      %v4949 = vunpack.c.l.b16 %v4513
      %v4950 = vunpack.c.l.b16 %v4514
      %v4951 = vunpack.c.l.b16 %v4515
      %v4952 = vunpack.c.l.b16 %v4516
      %v4953 = vunpack.c.l.b16 %v4517
      %v4954 = vunpack.c.l.b16 %v4518
      %v4955 = vunpack.c.l.b16 %v4519
      %v4956 = vunpack.c.l.b16 %v4520
      %v4957 = vunpack.c.l.b16 %v4521
      %v4958 = vunpack.c.l.b16 %v4522
      %v4959 = vpack.c.b16 %v4924, %v4923
      %v4960 = vpack.c.b16 %v4926, %v4925
      %v4961 = vpack.c.b16 %v4928, %v4927
      %v4962 = vpack.c.b16 %v4930, %v4929
      %v4963 = vpack.c.b16 %v4932, %v4931
      %v4964 = vpack.c.b16 %v4934, %v4933
      %v4965 = vpack.c.b16 %v4936, %v4935
      %v4966 = vpack.c.b16 %v4938, %v4937
      %v4967 = vpack.c.b16 %v4940, %v4939
      %v4968 = vpack.c.b16 %v4942, %v4941
      %v4969 = vpack.c.b16 %v4944, %v4943
      %v4970 = vpack.c.b16 %v4946, %v4945
      %v4971 = vpack.c.b16 %v4948, %v4947
      %v4972 = vpack.c.b16 %v4950, %v4949
      %v4973 = vpack.c.b16 %v4952, %v4951
      %v4974 = vpack.c.b16 %v4954, %v4953
      %v4975 = vpack.c.b16 %v4956, %v4955
      %v4976 = vpack.c.b16 %v4958, %v4957
      %v4996 = vsel %vm2574, %v4869, 0
      %v4999 = vsel %vm2574, %v4872, 0
      %v5002 = vsel %vm2574, %v4875, 0
      %v5005 = vsel %vm2574, %v4878, 0
      %5007 = vmatprep.subr.bf16.mxu0 0
      %5008 = vmatpush1.bf16.msra.mxu0 %v4966
      %5009 = vmatprep.subr.bf16.mxu0 0
      %5010 = vmatpush1.bf16.msra.mxu0 %v4965
      %5011 = vmatprep.subr.bf16.mxu0 0
      %5012 = vmatpush1.bf16.msra.mxu0 %v4964
      %5013 = vmatprep.subr.bf16.mxu0 0
      %5014 = vmatpush1.bf16.msra.mxu0 %v4963
      %5015 = vmatprep.subr.bf16.mxu0 0
      %5016 = vmatpush1.bf16.msra.mxu0 %v4962
      %5017 = vmatprep.subr.bf16.mxu0 0
      %5018 = vmatpush1.bf16.msra.mxu0 %v4961
      %5019 = vmatprep.subr.bf16.mxu0 0
      %5020 = vmatpush1.bf16.msra.mxu0 %v4960
      %5021 = vmatprep.subr.bf16.mxu0 0
      %5022 = vmatpush1.bf16.msra.mxu0 %v4959
      %5023 = vmatprep.subr.bf16.mxu0 0
      %5024 = vmatpush2.bf16.msra.mxu0 %v4974
      %5025 = vmatprep.subr.bf16.mxu0 0
      %5026 = vmatpush2.bf16.msra.mxu0 %v4973
      %5027 = vmatprep.subr.bf16.mxu0 0
      %5028 = vmatpush2.bf16.msra.mxu0 %v4972
      %5029 = vmatprep.subr.bf16.mxu0 0
      %5030 = vmatpush2.bf16.msra.mxu0 %v4971
      %5031 = vmatprep.subr.bf16.mxu0 0
      %5032 = vmatpush2.bf16.msra.mxu0 %v4970
      %5033 = vmatprep.subr.bf16.mxu0 0
      %5034 = vmatpush2.bf16.msra.mxu0 %v4969
      %5035 = vmatprep.subr.bf16.mxu0 0
      %5036 = vmatpush2.bf16.msra.mxu0 %v4968
      %5037 = vmatprep.subr.bf16.mxu0 0
      %5038 = vmatpush2.bf16.msra.mxu0 %v4967
      %5039 = vmatprep.mubr.bf16.mxu0 %v4868
      %5040 = vmatmul.mubr.bf16.gmra.mxu0 %v4867
      %v5041 = vpop.f32.mrf.mxu0
      %v5042 = vadd.f32 %v4837, %v5041
      %v5043 = vpop.f32.mrf.mxu0
      %v5044 = vpop.f32.mrf.mxu0
      %v5045 = vadd.f32 %v4840, %v5044
      %v5046 = vpop.f32.mrf.mxu0
      %5047 = vmatprep.mubr.bf16.mxu0 %v4871
      %5048 = vmatmul.mubr.bf16.gmra.mxu0 %v4870
      %v5049 = vpop.f32.mrf.mxu0
      %v5050 = vadd.f32 %v4845, %v5049
      %v5051 = vpop.f32.mrf.mxu0
      %v5052 = vpop.f32.mrf.mxu0
      %v5053 = vadd.f32 %v4848, %v5052
      %v5054 = vpop.f32.mrf.mxu0
      %5055 = vmatprep.mubr.bf16.mxu0 %v4874
      %5056 = vmatmul.mubr.bf16.gmra.mxu0 %v4873
      %v5057 = vpop.f32.mrf.mxu0
      %v5058 = vadd.f32 %v4853, %v5057
      %v5059 = vpop.f32.mrf.mxu0
      %v5060 = vpop.f32.mrf.mxu0
      %v5061 = vadd.f32 %v4856, %v5060
      %v5062 = vpop.f32.mrf.mxu0
      %5063 = vmatprep.mubr.bf16.mxu0 %v4877
      %5064 = vmatmul.mubr.bf16.gmra.mxu0 %v4876
      %v5065 = vpop.f32.mrf.mxu0
      %v5066 = vadd.f32 %v4861, %v5065
      %v5067 = vpop.f32.mrf.mxu0
      %v5068 = vpop.f32.mrf.mxu0
      %v5069 = vadd.f32 %v4864, %v5068
      %v5070 = vpop.f32.mrf.mxu0
      %5071 = vdwg.mxu0
      %5072 = vmatprep.subr.bf16.mxu0 0
      %5073 = vmatpush1.bf16.msra.mxu0 0
      %5074 = vmatprep.subr.bf16.mxu0 0
      %5075 = vmatpush1.bf16.msra.mxu0 0
      %5076 = vmatprep.subr.bf16.mxu0 0
      %5077 = vmatpush1.bf16.msra.mxu0 0
      %5078 = vmatprep.subr.bf16.mxu0 0
      %5079 = vmatpush1.bf16.msra.mxu0 0
      %5080 = vmatprep.subr.bf16.mxu0 0
      %5081 = vmatpush1.bf16.msra.mxu0 0
      %5082 = vmatprep.subr.bf16.mxu0 0
      %5083 = vmatpush1.bf16.msra.mxu0 0
      %5084 = vmatprep.subr.bf16.mxu0 0
      %5085 = vmatpush1.bf16.msra.mxu0 %v4976
      %5086 = vmatprep.subr.bf16.mxu0 0
      %5087 = vmatpush1.bf16.msra.mxu0 %v4975
      %5088 = vmatprep.subr.bf16.mxu0 0
      %5089 = vmatpush2.bf16.msra.mxu0 0
      %5090 = vmatprep.subr.bf16.mxu0 0
      %5091 = vmatpush2.bf16.msra.mxu0 0
      %5092 = vmatprep.subr.bf16.mxu0 0
      %5093 = vmatpush2.bf16.msra.mxu0 0
      %5094 = vmatprep.subr.bf16.mxu0 0
      %5095 = vmatpush2.bf16.msra.mxu0 0
      %5096 = vmatprep.subr.bf16.mxu0 0
      %5097 = vmatpush2.bf16.msra.mxu0 0
      %5098 = vmatprep.subr.bf16.mxu0 0
      %5099 = vmatpush2.bf16.msra.mxu0 0
      %5100 = vmatprep.subr.bf16.mxu0 0
      %5101 = vmatpush2.bf16.msra.mxu0 0
      %5102 = vmatprep.subr.bf16.mxu0 0
      %5103 = vmatpush2.bf16.msra.mxu0 0
      %5104 = vmatprep.mubr.bf16.mxu0 0
      %5105 = vmatmul.mubr.bf16.gmra.mxu0 %v4996
      %v5106 = vpop.f32.mrf.mxu0
      %v5107 = vadd.f32 %v5042, %v5106
      %v5108 = vpop.f32.mrf.mxu0
      %v5109 = vpop.f32.mrf.mxu0
      %v5110 = vadd.f32 %v5045, %v5109
      %v5111 = vpop.f32.mrf.mxu0
      %5112 = vmatprep.mubr.bf16.mxu0 0
      %5113 = vmatmul.mubr.bf16.gmra.mxu0 %v4999
      %v5114 = vpop.f32.mrf.mxu0
      %v5115 = vadd.f32 %v5050, %v5114
      %v5116 = vpop.f32.mrf.mxu0
      %v5117 = vpop.f32.mrf.mxu0
      %v5118 = vadd.f32 %v5053, %v5117
      %v5119 = vpop.f32.mrf.mxu0
      %5120 = vmatprep.mubr.bf16.mxu0 0
      %5121 = vmatmul.mubr.bf16.gmra.mxu0 %v5002
      %v5122 = vpop.f32.mrf.mxu0
      %v5123 = vadd.f32 %v5058, %v5122
      %v5124 = vpop.f32.mrf.mxu0
      %v5125 = vpop.f32.mrf.mxu0
      %v5126 = vadd.f32 %v5061, %v5125
      %v5127 = vpop.f32.mrf.mxu0
      %5128 = vmatprep.mubr.bf16.mxu0 0
      %5129 = vmatmul.mubr.bf16.gmra.mxu0 %v5005
      %v5130 = vpop.f32.mrf.mxu0
      %v5131 = vadd.f32 %v5066, %v5130
      %v5132 = vpop.f32.mrf.mxu0
      %v5133 = vpop.f32.mrf.mxu0
      %v5134 = vadd.f32 %v5069, %v5133
      %v5135 = vpop.f32.mrf.mxu0
      %5136 = vdwg.mxu0
      %v5137 = vpack.c.b16 %v3823, %v3820
      %v5138 = vpack.c.b16 %v3824, %v3821
      %v5139 = vpack.c.b16 %v3825, %v3822
      %v5140 = vpack.c.b16 %v3829, %v3826
      %v5141 = vpack.c.b16 %v3830, %v3827
      %v5142 = vpack.c.b16 %v3831, %v3828
      %v5143 = vpack.c.b16 %v3835, %v3832
      %v5144 = vpack.c.b16 %v3836, %v3833
      %v5145 = vpack.c.b16 %v3837, %v3834
      %v5146 = vpack.c.b16 %v3841, %v3838
      %v5147 = vpack.c.b16 %v3842, %v3839
      %v5148 = vpack.c.b16 %v2720, %v3840
      %v5193 = vunpack.c.l.b16 %v4561
      %v5194 = vunpack.c.l.b16 %v4562
      %v5195 = vunpack.c.l.b16 %v4563
      %v5196 = vunpack.c.l.b16 %v4564
      %v5197 = vunpack.c.l.b16 %v4565
      %v5198 = vunpack.c.l.b16 %v4566
      %v5199 = vunpack.c.l.b16 %v4567
      %v5200 = vunpack.c.l.b16 %v4568
      %v5201 = vunpack.c.l.b16 %v4569
      %v5202 = vunpack.c.l.b16 %v4570
      %v5203 = vunpack.c.l.b16 %v4571
      %v5204 = vunpack.c.l.b16 %v4572
      %v5205 = vunpack.c.l.b16 %v4573
      %v5206 = vunpack.c.l.b16 %v4574
      %v5207 = vunpack.c.l.b16 %v4575
      %v5208 = vunpack.c.l.b16 %v4576
      %v5209 = vunpack.c.l.b16 %v4577
      %v5210 = vunpack.c.l.b16 %v4578
      %v5211 = vunpack.c.l.b16 %v4579
      %v5212 = vunpack.c.l.b16 %v4580
      %v5213 = vunpack.c.l.b16 %v4581
      %v5214 = vunpack.c.l.b16 %v4582
      %v5215 = vunpack.c.l.b16 %v4583
      %v5216 = vunpack.c.l.b16 %v4584
      %v5217 = vunpack.c.l.b16 %v4585
      %v5218 = vunpack.c.l.b16 %v4586
      %v5219 = vunpack.c.l.b16 %v4587
      %v5220 = vunpack.c.l.b16 %v4588
      %v5221 = vunpack.c.l.b16 %v4589
      %v5222 = vunpack.c.l.b16 %v4590
      %v5223 = vunpack.c.l.b16 %v4591
      %v5224 = vunpack.c.l.b16 %v4592
      %v5225 = vunpack.c.l.b16 %v4593
      %v5226 = vunpack.c.l.b16 %v4594
      %v5227 = vunpack.c.l.b16 %v4595
      %v5228 = vunpack.c.l.b16 %v4596
      %v5229 = vpack.c.b16 %v5194, %v5193
      %v5230 = vpack.c.b16 %v5196, %v5195
      %v5231 = vpack.c.b16 %v5198, %v5197
      %v5232 = vpack.c.b16 %v5200, %v5199
      %v5233 = vpack.c.b16 %v5202, %v5201
      %v5234 = vpack.c.b16 %v5204, %v5203
      %v5235 = vpack.c.b16 %v5206, %v5205
      %v5236 = vpack.c.b16 %v5208, %v5207
      %v5237 = vpack.c.b16 %v5210, %v5209
      %v5238 = vpack.c.b16 %v5212, %v5211
      %v5239 = vpack.c.b16 %v5214, %v5213
      %v5240 = vpack.c.b16 %v5216, %v5215
      %v5241 = vpack.c.b16 %v5218, %v5217
      %v5242 = vpack.c.b16 %v5220, %v5219
      %v5243 = vpack.c.b16 %v5222, %v5221
      %v5244 = vpack.c.b16 %v5224, %v5223
      %v5245 = vpack.c.b16 %v5226, %v5225
      %v5246 = vpack.c.b16 %v5228, %v5227
      %v5266 = vsel %vm2574, %v5139, 0
      %v5269 = vsel %vm2574, %v5142, 0
      %v5272 = vsel %vm2574, %v5145, 0
      %v5275 = vsel %vm2574, %v5148, 0
      %5277 = vmatprep.subr.bf16.mxu0 0
      %5278 = vmatpush1.bf16.msra.mxu0 %v5236
      %5279 = vmatprep.subr.bf16.mxu0 0
      %5280 = vmatpush1.bf16.msra.mxu0 %v5235
      %5281 = vmatprep.subr.bf16.mxu0 0
      %5282 = vmatpush1.bf16.msra.mxu0 %v5234
      %5283 = vmatprep.subr.bf16.mxu0 0
      %5284 = vmatpush1.bf16.msra.mxu0 %v5233
      %5285 = vmatprep.subr.bf16.mxu0 0
      %5286 = vmatpush1.bf16.msra.mxu0 %v5232
      %5287 = vmatprep.subr.bf16.mxu0 0
      %5288 = vmatpush1.bf16.msra.mxu0 %v5231
      %5289 = vmatprep.subr.bf16.mxu0 0
      %5290 = vmatpush1.bf16.msra.mxu0 %v5230
      %5291 = vmatprep.subr.bf16.mxu0 0
      %5292 = vmatpush1.bf16.msra.mxu0 %v5229
      %5293 = vmatprep.subr.bf16.mxu0 0
      %5294 = vmatpush2.bf16.msra.mxu0 %v5244
      %5295 = vmatprep.subr.bf16.mxu0 0
      %5296 = vmatpush2.bf16.msra.mxu0 %v5243
      %5297 = vmatprep.subr.bf16.mxu0 0
      %5298 = vmatpush2.bf16.msra.mxu0 %v5242
      %5299 = vmatprep.subr.bf16.mxu0 0
      %5300 = vmatpush2.bf16.msra.mxu0 %v5241
      %5301 = vmatprep.subr.bf16.mxu0 0
      %5302 = vmatpush2.bf16.msra.mxu0 %v5240
      %5303 = vmatprep.subr.bf16.mxu0 0
      %5304 = vmatpush2.bf16.msra.mxu0 %v5239
      %5305 = vmatprep.subr.bf16.mxu0 0
      %5306 = vmatpush2.bf16.msra.mxu0 %v5238
      %5307 = vmatprep.subr.bf16.mxu0 0
      %5308 = vmatpush2.bf16.msra.mxu0 %v5237
      %5309 = vmatprep.mubr.bf16.mxu0 %v5138
      %5310 = vmatmul.mubr.bf16.gmra.mxu0 %v5137
      %v5311 = vpop.f32.mrf.mxu0
      %v5312 = vadd.f32 0.0, %v5311
      %v5313 = vpop.f32.mrf.mxu0
      %v5314 = vpop.f32.mrf.mxu0
      %v5315 = vadd.f32 0.0, %v5314
      %v5316 = vpop.f32.mrf.mxu0
      %5317 = vmatprep.mubr.bf16.mxu0 %v5141
      %5318 = vmatmul.mubr.bf16.gmra.mxu0 %v5140
      %v5319 = vpop.f32.mrf.mxu0
      %v5320 = vadd.f32 0.0, %v5319
      %v5321 = vpop.f32.mrf.mxu0
      %v5322 = vpop.f32.mrf.mxu0
      %v5323 = vadd.f32 0.0, %v5322
      %v5324 = vpop.f32.mrf.mxu0
      %5325 = vmatprep.mubr.bf16.mxu0 %v5144
      %5326 = vmatmul.mubr.bf16.gmra.mxu0 %v5143
      %v5327 = vpop.f32.mrf.mxu0
      %v5328 = vadd.f32 0.0, %v5327
      %v5329 = vpop.f32.mrf.mxu0
      %v5330 = vpop.f32.mrf.mxu0
      %v5331 = vadd.f32 0.0, %v5330
      %v5332 = vpop.f32.mrf.mxu0
      %5333 = vmatprep.mubr.bf16.mxu0 %v5147
      %5334 = vmatmul.mubr.bf16.gmra.mxu0 %v5146
      %v5335 = vpop.f32.mrf.mxu0
      %v5336 = vadd.f32 0.0, %v5335
      %v5337 = vpop.f32.mrf.mxu0
      %v5338 = vpop.f32.mrf.mxu0
      %v5339 = vadd.f32 0.0, %v5338
      %v5340 = vpop.f32.mrf.mxu0
      %5341 = vdwg.mxu0
      %5342 = vmatprep.subr.bf16.mxu0 0
      %5343 = vmatpush1.bf16.msra.mxu0 0
      %5344 = vmatprep.subr.bf16.mxu0 0
      %5345 = vmatpush1.bf16.msra.mxu0 0
      %5346 = vmatprep.subr.bf16.mxu0 0
      %5347 = vmatpush1.bf16.msra.mxu0 0
      %5348 = vmatprep.subr.bf16.mxu0 0
      %5349 = vmatpush1.bf16.msra.mxu0 0
      %5350 = vmatprep.subr.bf16.mxu0 0
      %5351 = vmatpush1.bf16.msra.mxu0 0
      %5352 = vmatprep.subr.bf16.mxu0 0
      %5353 = vmatpush1.bf16.msra.mxu0 0
      %5354 = vmatprep.subr.bf16.mxu0 0
      %5355 = vmatpush1.bf16.msra.mxu0 %v5246
      %5356 = vmatprep.subr.bf16.mxu0 0
      %5357 = vmatpush1.bf16.msra.mxu0 %v5245
      %5358 = vmatprep.subr.bf16.mxu0 0
      %5359 = vmatpush2.bf16.msra.mxu0 0
      %5360 = vmatprep.subr.bf16.mxu0 0
      %5361 = vmatpush2.bf16.msra.mxu0 0
      %5362 = vmatprep.subr.bf16.mxu0 0
      %5363 = vmatpush2.bf16.msra.mxu0 0
      %5364 = vmatprep.subr.bf16.mxu0 0
      %5365 = vmatpush2.bf16.msra.mxu0 0
      %5366 = vmatprep.subr.bf16.mxu0 0
      %5367 = vmatpush2.bf16.msra.mxu0 0
      %5368 = vmatprep.subr.bf16.mxu0 0
      %5369 = vmatpush2.bf16.msra.mxu0 0
      %5370 = vmatprep.subr.bf16.mxu0 0
      %5371 = vmatpush2.bf16.msra.mxu0 0
      %5372 = vmatprep.subr.bf16.mxu0 0
      %5373 = vmatpush2.bf16.msra.mxu0 0
      %5374 = vmatprep.mubr.bf16.mxu0 0
      %5375 = vmatmul.mubr.bf16.gmra.mxu0 %v5266
      %v5376 = vpop.f32.mrf.mxu0
      %v5377 = vadd.f32 %v5312, %v5376
      %v5378 = vpop.f32.mrf.mxu0
      %v5379 = vpop.f32.mrf.mxu0
      %v5380 = vadd.f32 %v5315, %v5379
      %v5381 = vpop.f32.mrf.mxu0
      %5382 = vmatprep.mubr.bf16.mxu0 0
      %5383 = vmatmul.mubr.bf16.gmra.mxu0 %v5269
      %v5384 = vpop.f32.mrf.mxu0
      %v5385 = vadd.f32 %v5320, %v5384
      %v5386 = vpop.f32.mrf.mxu0
      %v5387 = vpop.f32.mrf.mxu0
      %v5388 = vadd.f32 %v5323, %v5387
      %v5389 = vpop.f32.mrf.mxu0
      %5390 = vmatprep.mubr.bf16.mxu0 0
      %5391 = vmatmul.mubr.bf16.gmra.mxu0 %v5272
      %v5392 = vpop.f32.mrf.mxu0
      %v5393 = vadd.f32 %v5328, %v5392
      %v5394 = vpop.f32.mrf.mxu0
      %v5395 = vpop.f32.mrf.mxu0
      %v5396 = vadd.f32 %v5331, %v5395
      %v5397 = vpop.f32.mrf.mxu0
      %5398 = vmatprep.mubr.bf16.mxu0 0
      %5399 = vmatmul.mubr.bf16.gmra.mxu0 %v5275
      %v5400 = vpop.f32.mrf.mxu0
      %v5401 = vadd.f32 %v5336, %v5400
      %v5402 = vpop.f32.mrf.mxu0
      %v5403 = vpop.f32.mrf.mxu0
      %v5404 = vadd.f32 %v5339, %v5403
      %v5405 = vpop.f32.mrf.mxu0
      %5406 = vdwg.mxu0
      %v5407 = vadd.f32 %v5107, %v5377
      %v5408 = vadd.f32 %v5110, %v5380
      %v5409 = vadd.f32 %v5115, %v5385
      %v5410 = vadd.f32 %v5118, %v5388
      %v5411 = vadd.f32 %v5123, %v5393
      %v5412 = vadd.f32 %v5126, %v5396
      %v5413 = vadd.f32 %v5131, %v5401
      %v5414 = vadd.f32 %v5134, %v5404
      %v5417 = vcombine.high %v4479, %v4479
      %v5419 = vunpack.c.l.s4 1966171168
      %v5420 = vunpack.c.0.s8 %v5419
      %v5421 = vlaneseq
      %v5422 = vshrl.u32 %v5421, 7
      %v5423 = vsub.s32 %v5420, %v5422
      %v5424 = vrot.slane %v4479, %v5423
      %v5426 = vunpack.c.l.s4 1966171168
      %v5427 = vunpack.c.0.s8 %v5426
      %v5428 = vlaneseq
      %v5429 = vshrl.u32 %v5428, 7
      %v5430 = vsub.s32 %v5427, %v5429
      %v5431 = vrot.slane %v5417, %v5430
      %v5432 = vcombine.high %v5424, %v5424
      %v5433 = vcombine.high %v5431, %v5431
      %v5435 = vunpack.c.l.s4 1966171168
      %v5436 = vunpack.c.0.s8 %v5435
      %v5437 = vlaneseq
      %v5438 = vshrl.u32 %v5437, 7
      %v5439 = vsub.s32 %v5436, %v5438
      %v5440 = vrot.slane %v5424, %v5439
      %v5442 = vunpack.c.l.s4 1966171168
      %v5443 = vunpack.c.0.s8 %v5442
      %v5444 = vlaneseq
      %v5445 = vshrl.u32 %v5444, 7
      %v5446 = vsub.s32 %v5443, %v5445
      %v5447 = vrot.slane %v5431, %v5446
      %v5449 = vunpack.c.l.s4 1966171168
      %v5450 = vunpack.c.0.s8 %v5449
      %v5451 = vlaneseq
      %v5452 = vshrl.u32 %v5451, 7
      %v5453 = vsub.s32 %v5450, %v5452
      %v5454 = vrot.slane %v5432, %v5453
      %v5456 = vunpack.c.l.s4 1966171168
      %v5457 = vunpack.c.0.s8 %v5456
      %v5458 = vlaneseq
      %v5459 = vshrl.u32 %v5458, 7
      %v5460 = vsub.s32 %v5457, %v5459
      %v5461 = vrot.slane %v5433, %v5460
      %v5462 = vcombine.high %v5440, %v5440
      %v5463 = vcombine.high %v5447, %v5447
      %v5464 = vcombine.high %v5454, %v5454
      %v5465 = vcombine.high %v5461, %v5461
      %v5466 = vcombine.high %v4482, %v4482
      %v5468 = vunpack.c.l.s4 1966171168
      %v5469 = vunpack.c.0.s8 %v5468
      %v5470 = vlaneseq
      %v5471 = vshrl.u32 %v5470, 7
      %v5472 = vsub.s32 %v5469, %v5471
      %v5473 = vrot.slane %v4482, %v5472
      %v5475 = vunpack.c.l.s4 1966171168
      %v5476 = vunpack.c.0.s8 %v5475
      %v5477 = vlaneseq
      %v5478 = vshrl.u32 %v5477, 7
      %v5479 = vsub.s32 %v5476, %v5478
      %v5480 = vrot.slane %v5466, %v5479
      %v5481 = vcombine.high %v5473, %v5473
      %v5482 = vcombine.high %v5480, %v5480
      %v5484 = vunpack.c.l.s4 1966171168
      %v5485 = vunpack.c.0.s8 %v5484
      %v5486 = vlaneseq
      %v5487 = vshrl.u32 %v5486, 7
      %v5488 = vsub.s32 %v5485, %v5487
      %v5489 = vrot.slane %v5473, %v5488
      %v5491 = vunpack.c.l.s4 1966171168
      %v5492 = vunpack.c.0.s8 %v5491
      %v5493 = vlaneseq
      %v5494 = vshrl.u32 %v5493, 7
      %v5495 = vsub.s32 %v5492, %v5494
      %v5496 = vrot.slane %v5480, %v5495
      %v5498 = vunpack.c.l.s4 1966171168
      %v5499 = vunpack.c.0.s8 %v5498
      %v5500 = vlaneseq
      %v5501 = vshrl.u32 %v5500, 7
      %v5502 = vsub.s32 %v5499, %v5501
      %v5503 = vrot.slane %v5481, %v5502
      %v5505 = vunpack.c.l.s4 1966171168
      %v5506 = vunpack.c.0.s8 %v5505
      %v5507 = vlaneseq
      %v5508 = vshrl.u32 %v5507, 7
      %v5509 = vsub.s32 %v5506, %v5508
      %v5510 = vrot.slane %v5482, %v5509
      %v5511 = vcombine.high %v5489, %v5489
      %v5512 = vcombine.high %v5496, %v5496
      %v5513 = vcombine.high %v5503, %v5503
      %v5514 = vcombine.high %v5510, %v5510
      %v5531 = vlaneseq
      %v5532 = vshrl.u32 %v5531, 7
      %v5533 = vsub.s32 0, %v5532
      %v5534 = vrot.slane %v5440, %v5533
      %v5535 = vlaneseq
      %v5536 = vshrl.u32 %v5535, 7
      %v5537 = vsub.s32 0, %v5536
      %v5538 = vrot.slane %v5454, %v5537
      %v5539 = vlaneseq
      %v5540 = vshrl.u32 %v5539, 7
      %v5541 = vsub.s32 0, %v5540
      %v5542 = vrot.slane %v5462, %v5541
      %v5543 = vlaneseq
      %v5544 = vshrl.u32 %v5543, 7
      %v5545 = vsub.s32 0, %v5544
      %v5546 = vrot.slane %v5464, %v5545
      %v5547 = vlaneseq
      %v5548 = vshrl.u32 %v5547, 7
      %v5549 = vsub.s32 0, %v5548
      %v5550 = vrot.slane %v5447, %v5549
      %v5551 = vlaneseq
      %v5552 = vshrl.u32 %v5551, 7
      %v5553 = vsub.s32 0, %v5552
      %v5554 = vrot.slane %v5461, %v5553
      %v5555 = vlaneseq
      %v5556 = vshrl.u32 %v5555, 7
      %v5557 = vsub.s32 0, %v5556
      %v5558 = vrot.slane %v5463, %v5557
      %v5559 = vlaneseq
      %v5560 = vshrl.u32 %v5559, 7
      %v5561 = vsub.s32 0, %v5560
      %v5562 = vrot.slane %v5465, %v5561
      %v5563 = vlaneseq
      %v5564 = vshrl.u32 %v5563, 7
      %v5565 = vsub.s32 0, %v5564
      %v5566 = vrot.slane %v5489, %v5565
      %v5567 = vlaneseq
      %v5568 = vshrl.u32 %v5567, 7
      %v5569 = vsub.s32 0, %v5568
      %v5570 = vrot.slane %v5503, %v5569
      %v5571 = vlaneseq
      %v5572 = vshrl.u32 %v5571, 7
      %v5573 = vsub.s32 0, %v5572
      %v5574 = vrot.slane %v5511, %v5573
      %v5575 = vlaneseq
      %v5576 = vshrl.u32 %v5575, 7
      %v5577 = vsub.s32 0, %v5576
      %v5578 = vrot.slane %v5513, %v5577
      %v5579 = vlaneseq
      %v5580 = vshrl.u32 %v5579, 7
      %v5581 = vsub.s32 0, %v5580
      %v5582 = vrot.slane %v5496, %v5581
      %v5583 = vlaneseq
      %v5584 = vshrl.u32 %v5583, 7
      %v5585 = vsub.s32 0, %v5584
      %v5586 = vrot.slane %v5510, %v5585
      %v5587 = vlaneseq
      %v5588 = vshrl.u32 %v5587, 7
      %v5589 = vsub.s32 0, %v5588
      %v5590 = vrot.slane %v5512, %v5589
      %v5591 = vlaneseq
      %v5592 = vshrl.u32 %v5591, 7
      %v5593 = vsub.s32 0, %v5592
      %v5594 = vrot.slane %v5514, %v5593
      %5595 = vrot.lane.b32.xlu0 %v5534, 112
      %v5596 = vpop.permute.xlu0 %5595
      %5597 = vrot.lane.b32.xlu0 %v5538, 112
      %v5598 = vpop.permute.xlu0 %5597
      %5599 = vrot.lane.b32.xlu0 %v5542, 112
      %v5600 = vpop.permute.xlu0 %5599
      %5601 = vrot.lane.b32.xlu0 %v5546, 112
      %v5602 = vpop.permute.xlu0 %5601
      %5603 = vrot.lane.b32.xlu0 %v5550, 112
      %v5604 = vpop.permute.xlu0 %5603
      %5605 = vrot.lane.b32.xlu0 %v5554, 112
      %v5606 = vpop.permute.xlu0 %5605
      %5607 = vrot.lane.b32.xlu0 %v5558, 112
      %v5608 = vpop.permute.xlu0 %5607
      %5609 = vrot.lane.b32.xlu0 %v5562, 112
      %v5610 = vpop.permute.xlu0 %5609
      %5611 = vrot.lane.b32.xlu0 %v5566, 112
      %v5612 = vpop.permute.xlu0 %5611
      %5613 = vrot.lane.b32.xlu0 %v5570, 112
      %v5614 = vpop.permute.xlu0 %5613
      %5615 = vrot.lane.b32.xlu0 %v5574, 112
      %v5616 = vpop.permute.xlu0 %5615
      %5617 = vrot.lane.b32.xlu0 %v5578, 112
      %v5618 = vpop.permute.xlu0 %5617
      %5619 = vrot.lane.b32.xlu0 %v5582, 112
      %v5620 = vpop.permute.xlu0 %5619
      %5621 = vrot.lane.b32.xlu0 %v5586, 112
      %v5622 = vpop.permute.xlu0 %5621
      %5623 = vrot.lane.b32.xlu0 %v5590, 112
      %v5624 = vpop.permute.xlu0 %5623
      %5625 = vrot.lane.b32.xlu0 %v5594, 112
      %v5626 = vpop.permute.xlu0 %5625
      %v5643 = vsel %vm447, %v5440, %v5596
      %v5644 = vsel %vm447, %v5454, %v5598
      %v5645 = vsel %vm447, %v5462, %v5600
      %v5646 = vsel %vm447, %v5464, %v5602
      %v5647 = vsel %vm447, %v5447, %v5604
      %v5648 = vsel %vm447, %v5461, %v5606
      %v5649 = vsel %vm447, %v5463, %v5608
      %v5650 = vsel %vm447, %v5465, %v5610
      %v5651 = vsel %vm447, %v5489, %v5612
      %v5652 = vsel %vm447, %v5503, %v5614
      %v5653 = vsel %vm447, %v5511, %v5616
      %v5654 = vsel %vm447, %v5513, %v5618
      %v5655 = vsel %vm447, %v5496, %v5620
      %v5656 = vsel %vm447, %v5510, %v5622
      %v5657 = vsel %vm447, %v5512, %v5624
      %v5658 = vsel %vm447, %v5514, %v5626
      %5675 = vrot.lane.b32.xlu0 %v5643, 96
      %v5676 = vpop.permute.xlu0 %5675
      %5677 = vrot.lane.b32.xlu0 %v5644, 96
      %v5678 = vpop.permute.xlu0 %5677
      %5679 = vrot.lane.b32.xlu0 %v5645, 96
      %v5680 = vpop.permute.xlu0 %5679
      %5681 = vrot.lane.b32.xlu0 %v5646, 96
      %v5682 = vpop.permute.xlu0 %5681
      %5683 = vrot.lane.b32.xlu0 %v5647, 96
      %v5684 = vpop.permute.xlu0 %5683
      %5685 = vrot.lane.b32.xlu0 %v5648, 96
      %v5686 = vpop.permute.xlu0 %5685
      %5687 = vrot.lane.b32.xlu0 %v5649, 96
      %v5688 = vpop.permute.xlu0 %5687
      %5689 = vrot.lane.b32.xlu0 %v5650, 96
      %v5690 = vpop.permute.xlu0 %5689
      %5691 = vrot.lane.b32.xlu0 %v5651, 96
      %v5692 = vpop.permute.xlu0 %5691
      %5693 = vrot.lane.b32.xlu0 %v5652, 96
      %v5694 = vpop.permute.xlu0 %5693
      %5695 = vrot.lane.b32.xlu0 %v5653, 96
      %v5696 = vpop.permute.xlu0 %5695
      %5697 = vrot.lane.b32.xlu0 %v5654, 96
      %v5698 = vpop.permute.xlu0 %5697
      %5699 = vrot.lane.b32.xlu0 %v5655, 96
      %v5700 = vpop.permute.xlu0 %5699
      %5701 = vrot.lane.b32.xlu0 %v5656, 96
      %v5702 = vpop.permute.xlu0 %5701
      %5703 = vrot.lane.b32.xlu0 %v5657, 96
      %v5704 = vpop.permute.xlu0 %5703
      %5705 = vrot.lane.b32.xlu0 %v5658, 96
      %v5706 = vpop.permute.xlu0 %5705
      %v5707 = vcombine.low %v5643, %v5644
      %v5708 = vcombine.low %v5645, %v5646
      %v5710 = vunpack.c.l.s4 1983009808
      %v5711 = vunpack.c.0.s8 %v5710
      %v5712 = vlaneseq
      %v5713 = vshrl.u32 %v5712, 7
      %v5714 = vsub.s32 %v5711, %v5713
      %v5715 = vrot.slane %v5707, %v5714
      %v5717 = vunpack.c.l.s4 1983009808
      %v5718 = vunpack.c.0.s8 %v5717
      %v5719 = vlaneseq
      %v5720 = vshrl.u32 %v5719, 7
      %v5721 = vsub.s32 %v5718, %v5720
      %v5722 = vrot.slane %v5708, %v5721
      %v5723 = vcombine.low %v5715, %v5722
      %v5724 = vcombine.low %v5676, %v5678
      %v5725 = vcombine.low %v5680, %v5682
      %v5727 = vunpack.c.l.s4 1983009808
      %v5728 = vunpack.c.0.s8 %v5727
      %v5729 = vlaneseq
      %v5730 = vshrl.u32 %v5729, 7
      %v5731 = vsub.s32 %v5728, %v5730
      %v5732 = vrot.slane %v5724, %v5731
      %v5734 = vunpack.c.l.s4 1983009808
      %v5735 = vunpack.c.0.s8 %v5734
      %v5736 = vlaneseq
      %v5737 = vshrl.u32 %v5736, 7
      %v5738 = vsub.s32 %v5735, %v5737
      %v5739 = vrot.slane %v5725, %v5738
      %v5740 = vcombine.low %v5732, %v5739
      %v5741 = vcombine.low %v5647, %v5648
      %v5742 = vcombine.low %v5649, %v5650
      %v5744 = vunpack.c.l.s4 1983009808
      %v5745 = vunpack.c.0.s8 %v5744
      %v5746 = vlaneseq
      %v5747 = vshrl.u32 %v5746, 7
      %v5748 = vsub.s32 %v5745, %v5747
      %v5749 = vrot.slane %v5741, %v5748
      %v5751 = vunpack.c.l.s4 1983009808
      %v5752 = vunpack.c.0.s8 %v5751
      %v5753 = vlaneseq
      %v5754 = vshrl.u32 %v5753, 7
      %v5755 = vsub.s32 %v5752, %v5754
      %v5756 = vrot.slane %v5742, %v5755
      %v5757 = vcombine.low %v5749, %v5756
      %v5758 = vcombine.low %v5684, %v5686
      %v5759 = vcombine.low %v5688, %v5690
      %v5761 = vunpack.c.l.s4 1983009808
      %v5762 = vunpack.c.0.s8 %v5761
      %v5763 = vlaneseq
      %v5764 = vshrl.u32 %v5763, 7
      %v5765 = vsub.s32 %v5762, %v5764
      %v5766 = vrot.slane %v5758, %v5765
      %v5768 = vunpack.c.l.s4 1983009808
      %v5769 = vunpack.c.0.s8 %v5768
      %v5770 = vlaneseq
      %v5771 = vshrl.u32 %v5770, 7
      %v5772 = vsub.s32 %v5769, %v5771
      %v5773 = vrot.slane %v5759, %v5772
      %v5774 = vcombine.low %v5766, %v5773
      %v5775 = vcombine.low %v5651, %v5652
      %v5776 = vcombine.low %v5653, %v5654
      %v5778 = vunpack.c.l.s4 1983009808
      %v5779 = vunpack.c.0.s8 %v5778
      %v5780 = vlaneseq
      %v5781 = vshrl.u32 %v5780, 7
      %v5782 = vsub.s32 %v5779, %v5781
      %v5783 = vrot.slane %v5775, %v5782
      %v5785 = vunpack.c.l.s4 1983009808
      %v5786 = vunpack.c.0.s8 %v5785
      %v5787 = vlaneseq
      %v5788 = vshrl.u32 %v5787, 7
      %v5789 = vsub.s32 %v5786, %v5788
      %v5790 = vrot.slane %v5776, %v5789
      %v5791 = vcombine.low %v5783, %v5790
      %v5792 = vcombine.low %v5692, %v5694
      %v5793 = vcombine.low %v5696, %v5698
      %v5795 = vunpack.c.l.s4 1983009808
      %v5796 = vunpack.c.0.s8 %v5795
      %v5797 = vlaneseq
      %v5798 = vshrl.u32 %v5797, 7
      %v5799 = vsub.s32 %v5796, %v5798
      %v5800 = vrot.slane %v5792, %v5799
      %v5802 = vunpack.c.l.s4 1983009808
      %v5803 = vunpack.c.0.s8 %v5802
      %v5804 = vlaneseq
      %v5805 = vshrl.u32 %v5804, 7
      %v5806 = vsub.s32 %v5803, %v5805
      %v5807 = vrot.slane %v5793, %v5806
      %v5808 = vcombine.low %v5800, %v5807
      %v5809 = vcombine.low %v5655, %v5656
      %v5810 = vcombine.low %v5657, %v5658
      %v5812 = vunpack.c.l.s4 1983009808
      %v5813 = vunpack.c.0.s8 %v5812
      %v5814 = vlaneseq
      %v5815 = vshrl.u32 %v5814, 7
      %v5816 = vsub.s32 %v5813, %v5815
      %v5817 = vrot.slane %v5809, %v5816
      %v5819 = vunpack.c.l.s4 1983009808
      %v5820 = vunpack.c.0.s8 %v5819
      %v5821 = vlaneseq
      %v5822 = vshrl.u32 %v5821, 7
      %v5823 = vsub.s32 %v5820, %v5822
      %v5824 = vrot.slane %v5810, %v5823
      %v5825 = vcombine.low %v5817, %v5824
      %v5826 = vcombine.low %v5700, %v5702
      %v5827 = vcombine.low %v5704, %v5706
      %v5829 = vunpack.c.l.s4 1983009808
      %v5830 = vunpack.c.0.s8 %v5829
      %v5831 = vlaneseq
      %v5832 = vshrl.u32 %v5831, 7
      %v5833 = vsub.s32 %v5830, %v5832
      %v5834 = vrot.slane %v5826, %v5833
      %v5836 = vunpack.c.l.s4 1983009808
      %v5837 = vunpack.c.0.s8 %v5836
      %v5838 = vlaneseq
      %v5839 = vshrl.u32 %v5838, 7
      %v5840 = vsub.s32 %v5837, %v5839
      %v5841 = vrot.slane %v5827, %v5840
      %v5842 = vcombine.low %v5834, %v5841
      %v5851 = vadd.f32 %v5407, %v5723
      %v5852 = vadd.f32 %v5408, %v5740
      %v5853 = vadd.f32 %v5409, %v5757
      %v5854 = vadd.f32 %v5410, %v5774
      %v5855 = vadd.f32 %v5411, %v5791
      %v5856 = vadd.f32 %v5412, %v5808
      %v5857 = vadd.f32 %v5413, %v5825
      %v5858 = vadd.f32 %v5414, %v5842
      %vm5859 = vcmask 130048
      %v5860 = vsel %vm5859, %v5851, 0.0
      %5861 = vadd.xlane.f32.xlu0 %v5860
      %v5862 = vpop.xlane.xlu0 %5861
      %v5863 = vsel %vm5859, %v5852, 0.0
      %5864 = vadd.xlane.f32.xlu0 %v5863
      %v5865 = vpop.xlane.xlu0 %5864
      %v5866 = vsel %vm5859, %v5853, 0.0
      %5867 = vadd.xlane.f32.xlu0 %v5866
      %v5868 = vpop.xlane.xlu0 %5867
      %v5869 = vsel %vm5859, %v5854, 0.0
      %5870 = vadd.xlane.f32.xlu0 %v5869
      %v5871 = vpop.xlane.xlu0 %5870
      %v5872 = vsel %vm5859, %v5855, 0.0
      %5873 = vadd.xlane.f32.xlu0 %v5872
      %v5874 = vpop.xlane.xlu0 %5873
      %v5875 = vsel %vm5859, %v5856, 0.0
      %5876 = vadd.xlane.f32.xlu0 %v5875
      %v5877 = vpop.xlane.xlu0 %5876
      %v5878 = vsel %vm5859, %v5857, 0.0
      %5879 = vadd.xlane.f32.xlu0 %v5878
      %v5880 = vpop.xlane.xlu0 %5879
      %v5881 = vsel %vm5859, %v5858, 0.0
      %5882 = vadd.xlane.f32.xlu0 %v5881
      %v5883 = vpop.xlane.xlu0 %5882
      %v5884 = vrcp.pop 16.0
      %v5885 = vmul.f32 %v5862, %v5884
      %v5886 = vmul.f32 %v5865, %v5884
      %v5887 = vmul.f32 %v5868, %v5884
      %v5888 = vmul.f32 %v5871, %v5884
      %v5889 = vmul.f32 %v5874, %v5884
      %v5890 = vmul.f32 %v5877, %v5884
      %v5891 = vmul.f32 %v5880, %v5884
      %v5892 = vmul.f32 %v5883, %v5884
      %v5893 = vsub.f32 %v5851, %v5885
      %v5894 = vsub.f32 %v5852, %v5886
      %v5895 = vsub.f32 %v5853, %v5887
      %v5896 = vsub.f32 %v5854, %v5888
      %v5897 = vsub.f32 %v5855, %v5889
      %v5898 = vsub.f32 %v5856, %v5890
      %v5899 = vsub.f32 %v5857, %v5891
      %v5900 = vsub.f32 %v5858, %v5892
      %v5901 = vmul.f32 %v5893, %v5893
      %v5902 = vmul.f32 %v5894, %v5894
      %v5903 = vmul.f32 %v5895, %v5895
      %v5904 = vmul.f32 %v5896, %v5896
      %v5905 = vmul.f32 %v5897, %v5897
      %v5906 = vmul.f32 %v5898, %v5898
      %v5907 = vmul.f32 %v5899, %v5899
      %v5908 = vmul.f32 %v5900, %v5900
      %v5909 = vsel %vm5859, %v5901, 0.0
      %5910 = vadd.xlane.f32.xlu0 %v5909
      %v5911 = vpop.xlane.xlu0 %5910
      %v5912 = vsel %vm5859, %v5902, 0.0
      %5913 = vadd.xlane.f32.xlu0 %v5912
      %v5914 = vpop.xlane.xlu0 %5913
      %v5915 = vsel %vm5859, %v5903, 0.0
      %5916 = vadd.xlane.f32.xlu0 %v5915
      %v5917 = vpop.xlane.xlu0 %5916
      %v5918 = vsel %vm5859, %v5904, 0.0
      %5919 = vadd.xlane.f32.xlu0 %v5918
      %v5920 = vpop.xlane.xlu0 %5919
      %v5921 = vsel %vm5859, %v5905, 0.0
      %5922 = vadd.xlane.f32.xlu0 %v5921
      %v5923 = vpop.xlane.xlu0 %5922
      %v5924 = vsel %vm5859, %v5906, 0.0
      %5925 = vadd.xlane.f32.xlu0 %v5924
      %v5926 = vpop.xlane.xlu0 %5925
      %v5927 = vsel %vm5859, %v5907, 0.0
      %5928 = vadd.xlane.f32.xlu0 %v5927
      %v5929 = vpop.xlane.xlu0 %5928
      %v5930 = vsel %vm5859, %v5908, 0.0
      %5931 = vadd.xlane.f32.xlu0 %v5930
      %v5932 = vpop.xlane.xlu0 %5931
      %v5933 = vmul.f32 %v5911, %v5884
      %v5934 = vmul.f32 %v5914, %v5884
      %v5935 = vmul.f32 %v5917, %v5884
      %v5936 = vmul.f32 %v5920, %v5884
      %v5937 = vmul.f32 %v5923, %v5884
      %v5938 = vmul.f32 %v5926, %v5884
      %v5939 = vmul.f32 %v5929, %v5884
      %v5940 = vmul.f32 %v5932, %v5884
      %v5941 = vadd.f32 %v5933, 1e-05
      %v5942 = vadd.f32 %v5934, 1e-05
      %v5943 = vadd.f32 %v5935, 1e-05
      %v5944 = vadd.f32 %v5936, 1e-05
      %v5945 = vadd.f32 %v5937, 1e-05
      %v5946 = vadd.f32 %v5938, 1e-05
      %v5947 = vadd.f32 %v5939, 1e-05
      %v5948 = vadd.f32 %v5940, 1e-05
      %v5949 = vrsqrt.pop %v5941
      %v5950 = vrsqrt.pop %v5942
      %v5951 = vrsqrt.pop %v5943
      %v5952 = vrsqrt.pop %v5944
      %v5953 = vrsqrt.pop %v5945
      %v5954 = vrsqrt.pop %v5946
      %v5955 = vrsqrt.pop %v5947
      %v5956 = vrsqrt.pop %v5948
      %v5957 = vmul.f32 %v5893, %v5949
      %v5958 = vmul.f32 %v5894, %v5950
      %v5959 = vmul.f32 %v5895, %v5951
      %v5960 = vmul.f32 %v5896, %v5952
      %v5961 = vmul.f32 %v5897, %v5953
      %v5962 = vmul.f32 %v5898, %v5954
      %v5963 = vmul.f32 %v5899, %v5955
      %v5964 = vmul.f32 %v5900, %v5956
      %v5966 = vlaneseq
      %v5967 = vshrl.u32 %v5966, 7
      %v5968 = vsub.s32 0, %v5967
      %v5969 = vrot.slane %v4485, %v5968
      %v5971 = vmul.f32 %v5957, %v5969
      %v5972 = vmul.f32 %v5958, %v5969
      %v5973 = vmul.f32 %v5959, %v5969
      %v5974 = vmul.f32 %v5960, %v5969
      %v5975 = vmul.f32 %v5961, %v5969
      %v5976 = vmul.f32 %v5962, %v5969
      %v5977 = vmul.f32 %v5963, %v5969
      %v5978 = vmul.f32 %v5964, %v5969
      %v5980 = vlaneseq
      %v5981 = vshrl.u32 %v5980, 7
      %v5982 = vsub.s32 0, %v5981
      %v5983 = vrot.slane %v4486, %v5982
      %v5985 = vadd.f32 %v5971, %v5983
      %v5986 = vadd.f32 %v5972, %v5983
      %v5987 = vadd.f32 %v5973, %v5983
      %v5988 = vadd.f32 %v5974, %v5983
      %v5989 = vadd.f32 %v5975, %v5983
      %v5990 = vadd.f32 %v5976, %v5983
      %v5991 = vadd.f32 %v5977, %v5983
      %v5992 = vadd.f32 %v5978, %v5983
      %v5993 = vcombine.low %v5985, %v5987
      %v5994 = vcombine.high %v5985, %v5987
      %v5996 = vunpack.c.l.s4 1983009808
      %v5997 = vunpack.c.0.s8 %v5996
      %v5998 = vlaneseq
      %v5999 = vshrl.u32 %v5998, 7
      %v6000 = vsub.s32 %v5997, %v5999
      %v6001 = vrot.slane %v5993, %v6000
      %v6003 = vunpack.c.l.s4 1983009808
      %v6004 = vunpack.c.0.s8 %v6003
      %v6005 = vlaneseq
      %v6006 = vshrl.u32 %v6005, 7
      %v6007 = vsub.s32 %v6004, %v6006
      %v6008 = vrot.slane %v5994, %v6007
      %v6009 = vcombine.low %v5986, %v5988
      %v6010 = vcombine.high %v5986, %v5988
      %v6012 = vunpack.c.l.s4 1983009808
      %v6013 = vunpack.c.0.s8 %v6012
      %v6014 = vlaneseq
      %v6015 = vshrl.u32 %v6014, 7
      %v6016 = vsub.s32 %v6013, %v6015
      %v6017 = vrot.slane %v6009, %v6016
      %v6019 = vunpack.c.l.s4 1983009808
      %v6020 = vunpack.c.0.s8 %v6019
      %v6021 = vlaneseq
      %v6022 = vshrl.u32 %v6021, 7
      %v6023 = vsub.s32 %v6020, %v6022
      %v6024 = vrot.slane %v6010, %v6023
      %v6025 = vcombine.low %v5989, %v5991
      %v6026 = vcombine.high %v5989, %v5991
      %v6028 = vunpack.c.l.s4 1983009808
      %v6029 = vunpack.c.0.s8 %v6028
      %v6030 = vlaneseq
      %v6031 = vshrl.u32 %v6030, 7
      %v6032 = vsub.s32 %v6029, %v6031
      %v6033 = vrot.slane %v6025, %v6032
      %v6035 = vunpack.c.l.s4 1983009808
      %v6036 = vunpack.c.0.s8 %v6035
      %v6037 = vlaneseq
      %v6038 = vshrl.u32 %v6037, 7
      %v6039 = vsub.s32 %v6036, %v6038
      %v6040 = vrot.slane %v6026, %v6039
      %v6041 = vcombine.low %v5990, %v5992
      %v6042 = vcombine.high %v5990, %v5992
      %v6044 = vunpack.c.l.s4 1983009808
      %v6045 = vunpack.c.0.s8 %v6044
      %v6046 = vlaneseq
      %v6047 = vshrl.u32 %v6046, 7
      %v6048 = vsub.s32 %v6045, %v6047
      %v6049 = vrot.slane %v6041, %v6048
      %v6051 = vunpack.c.l.s4 1983009808
      %v6052 = vunpack.c.0.s8 %v6051
      %v6053 = vlaneseq
      %v6054 = vshrl.u32 %v6053, 7
      %v6055 = vsub.s32 %v6052, %v6054
      %v6056 = vrot.slane %v6042, %v6055
      %v6057 = vcombine.low %v6001, %v6017
      %v6058 = vcombine.high %v6001, %v6017
      %v6060 = vunpack.c.l.s4 1934713408
      %v6061 = vunpack.c.0.s8 %v6060
      %v6062 = vlaneseq
      %v6063 = vshrl.u32 %v6062, 7
      %v6064 = vsub.s32 %v6061, %v6063
      %v6065 = vrot.slane %v6057, %v6064
      %v6067 = vunpack.c.l.s4 1934713408
      %v6068 = vunpack.c.0.s8 %v6067
      %v6069 = vlaneseq
      %v6070 = vshrl.u32 %v6069, 7
      %v6071 = vsub.s32 %v6068, %v6070
      %v6072 = vrot.slane %v6058, %v6071
      %v6073 = vcombine.low %v6008, %v6024
      %v6074 = vcombine.high %v6008, %v6024
      %v6076 = vunpack.c.l.s4 1934713408
      %v6077 = vunpack.c.0.s8 %v6076
      %v6078 = vlaneseq
      %v6079 = vshrl.u32 %v6078, 7
      %v6080 = vsub.s32 %v6077, %v6079
      %v6081 = vrot.slane %v6073, %v6080
      %v6083 = vunpack.c.l.s4 1934713408
      %v6084 = vunpack.c.0.s8 %v6083
      %v6085 = vlaneseq
      %v6086 = vshrl.u32 %v6085, 7
      %v6087 = vsub.s32 %v6084, %v6086
      %v6088 = vrot.slane %v6074, %v6087
      %v6089 = vcombine.low %v6033, %v6049
      %v6090 = vcombine.high %v6033, %v6049
      %v6092 = vunpack.c.l.s4 1934713408
      %v6093 = vunpack.c.0.s8 %v6092
      %v6094 = vlaneseq
      %v6095 = vshrl.u32 %v6094, 7
      %v6096 = vsub.s32 %v6093, %v6095
      %v6097 = vrot.slane %v6089, %v6096
      %v6099 = vunpack.c.l.s4 1934713408
      %v6100 = vunpack.c.0.s8 %v6099
      %v6101 = vlaneseq
      %v6102 = vshrl.u32 %v6101, 7
      %v6103 = vsub.s32 %v6100, %v6102
      %v6104 = vrot.slane %v6090, %v6103
      %v6105 = vcombine.low %v6040, %v6056
      %v6106 = vcombine.high %v6040, %v6056
      %v6108 = vunpack.c.l.s4 1934713408
      %v6109 = vunpack.c.0.s8 %v6108
      %v6110 = vlaneseq
      %v6111 = vshrl.u32 %v6110, 7
      %v6112 = vsub.s32 %v6109, %v6111
      %v6113 = vrot.slane %v6105, %v6112
      %v6115 = vunpack.c.l.s4 1934713408
      %v6116 = vunpack.c.0.s8 %v6115
      %v6117 = vlaneseq
      %v6118 = vshrl.u32 %v6117, 7
      %v6119 = vsub.s32 %v6116, %v6118
      %v6120 = vrot.slane %v6106, %v6119
      %v6121 = vcombine.low %v6065, %v6097
      %v6122 = vcombine.high %v6065, %v6097
      %v6123 = vcombine.low %v6072, %v6104
      %v6124 = vcombine.high %v6072, %v6104
      %v6125 = vcombine.low %v6081, %v6113
      %v6126 = vcombine.high %v6081, %v6113
      %v6127 = vcombine.low %v6088, %v6120
      %v6128 = vcombine.high %v6088, %v6120
      %6130 = vrot.lane.b32.xlu0 %v6122, 16
      %v6131 = vpop.permute.xlu0 %6130
      %6134 = vrot.lane.b32.xlu0 %v6123, 32
      %v6135 = vpop.permute.xlu0 %6134
      %6138 = vrot.lane.b32.xlu0 %v6124, 48
      %v6139 = vpop.permute.xlu0 %6138
      %6142 = vrot.lane.b32.xlu0 %v6125, 64
      %v6143 = vpop.permute.xlu0 %6142
      %6146 = vrot.lane.b32.xlu0 %v6126, 80
      %v6147 = vpop.permute.xlu0 %6146
      %6150 = vrot.lane.b32.xlu0 %v6127, 96
      %v6151 = vpop.permute.xlu0 %6150
      %6154 = vrot.lane.b32.xlu0 %v6128, 112
      %v6155 = vpop.permute.xlu0 %6154
      %v6157 = vsel %vm5859, %v6121, %v6131
      %v6158 = vsel %vm2574, %v6157, %v6135
      %vm6159 = vcmask 392192
      %v6160 = vsel %vm6159, %v6158, %v6139
      %v6161 = vsel %vm2591, %v6160, %v6143
      %vm6162 = vcmask 654336
      %v6163 = vsel %vm6162, %v6161, %v6147
      %v6164 = vsel %vm2608, %v6163, %v6151
      %vm6165 = vcmask 916480
      %v6166 = vsel %vm6165, %v6164, %v6155
      %6167 = vst [vmem:[%s424] sm:$0xff] %v6166
      %6168 = vmatprep.subr.bf16.mxu0 0
      %6169 = vmatpush1.bf16.msra.mxu0 %v4696
      %6170 = vmatprep.subr.bf16.mxu0 0
      %6171 = vmatpush1.bf16.msra.mxu0 %v4695
      %6172 = vmatprep.subr.bf16.mxu0 0
      %6173 = vmatpush1.bf16.msra.mxu0 %v4694
      %6174 = vmatprep.subr.bf16.mxu0 0
      %6175 = vmatpush1.bf16.msra.mxu0 %v4693
      %6176 = vmatprep.subr.bf16.mxu0 0
      %6177 = vmatpush1.bf16.msra.mxu0 %v4692
      %6178 = vmatprep.subr.bf16.mxu0 0
      %6179 = vmatpush1.bf16.msra.mxu0 %v4691
      %6180 = vmatprep.subr.bf16.mxu0 0
      %6181 = vmatpush1.bf16.msra.mxu0 %v4690
      %6182 = vmatprep.subr.bf16.mxu0 0
      %6183 = vmatpush1.bf16.msra.mxu0 %v4689
      %6184 = vmatprep.subr.bf16.mxu0 0
      %6185 = vmatpush2.bf16.msra.mxu0 %v4704
      %6186 = vmatprep.subr.bf16.mxu0 0
      %6187 = vmatpush2.bf16.msra.mxu0 %v4703
      %6188 = vmatprep.subr.bf16.mxu0 0
      %6189 = vmatpush2.bf16.msra.mxu0 %v4702
      %6190 = vmatprep.subr.bf16.mxu0 0
      %6191 = vmatpush2.bf16.msra.mxu0 %v4701
      %6192 = vmatprep.subr.bf16.mxu0 0
      %6193 = vmatpush2.bf16.msra.mxu0 %v4700
      %6194 = vmatprep.subr.bf16.mxu0 0
      %6195 = vmatpush2.bf16.msra.mxu0 %v4699
      %6196 = vmatprep.subr.bf16.mxu0 0
      %6197 = vmatpush2.bf16.msra.mxu0 %v4698
      %6198 = vmatprep.subr.bf16.mxu0 0
      %6199 = vmatpush2.bf16.msra.mxu0 %v4697
      %6200 = vmatprep.mubr.bf16.mxu0 %v5138
      %6201 = vmatmul.mubr.bf16.gmra.mxu0 %v5137
      %v6202 = vpop.f32.mrf.mxu0
      %v6203 = vadd.f32 0.0, %v6202
      %v6204 = vpop.f32.mrf.mxu0
      %v6205 = vpop.f32.mrf.mxu0
      %v6206 = vadd.f32 0.0, %v6205
      %v6207 = vpop.f32.mrf.mxu0
      %6208 = vmatprep.mubr.bf16.mxu0 %v5141
      %6209 = vmatmul.mubr.bf16.gmra.mxu0 %v5140
      %v6210 = vpop.f32.mrf.mxu0
      %v6211 = vadd.f32 0.0, %v6210
      %v6212 = vpop.f32.mrf.mxu0
      %v6213 = vpop.f32.mrf.mxu0
      %v6214 = vadd.f32 0.0, %v6213
      %v6215 = vpop.f32.mrf.mxu0
      %6216 = vmatprep.mubr.bf16.mxu0 %v5144
      %6217 = vmatmul.mubr.bf16.gmra.mxu0 %v5143
      %v6218 = vpop.f32.mrf.mxu0
      %v6219 = vadd.f32 0.0, %v6218
      %v6220 = vpop.f32.mrf.mxu0
      %v6221 = vpop.f32.mrf.mxu0
      %v6222 = vadd.f32 0.0, %v6221
      %v6223 = vpop.f32.mrf.mxu0
      %6224 = vmatprep.mubr.bf16.mxu0 %v5147
      %6225 = vmatmul.mubr.bf16.gmra.mxu0 %v5146
      %v6226 = vpop.f32.mrf.mxu0
      %v6227 = vadd.f32 0.0, %v6226
      %v6228 = vpop.f32.mrf.mxu0
      %v6229 = vpop.f32.mrf.mxu0
      %v6230 = vadd.f32 0.0, %v6229
      %v6231 = vpop.f32.mrf.mxu0
      %6232 = vdwg.mxu0
      %6233 = vmatprep.subr.bf16.mxu0 0
      %6234 = vmatpush1.bf16.msra.mxu0 0
      %6235 = vmatprep.subr.bf16.mxu0 0
      %6236 = vmatpush1.bf16.msra.mxu0 0
      %6237 = vmatprep.subr.bf16.mxu0 0
      %6238 = vmatpush1.bf16.msra.mxu0 0
      %6239 = vmatprep.subr.bf16.mxu0 0
      %6240 = vmatpush1.bf16.msra.mxu0 0
      %6241 = vmatprep.subr.bf16.mxu0 0
      %6242 = vmatpush1.bf16.msra.mxu0 0
      %6243 = vmatprep.subr.bf16.mxu0 0
      %6244 = vmatpush1.bf16.msra.mxu0 0
      %6245 = vmatprep.subr.bf16.mxu0 0
      %6246 = vmatpush1.bf16.msra.mxu0 %v4706
      %6247 = vmatprep.subr.bf16.mxu0 0
      %6248 = vmatpush1.bf16.msra.mxu0 %v4705
      %6249 = vmatprep.subr.bf16.mxu0 0
      %6250 = vmatpush2.bf16.msra.mxu0 0
      %6251 = vmatprep.subr.bf16.mxu0 0
      %6252 = vmatpush2.bf16.msra.mxu0 0
      %6253 = vmatprep.subr.bf16.mxu0 0
      %6254 = vmatpush2.bf16.msra.mxu0 0
      %6255 = vmatprep.subr.bf16.mxu0 0
      %6256 = vmatpush2.bf16.msra.mxu0 0
      %6257 = vmatprep.subr.bf16.mxu0 0
      %6258 = vmatpush2.bf16.msra.mxu0 0
      %6259 = vmatprep.subr.bf16.mxu0 0
      %6260 = vmatpush2.bf16.msra.mxu0 0
      %6261 = vmatprep.subr.bf16.mxu0 0
      %6262 = vmatpush2.bf16.msra.mxu0 0
      %6263 = vmatprep.subr.bf16.mxu0 0
      %6264 = vmatpush2.bf16.msra.mxu0 0
      %6265 = vmatprep.mubr.bf16.mxu0 0
      %6266 = vmatmul.mubr.bf16.gmra.mxu0 %v5266
      %v6267 = vpop.f32.mrf.mxu0
      %v6268 = vadd.f32 %v6203, %v6267
      %v6269 = vpop.f32.mrf.mxu0
      %v6270 = vpop.f32.mrf.mxu0
      %v6271 = vadd.f32 %v6206, %v6270
      %v6272 = vpop.f32.mrf.mxu0
      %6273 = vmatprep.mubr.bf16.mxu0 0
      %6274 = vmatmul.mubr.bf16.gmra.mxu0 %v5269
      %v6275 = vpop.f32.mrf.mxu0
      %v6276 = vadd.f32 %v6211, %v6275
      %v6277 = vpop.f32.mrf.mxu0
      %v6278 = vpop.f32.mrf.mxu0
      %v6279 = vadd.f32 %v6214, %v6278
      %v6280 = vpop.f32.mrf.mxu0
      %6281 = vmatprep.mubr.bf16.mxu0 0
      %6282 = vmatmul.mubr.bf16.gmra.mxu0 %v5272
      %v6283 = vpop.f32.mrf.mxu0
      %v6284 = vadd.f32 %v6219, %v6283
      %v6285 = vpop.f32.mrf.mxu0
      %v6286 = vpop.f32.mrf.mxu0
      %v6287 = vadd.f32 %v6222, %v6286
      %v6288 = vpop.f32.mrf.mxu0
      %6289 = vmatprep.mubr.bf16.mxu0 0
      %6290 = vmatmul.mubr.bf16.gmra.mxu0 %v5275
      %v6291 = vpop.f32.mrf.mxu0
      %v6292 = vadd.f32 %v6227, %v6291
      %v6293 = vpop.f32.mrf.mxu0
      %v6294 = vpop.f32.mrf.mxu0
      %v6295 = vadd.f32 %v6230, %v6294
      %v6296 = vpop.f32.mrf.mxu0
      %6297 = vdwg.mxu0
      %6298 = vmatprep.subr.bf16.mxu0 0
      %6299 = vmatpush1.bf16.msra.mxu0 %v4966
      %6300 = vmatprep.subr.bf16.mxu0 0
      %6301 = vmatpush1.bf16.msra.mxu0 %v4965
      %6302 = vmatprep.subr.bf16.mxu0 0
      %6303 = vmatpush1.bf16.msra.mxu0 %v4964
      %6304 = vmatprep.subr.bf16.mxu0 0
      %6305 = vmatpush1.bf16.msra.mxu0 %v4963
      %6306 = vmatprep.subr.bf16.mxu0 0
      %6307 = vmatpush1.bf16.msra.mxu0 %v4962
      %6308 = vmatprep.subr.bf16.mxu0 0
      %6309 = vmatpush1.bf16.msra.mxu0 %v4961
      %6310 = vmatprep.subr.bf16.mxu0 0
      %6311 = vmatpush1.bf16.msra.mxu0 %v4960
      %6312 = vmatprep.subr.bf16.mxu0 0
      %6313 = vmatpush1.bf16.msra.mxu0 %v4959
      %6314 = vmatprep.subr.bf16.mxu0 0
      %6315 = vmatpush2.bf16.msra.mxu0 %v4974
      %6316 = vmatprep.subr.bf16.mxu0 0
      %6317 = vmatpush2.bf16.msra.mxu0 %v4973
      %6318 = vmatprep.subr.bf16.mxu0 0
      %6319 = vmatpush2.bf16.msra.mxu0 %v4972
      %6320 = vmatprep.subr.bf16.mxu0 0
      %6321 = vmatpush2.bf16.msra.mxu0 %v4971
      %6322 = vmatprep.subr.bf16.mxu0 0
      %6323 = vmatpush2.bf16.msra.mxu0 %v4970
      %6324 = vmatprep.subr.bf16.mxu0 0
      %6325 = vmatpush2.bf16.msra.mxu0 %v4969
      %6326 = vmatprep.subr.bf16.mxu0 0
      %6327 = vmatpush2.bf16.msra.mxu0 %v4968
      %6328 = vmatprep.subr.bf16.mxu0 0
      %6329 = vmatpush2.bf16.msra.mxu0 %v4967
      %6330 = vmatprep.mubr.bf16.mxu0 %v4598
      %6331 = vmatmul.mubr.bf16.gmra.mxu0 %v4597
      %v6332 = vpop.f32.mrf.mxu0
      %v6333 = vadd.f32 %v6268, %v6332
      %v6334 = vpop.f32.mrf.mxu0
      %v6335 = vpop.f32.mrf.mxu0
      %v6336 = vadd.f32 %v6271, %v6335
      %v6337 = vpop.f32.mrf.mxu0
      %6338 = vmatprep.mubr.bf16.mxu0 %v4601
      %6339 = vmatmul.mubr.bf16.gmra.mxu0 %v4600
      %v6340 = vpop.f32.mrf.mxu0
      %v6341 = vadd.f32 %v6276, %v6340
      %v6342 = vpop.f32.mrf.mxu0
      %v6343 = vpop.f32.mrf.mxu0
      %v6344 = vadd.f32 %v6279, %v6343
      %v6345 = vpop.f32.mrf.mxu0
      %6346 = vmatprep.mubr.bf16.mxu0 %v4604
      %6347 = vmatmul.mubr.bf16.gmra.mxu0 %v4603
      %v6348 = vpop.f32.mrf.mxu0
      %v6349 = vadd.f32 %v6284, %v6348
      %v6350 = vpop.f32.mrf.mxu0
      %v6351 = vpop.f32.mrf.mxu0
      %v6352 = vadd.f32 %v6287, %v6351
      %v6353 = vpop.f32.mrf.mxu0
      %6354 = vmatprep.mubr.bf16.mxu0 %v4607
      %6355 = vmatmul.mubr.bf16.gmra.mxu0 %v4606
      %v6356 = vpop.f32.mrf.mxu0
      %v6357 = vadd.f32 %v6292, %v6356
      %v6358 = vpop.f32.mrf.mxu0
      %v6359 = vpop.f32.mrf.mxu0
      %v6360 = vadd.f32 %v6295, %v6359
      %v6361 = vpop.f32.mrf.mxu0
      %6362 = vdwg.mxu0
      %6363 = vmatprep.subr.bf16.mxu0 0
      %6364 = vmatpush1.bf16.msra.mxu0 0
      %6365 = vmatprep.subr.bf16.mxu0 0
      %6366 = vmatpush1.bf16.msra.mxu0 0
      %6367 = vmatprep.subr.bf16.mxu0 0
      %6368 = vmatpush1.bf16.msra.mxu0 0
      %6369 = vmatprep.subr.bf16.mxu0 0
      %6370 = vmatpush1.bf16.msra.mxu0 0
      %6371 = vmatprep.subr.bf16.mxu0 0
      %6372 = vmatpush1.bf16.msra.mxu0 0
      %6373 = vmatprep.subr.bf16.mxu0 0
      %6374 = vmatpush1.bf16.msra.mxu0 0
      %6375 = vmatprep.subr.bf16.mxu0 0
      %6376 = vmatpush1.bf16.msra.mxu0 %v4976
      %6377 = vmatprep.subr.bf16.mxu0 0
      %6378 = vmatpush1.bf16.msra.mxu0 %v4975
      %6379 = vmatprep.subr.bf16.mxu0 0
      %6380 = vmatpush2.bf16.msra.mxu0 0
      %6381 = vmatprep.subr.bf16.mxu0 0
      %6382 = vmatpush2.bf16.msra.mxu0 0
      %6383 = vmatprep.subr.bf16.mxu0 0
      %6384 = vmatpush2.bf16.msra.mxu0 0
      %6385 = vmatprep.subr.bf16.mxu0 0
      %6386 = vmatpush2.bf16.msra.mxu0 0
      %6387 = vmatprep.subr.bf16.mxu0 0
      %6388 = vmatpush2.bf16.msra.mxu0 0
      %6389 = vmatprep.subr.bf16.mxu0 0
      %6390 = vmatpush2.bf16.msra.mxu0 0
      %6391 = vmatprep.subr.bf16.mxu0 0
      %6392 = vmatpush2.bf16.msra.mxu0 0
      %6393 = vmatprep.subr.bf16.mxu0 0
      %6394 = vmatpush2.bf16.msra.mxu0 0
      %6395 = vmatprep.mubr.bf16.mxu0 0
      %6396 = vmatmul.mubr.bf16.gmra.mxu0 %v4726
      %v6397 = vpop.f32.mrf.mxu0
      %v6398 = vadd.f32 %v6333, %v6397
      %v6399 = vpop.f32.mrf.mxu0
      %v6400 = vpop.f32.mrf.mxu0
      %v6401 = vadd.f32 %v6336, %v6400
      %v6402 = vpop.f32.mrf.mxu0
      %6403 = vmatprep.mubr.bf16.mxu0 0
      %6404 = vmatmul.mubr.bf16.gmra.mxu0 %v4729
      %v6405 = vpop.f32.mrf.mxu0
      %v6406 = vadd.f32 %v6341, %v6405
      %v6407 = vpop.f32.mrf.mxu0
      %v6408 = vpop.f32.mrf.mxu0
      %v6409 = vadd.f32 %v6344, %v6408
      %v6410 = vpop.f32.mrf.mxu0
      %6411 = vmatprep.mubr.bf16.mxu0 0
      %6412 = vmatmul.mubr.bf16.gmra.mxu0 %v4732
      %v6413 = vpop.f32.mrf.mxu0
      %v6414 = vadd.f32 %v6349, %v6413
      %v6415 = vpop.f32.mrf.mxu0
      %v6416 = vpop.f32.mrf.mxu0
      %v6417 = vadd.f32 %v6352, %v6416
      %v6418 = vpop.f32.mrf.mxu0
      %6419 = vmatprep.mubr.bf16.mxu0 0
      %6420 = vmatmul.mubr.bf16.gmra.mxu0 %v4735
      %v6421 = vpop.f32.mrf.mxu0
      %v6422 = vadd.f32 %v6357, %v6421
      %v6423 = vpop.f32.mrf.mxu0
      %v6424 = vpop.f32.mrf.mxu0
      %v6425 = vadd.f32 %v6360, %v6424
      %v6426 = vpop.f32.mrf.mxu0
      %6427 = vdwg.mxu0
      %v6428 = vpack.c.b16 %v4384, %v4381
      %v6429 = vpack.c.b16 %v4385, %v4382
      %v6430 = vpack.c.b16 %v4386, %v4383
      %v6431 = vpack.c.b16 %v4390, %v4387
      %v6432 = vpack.c.b16 %v4391, %v4388
      %v6433 = vpack.c.b16 %v4392, %v4389
      %v6434 = vpack.c.b16 %v4396, %v4393
      %v6435 = vpack.c.b16 %v4397, %v4394
      %v6436 = vpack.c.b16 %v4398, %v4395
      %v6437 = vpack.c.b16 %v4402, %v4399
      %v6438 = vpack.c.b16 %v4403, %v4400
      %v6439 = vpack.c.b16 %v2720, %v4401
      %v6449 = vsel %vm2574, %v6430, 0
      %v6452 = vsel %vm2574, %v6433, 0
      %v6455 = vsel %vm2574, %v6436, 0
      %v6458 = vsel %vm2574, %v6439, 0
      %6460 = vmatprep.subr.bf16.mxu0 0
      %6461 = vmatpush1.bf16.msra.mxu0 %v5236
      %6462 = vmatprep.subr.bf16.mxu0 0
      %6463 = vmatpush1.bf16.msra.mxu0 %v5235
      %6464 = vmatprep.subr.bf16.mxu0 0
      %6465 = vmatpush1.bf16.msra.mxu0 %v5234
      %6466 = vmatprep.subr.bf16.mxu0 0
      %6467 = vmatpush1.bf16.msra.mxu0 %v5233
      %6468 = vmatprep.subr.bf16.mxu0 0
      %6469 = vmatpush1.bf16.msra.mxu0 %v5232
      %6470 = vmatprep.subr.bf16.mxu0 0
      %6471 = vmatpush1.bf16.msra.mxu0 %v5231
      %6472 = vmatprep.subr.bf16.mxu0 0
      %6473 = vmatpush1.bf16.msra.mxu0 %v5230
      %6474 = vmatprep.subr.bf16.mxu0 0
      %6475 = vmatpush1.bf16.msra.mxu0 %v5229
      %6476 = vmatprep.subr.bf16.mxu0 0
      %6477 = vmatpush2.bf16.msra.mxu0 %v5244
      %6478 = vmatprep.subr.bf16.mxu0 0
      %6479 = vmatpush2.bf16.msra.mxu0 %v5243
      %6480 = vmatprep.subr.bf16.mxu0 0
      %6481 = vmatpush2.bf16.msra.mxu0 %v5242
      %6482 = vmatprep.subr.bf16.mxu0 0
      %6483 = vmatpush2.bf16.msra.mxu0 %v5241
      %6484 = vmatprep.subr.bf16.mxu0 0
      %6485 = vmatpush2.bf16.msra.mxu0 %v5240
      %6486 = vmatprep.subr.bf16.mxu0 0
      %6487 = vmatpush2.bf16.msra.mxu0 %v5239
      %6488 = vmatprep.subr.bf16.mxu0 0
      %6489 = vmatpush2.bf16.msra.mxu0 %v5238
      %6490 = vmatprep.subr.bf16.mxu0 0
      %6491 = vmatpush2.bf16.msra.mxu0 %v5237
      %6492 = vmatprep.mubr.bf16.mxu0 %v6429
      %6493 = vmatmul.mubr.bf16.gmra.mxu0 %v6428
      %v6494 = vpop.f32.mrf.mxu0
      %v6495 = vadd.f32 0.0, %v6494
      %v6496 = vpop.f32.mrf.mxu0
      %v6497 = vpop.f32.mrf.mxu0
      %v6498 = vadd.f32 0.0, %v6497
      %v6499 = vpop.f32.mrf.mxu0
      %6500 = vmatprep.mubr.bf16.mxu0 %v6432
      %6501 = vmatmul.mubr.bf16.gmra.mxu0 %v6431
      %v6502 = vpop.f32.mrf.mxu0
      %v6503 = vadd.f32 0.0, %v6502
      %v6504 = vpop.f32.mrf.mxu0
      %v6505 = vpop.f32.mrf.mxu0
      %v6506 = vadd.f32 0.0, %v6505
      %v6507 = vpop.f32.mrf.mxu0
      %6508 = vmatprep.mubr.bf16.mxu0 %v6435
      %6509 = vmatmul.mubr.bf16.gmra.mxu0 %v6434
      %v6510 = vpop.f32.mrf.mxu0
      %v6511 = vadd.f32 0.0, %v6510
      %v6512 = vpop.f32.mrf.mxu0
      %v6513 = vpop.f32.mrf.mxu0
      %v6514 = vadd.f32 0.0, %v6513
      %v6515 = vpop.f32.mrf.mxu0
      %6516 = vmatprep.mubr.bf16.mxu0 %v6438
      %6517 = vmatmul.mubr.bf16.gmra.mxu0 %v6437
      %v6518 = vpop.f32.mrf.mxu0
      %v6519 = vadd.f32 0.0, %v6518
      %v6520 = vpop.f32.mrf.mxu0
      %v6521 = vpop.f32.mrf.mxu0
      %v6522 = vadd.f32 0.0, %v6521
      %v6523 = vpop.f32.mrf.mxu0
      %6524 = vdwg.mxu0
      %6525 = vmatprep.subr.bf16.mxu0 0
      %6526 = vmatpush1.bf16.msra.mxu0 0
      %6527 = vmatprep.subr.bf16.mxu0 0
      %6528 = vmatpush1.bf16.msra.mxu0 0
      %6529 = vmatprep.subr.bf16.mxu0 0
      %6530 = vmatpush1.bf16.msra.mxu0 0
      %6531 = vmatprep.subr.bf16.mxu0 0
      %6532 = vmatpush1.bf16.msra.mxu0 0
      %6533 = vmatprep.subr.bf16.mxu0 0
      %6534 = vmatpush1.bf16.msra.mxu0 0
      %6535 = vmatprep.subr.bf16.mxu0 0
      %6536 = vmatpush1.bf16.msra.mxu0 0
      %6537 = vmatprep.subr.bf16.mxu0 0
      %6538 = vmatpush1.bf16.msra.mxu0 %v5246
      %6539 = vmatprep.subr.bf16.mxu0 0
      %6540 = vmatpush1.bf16.msra.mxu0 %v5245
      %6541 = vmatprep.subr.bf16.mxu0 0
      %6542 = vmatpush2.bf16.msra.mxu0 0
      %6543 = vmatprep.subr.bf16.mxu0 0
      %6544 = vmatpush2.bf16.msra.mxu0 0
      %6545 = vmatprep.subr.bf16.mxu0 0
      %6546 = vmatpush2.bf16.msra.mxu0 0
      %6547 = vmatprep.subr.bf16.mxu0 0
      %6548 = vmatpush2.bf16.msra.mxu0 0
      %6549 = vmatprep.subr.bf16.mxu0 0
      %6550 = vmatpush2.bf16.msra.mxu0 0
      %6551 = vmatprep.subr.bf16.mxu0 0
      %6552 = vmatpush2.bf16.msra.mxu0 0
      %6553 = vmatprep.subr.bf16.mxu0 0
      %6554 = vmatpush2.bf16.msra.mxu0 0
      %6555 = vmatprep.subr.bf16.mxu0 0
      %6556 = vmatpush2.bf16.msra.mxu0 0
      %6557 = vmatprep.mubr.bf16.mxu0 0
      %6558 = vmatmul.mubr.bf16.gmra.mxu0 %v6449
      %v6559 = vpop.f32.mrf.mxu0
      %v6560 = vadd.f32 %v6495, %v6559
      %v6561 = vpop.f32.mrf.mxu0
      %v6562 = vpop.f32.mrf.mxu0
      %v6563 = vadd.f32 %v6498, %v6562
      %v6564 = vpop.f32.mrf.mxu0
      %6565 = vmatprep.mubr.bf16.mxu0 0
      %6566 = vmatmul.mubr.bf16.gmra.mxu0 %v6452
      %v6567 = vpop.f32.mrf.mxu0
      %v6568 = vadd.f32 %v6503, %v6567
      %v6569 = vpop.f32.mrf.mxu0
      %v6570 = vpop.f32.mrf.mxu0
      %v6571 = vadd.f32 %v6506, %v6570
      %v6572 = vpop.f32.mrf.mxu0
      %6573 = vmatprep.mubr.bf16.mxu0 0
      %6574 = vmatmul.mubr.bf16.gmra.mxu0 %v6455
      %v6575 = vpop.f32.mrf.mxu0
      %v6576 = vadd.f32 %v6511, %v6575
      %v6577 = vpop.f32.mrf.mxu0
      %v6578 = vpop.f32.mrf.mxu0
      %v6579 = vadd.f32 %v6514, %v6578
      %v6580 = vpop.f32.mrf.mxu0
      %6581 = vmatprep.mubr.bf16.mxu0 0
      %6582 = vmatmul.mubr.bf16.gmra.mxu0 %v6458
      %v6583 = vpop.f32.mrf.mxu0
      %v6584 = vadd.f32 %v6519, %v6583
      %v6585 = vpop.f32.mrf.mxu0
      %v6586 = vpop.f32.mrf.mxu0
      %v6587 = vadd.f32 %v6522, %v6586
      %v6588 = vpop.f32.mrf.mxu0
      %6589 = vdwg.mxu0
      %v6590 = vadd.f32 %v6398, %v6560
      %v6591 = vadd.f32 %v6401, %v6563
      %v6592 = vadd.f32 %v6406, %v6568
      %v6593 = vadd.f32 %v6409, %v6571
      %v6594 = vadd.f32 %v6414, %v6576
      %v6595 = vadd.f32 %v6417, %v6579
      %v6596 = vadd.f32 %v6422, %v6584
      %v6597 = vadd.f32 %v6425, %v6587
      %6598 = vrot.lane.b32.xlu0 %v5723, 64
      %v6599 = vpop.permute.xlu0 %6598
      %6600 = vrot.lane.b32.xlu0 %v5740, 64
      %v6601 = vpop.permute.xlu0 %6600
      %6602 = vrot.lane.b32.xlu0 %v5757, 64
      %v6603 = vpop.permute.xlu0 %6602
      %6604 = vrot.lane.b32.xlu0 %v5774, 64
      %v6605 = vpop.permute.xlu0 %6604
      %6606 = vrot.lane.b32.xlu0 %v5791, 64
      %v6607 = vpop.permute.xlu0 %6606
      %6608 = vrot.lane.b32.xlu0 %v5808, 64
      %v6609 = vpop.permute.xlu0 %6608
      %6610 = vrot.lane.b32.xlu0 %v5825, 64
      %v6611 = vpop.permute.xlu0 %6610
      %6612 = vrot.lane.b32.xlu0 %v5842, 64
      %v6613 = vpop.permute.xlu0 %6612
      %v6622 = vadd.f32 %v6590, %v6599
      %v6623 = vadd.f32 %v6591, %v6601
      %v6624 = vadd.f32 %v6592, %v6603
      %v6625 = vadd.f32 %v6593, %v6605
      %v6626 = vadd.f32 %v6594, %v6607
      %v6627 = vadd.f32 %v6595, %v6609
      %v6628 = vadd.f32 %v6596, %v6611
      %v6629 = vadd.f32 %v6597, %v6613
      %v6630 = vsel %vm5859, %v6622, 0.0
      %6631 = vadd.xlane.f32.xlu0 %v6630
      %v6632 = vpop.xlane.xlu0 %6631
      %v6633 = vsel %vm5859, %v6623, 0.0
      %6634 = vadd.xlane.f32.xlu0 %v6633
      %v6635 = vpop.xlane.xlu0 %6634
      %v6636 = vsel %vm5859, %v6624, 0.0
      %6637 = vadd.xlane.f32.xlu0 %v6636
      %v6638 = vpop.xlane.xlu0 %6637
      %v6639 = vsel %vm5859, %v6625, 0.0
      %6640 = vadd.xlane.f32.xlu0 %v6639
      %v6641 = vpop.xlane.xlu0 %6640
      %v6642 = vsel %vm5859, %v6626, 0.0
      %6643 = vadd.xlane.f32.xlu0 %v6642
      %v6644 = vpop.xlane.xlu0 %6643
      %v6645 = vsel %vm5859, %v6627, 0.0
      %6646 = vadd.xlane.f32.xlu0 %v6645
      %v6647 = vpop.xlane.xlu0 %6646
      %v6648 = vsel %vm5859, %v6628, 0.0
      %6649 = vadd.xlane.f32.xlu0 %v6648
      %v6650 = vpop.xlane.xlu0 %6649
      %v6651 = vsel %vm5859, %v6629, 0.0
      %6652 = vadd.xlane.f32.xlu0 %v6651
      %v6653 = vpop.xlane.xlu0 %6652
      %v6654 = vmul.f32 %v6632, %v5884
      %v6655 = vmul.f32 %v6635, %v5884
      %v6656 = vmul.f32 %v6638, %v5884
      %v6657 = vmul.f32 %v6641, %v5884
      %v6658 = vmul.f32 %v6644, %v5884
      %v6659 = vmul.f32 %v6647, %v5884
      %v6660 = vmul.f32 %v6650, %v5884
      %v6661 = vmul.f32 %v6653, %v5884
      %v6662 = vsub.f32 %v6622, %v6654
      %v6663 = vsub.f32 %v6623, %v6655
      %v6664 = vsub.f32 %v6624, %v6656
      %v6665 = vsub.f32 %v6625, %v6657
      %v6666 = vsub.f32 %v6626, %v6658
      %v6667 = vsub.f32 %v6627, %v6659
      %v6668 = vsub.f32 %v6628, %v6660
      %v6669 = vsub.f32 %v6629, %v6661
      %v6670 = vmul.f32 %v6662, %v6662
      %v6671 = vmul.f32 %v6663, %v6663
      %v6672 = vmul.f32 %v6664, %v6664
      %v6673 = vmul.f32 %v6665, %v6665
      %v6674 = vmul.f32 %v6666, %v6666
      %v6675 = vmul.f32 %v6667, %v6667
      %v6676 = vmul.f32 %v6668, %v6668
      %v6677 = vmul.f32 %v6669, %v6669
      %v6678 = vsel %vm5859, %v6670, 0.0
      %6679 = vadd.xlane.f32.xlu0 %v6678
      %v6680 = vpop.xlane.xlu0 %6679
      %v6681 = vsel %vm5859, %v6671, 0.0
      %6682 = vadd.xlane.f32.xlu0 %v6681
      %v6683 = vpop.xlane.xlu0 %6682
      %v6684 = vsel %vm5859, %v6672, 0.0
      %6685 = vadd.xlane.f32.xlu0 %v6684
      %v6686 = vpop.xlane.xlu0 %6685
      %v6687 = vsel %vm5859, %v6673, 0.0
      %6688 = vadd.xlane.f32.xlu0 %v6687
      %v6689 = vpop.xlane.xlu0 %6688
      %v6690 = vsel %vm5859, %v6674, 0.0
      %6691 = vadd.xlane.f32.xlu0 %v6690
      %v6692 = vpop.xlane.xlu0 %6691
      %v6693 = vsel %vm5859, %v6675, 0.0
      %6694 = vadd.xlane.f32.xlu0 %v6693
      %v6695 = vpop.xlane.xlu0 %6694
      %v6696 = vsel %vm5859, %v6676, 0.0
      %6697 = vadd.xlane.f32.xlu0 %v6696
      %v6698 = vpop.xlane.xlu0 %6697
      %v6699 = vsel %vm5859, %v6677, 0.0
      %6700 = vadd.xlane.f32.xlu0 %v6699
      %v6701 = vpop.xlane.xlu0 %6700
      %v6702 = vmul.f32 %v6680, %v5884
      %v6703 = vmul.f32 %v6683, %v5884
      %v6704 = vmul.f32 %v6686, %v5884
      %v6705 = vmul.f32 %v6689, %v5884
      %v6706 = vmul.f32 %v6692, %v5884
      %v6707 = vmul.f32 %v6695, %v5884
      %v6708 = vmul.f32 %v6698, %v5884
      %v6709 = vmul.f32 %v6701, %v5884
      %v6710 = vadd.f32 %v6702, 1e-05
      %v6711 = vadd.f32 %v6703, 1e-05
      %v6712 = vadd.f32 %v6704, 1e-05
      %v6713 = vadd.f32 %v6705, 1e-05
      %v6714 = vadd.f32 %v6706, 1e-05
      %v6715 = vadd.f32 %v6707, 1e-05
      %v6716 = vadd.f32 %v6708, 1e-05
      %v6717 = vadd.f32 %v6709, 1e-05
      %v6718 = vrsqrt.pop %v6710
      %v6719 = vrsqrt.pop %v6711
      %v6720 = vrsqrt.pop %v6712
      %v6721 = vrsqrt.pop %v6713
      %v6722 = vrsqrt.pop %v6714
      %v6723 = vrsqrt.pop %v6715
      %v6724 = vrsqrt.pop %v6716
      %v6725 = vrsqrt.pop %v6717
      %v6726 = vmul.f32 %v6662, %v6718
      %v6727 = vmul.f32 %v6663, %v6719
      %v6728 = vmul.f32 %v6664, %v6720
      %v6729 = vmul.f32 %v6665, %v6721
      %v6730 = vmul.f32 %v6666, %v6722
      %v6731 = vmul.f32 %v6667, %v6723
      %v6732 = vmul.f32 %v6668, %v6724
      %v6733 = vmul.f32 %v6669, %v6725
      %v6734 = vmul.f32 %v6726, %v5969
      %v6735 = vmul.f32 %v6727, %v5969
      %v6736 = vmul.f32 %v6728, %v5969
      %v6737 = vmul.f32 %v6729, %v5969
      %v6738 = vmul.f32 %v6730, %v5969
      %v6739 = vmul.f32 %v6731, %v5969
      %v6740 = vmul.f32 %v6732, %v5969
      %v6741 = vmul.f32 %v6733, %v5969
      %v6742 = vadd.f32 %v6734, %v5983
      %v6743 = vadd.f32 %v6735, %v5983
      %v6744 = vadd.f32 %v6736, %v5983
      %v6745 = vadd.f32 %v6737, %v5983
      %v6746 = vadd.f32 %v6738, %v5983
      %v6747 = vadd.f32 %v6739, %v5983
      %v6748 = vadd.f32 %v6740, %v5983
      %v6749 = vadd.f32 %v6741, %v5983
      %v6750 = vcombine.low %v6742, %v6744
      %v6751 = vcombine.high %v6742, %v6744
      %v6753 = vunpack.c.l.s4 1983009808
      %v6754 = vunpack.c.0.s8 %v6753
      %v6755 = vlaneseq
      %v6756 = vshrl.u32 %v6755, 7
      %v6757 = vsub.s32 %v6754, %v6756
      %v6758 = vrot.slane %v6750, %v6757
      %v6760 = vunpack.c.l.s4 1983009808
      %v6761 = vunpack.c.0.s8 %v6760
      %v6762 = vlaneseq
      %v6763 = vshrl.u32 %v6762, 7
      %v6764 = vsub.s32 %v6761, %v6763
      %v6765 = vrot.slane %v6751, %v6764
      %v6766 = vcombine.low %v6743, %v6745
      %v6767 = vcombine.high %v6743, %v6745
      %v6769 = vunpack.c.l.s4 1983009808
      %v6770 = vunpack.c.0.s8 %v6769
      %v6771 = vlaneseq
      %v6772 = vshrl.u32 %v6771, 7
      %v6773 = vsub.s32 %v6770, %v6772
      %v6774 = vrot.slane %v6766, %v6773
      %v6776 = vunpack.c.l.s4 1983009808
      %v6777 = vunpack.c.0.s8 %v6776
      %v6778 = vlaneseq
      %v6779 = vshrl.u32 %v6778, 7
      %v6780 = vsub.s32 %v6777, %v6779
      %v6781 = vrot.slane %v6767, %v6780
      %v6782 = vcombine.low %v6746, %v6748
      %v6783 = vcombine.high %v6746, %v6748
      %v6785 = vunpack.c.l.s4 1983009808
      %v6786 = vunpack.c.0.s8 %v6785
      %v6787 = vlaneseq
      %v6788 = vshrl.u32 %v6787, 7
      %v6789 = vsub.s32 %v6786, %v6788
      %v6790 = vrot.slane %v6782, %v6789
      %v6792 = vunpack.c.l.s4 1983009808
      %v6793 = vunpack.c.0.s8 %v6792
      %v6794 = vlaneseq
      %v6795 = vshrl.u32 %v6794, 7
      %v6796 = vsub.s32 %v6793, %v6795
      %v6797 = vrot.slane %v6783, %v6796
      %v6798 = vcombine.low %v6747, %v6749
      %v6799 = vcombine.high %v6747, %v6749
      %v6801 = vunpack.c.l.s4 1983009808
      %v6802 = vunpack.c.0.s8 %v6801
      %v6803 = vlaneseq
      %v6804 = vshrl.u32 %v6803, 7
      %v6805 = vsub.s32 %v6802, %v6804
      %v6806 = vrot.slane %v6798, %v6805
      %v6808 = vunpack.c.l.s4 1983009808
      %v6809 = vunpack.c.0.s8 %v6808
      %v6810 = vlaneseq
      %v6811 = vshrl.u32 %v6810, 7
      %v6812 = vsub.s32 %v6809, %v6811
      %v6813 = vrot.slane %v6799, %v6812
      %v6814 = vcombine.low %v6758, %v6774
      %v6815 = vcombine.high %v6758, %v6774
      %v6817 = vunpack.c.l.s4 1934713408
      %v6818 = vunpack.c.0.s8 %v6817
      %v6819 = vlaneseq
      %v6820 = vshrl.u32 %v6819, 7
      %v6821 = vsub.s32 %v6818, %v6820
      %v6822 = vrot.slane %v6814, %v6821
      %v6824 = vunpack.c.l.s4 1934713408
      %v6825 = vunpack.c.0.s8 %v6824
      %v6826 = vlaneseq
      %v6827 = vshrl.u32 %v6826, 7
      %v6828 = vsub.s32 %v6825, %v6827
      %v6829 = vrot.slane %v6815, %v6828
      %v6830 = vcombine.low %v6765, %v6781
      %v6831 = vcombine.high %v6765, %v6781
      %v6833 = vunpack.c.l.s4 1934713408
      %v6834 = vunpack.c.0.s8 %v6833
      %v6835 = vlaneseq
      %v6836 = vshrl.u32 %v6835, 7
      %v6837 = vsub.s32 %v6834, %v6836
      %v6838 = vrot.slane %v6830, %v6837
      %v6840 = vunpack.c.l.s4 1934713408
      %v6841 = vunpack.c.0.s8 %v6840
      %v6842 = vlaneseq
      %v6843 = vshrl.u32 %v6842, 7
      %v6844 = vsub.s32 %v6841, %v6843
      %v6845 = vrot.slane %v6831, %v6844
      %v6846 = vcombine.low %v6790, %v6806
      %v6847 = vcombine.high %v6790, %v6806
      %v6849 = vunpack.c.l.s4 1934713408
      %v6850 = vunpack.c.0.s8 %v6849
      %v6851 = vlaneseq
      %v6852 = vshrl.u32 %v6851, 7
      %v6853 = vsub.s32 %v6850, %v6852
      %v6854 = vrot.slane %v6846, %v6853
      %v6856 = vunpack.c.l.s4 1934713408
      %v6857 = vunpack.c.0.s8 %v6856
      %v6858 = vlaneseq
      %v6859 = vshrl.u32 %v6858, 7
      %v6860 = vsub.s32 %v6857, %v6859
      %v6861 = vrot.slane %v6847, %v6860
      %v6862 = vcombine.low %v6797, %v6813
      %v6863 = vcombine.high %v6797, %v6813
      %v6865 = vunpack.c.l.s4 1934713408
      %v6866 = vunpack.c.0.s8 %v6865
      %v6867 = vlaneseq
      %v6868 = vshrl.u32 %v6867, 7
      %v6869 = vsub.s32 %v6866, %v6868
      %v6870 = vrot.slane %v6862, %v6869
      %v6872 = vunpack.c.l.s4 1934713408
      %v6873 = vunpack.c.0.s8 %v6872
      %v6874 = vlaneseq
      %v6875 = vshrl.u32 %v6874, 7
      %v6876 = vsub.s32 %v6873, %v6875
      %v6877 = vrot.slane %v6863, %v6876
      %v6878 = vcombine.low %v6822, %v6854
      %v6879 = vcombine.high %v6822, %v6854
      %v6880 = vcombine.low %v6829, %v6861
      %v6881 = vcombine.high %v6829, %v6861
      %v6882 = vcombine.low %v6838, %v6870
      %v6883 = vcombine.high %v6838, %v6870
      %v6884 = vcombine.low %v6845, %v6877
      %v6885 = vcombine.high %v6845, %v6877
      %6887 = vrot.lane.b32.xlu0 %v6879, 16
      %v6888 = vpop.permute.xlu0 %6887
      %6891 = vrot.lane.b32.xlu0 %v6880, 32
      %v6892 = vpop.permute.xlu0 %6891
      %6895 = vrot.lane.b32.xlu0 %v6881, 48
      %v6896 = vpop.permute.xlu0 %6895
      %6899 = vrot.lane.b32.xlu0 %v6882, 64
      %v6900 = vpop.permute.xlu0 %6899
      %6903 = vrot.lane.b32.xlu0 %v6883, 80
      %v6904 = vpop.permute.xlu0 %6903
      %6907 = vrot.lane.b32.xlu0 %v6884, 96
      %v6908 = vpop.permute.xlu0 %6907
      %6911 = vrot.lane.b32.xlu0 %v6885, 112
      %v6912 = vpop.permute.xlu0 %6911
      %v6914 = vsel %vm5859, %v6878, %v6888
      %v6915 = vsel %vm2574, %v6914, %v6892
      %v6916 = vsel %vm6159, %v6915, %v6896
      %v6917 = vsel %vm2591, %v6916, %v6900
      %v6918 = vsel %vm6162, %v6917, %v6904
      %v6919 = vsel %vm2608, %v6918, %v6908
      %v6920 = vsel %vm6165, %v6919, %v6912
      %s6921 = scalar_lea.vmem %s424, 8
      %6922 = vst [vmem:[%s6921] sm:$0xff] %v6920
      %s6923 = smul.u32 2, %s23
      %p6924 = scmp.lt.s32.totalorder %s22, 1
      %s6925 = scalar_select %p6924, %s22, 1
      %p6926 = scmp.lt.s32.totalorder %s6923, 7
      %s6927 = scalar_select %p6926, %s6923, 7
      %s6928 = smul.addr %s6925, 8
      %s6929 = sadd.s32 %s6927, %s6928
      %s6930 = smul.addr %s6929, 8
      %s6931 = scalar_lea.vmem %s7, %s6930
      // Predicated region
      $region49: #{patch_expanding_concat.1} parent=47 // pred_check
        %p6932 = pneg %p230
      $region50: #{patch_expanding_concat.1} parent=47 // pred_check_branch
        %6934 = sbr.rel (%p6932) target = $region52
      $region51: #{patch_expanding_concat.1} parent=47 // pred_region
        %s6935 = smul.u32 2, %s23
      $region52: #{patch_expanding_concat.1} parent=47 // pred_fallthru
        _
    $region48: #{patch_expanding_concat.1} parent=5 // pred_fallthru
      _
    %p6936 = scmp.le.s32.totalorder 2, %s13
    // Predicated region
    $region53: #{patch_expanding_concat.1} parent=5 // pred_check
      %p6937 = pneg %p6936
    $region54: #{patch_expanding_concat.1} parent=5 // pred_check_branch
      %6939 = sbr.rel (%p6937) target = $region56
    $region55: #{patch_expanding_concat.1} parent=5 // pred_region
      %s6940 = ssub.s32 %s13, 2
      // Predicated region
      $region57: #{patch_expanding_concat.1} parent=55 // pred_check
        %p6941 = pneg %p236
      $region58: #{patch_expanding_concat.1} parent=55 // pred_check_branch
        %6943 = sbr.rel (%p6941) target = $region60
      $region59: #{patch_expanding_concat.1} parent=55 // pred_region
        %s6944 = smul.u32 2, %s25
        %p6945 = scmp.lt.s32.totalorder %s24, 1
        %s6946 = scalar_select %p6945, %s24, 1
        %p6947 = scmp.lt.s32.totalorder %s6944, 7
        %s6948 = scalar_select %p6947, %s6944, 7
        %s6949 = smul.addr %s6946, 8
        %s6950 = sadd.s32 %s6948, %s6949
        %s6951 = smul.addr %s6950, 8
        %s6952 = scalar_lea.vmem %s7, %s6951
      $region60: #{patch_expanding_concat.1} parent=55 // pred_fallthru
        _
    $region56: #{patch_expanding_concat.1} parent=5 // pred_fallthru
      _
  $region6: #{patch_expanding_concat.1} parent=0 // loop_footer
    %s17 = sadd.s32 1, %s13
  $region7: #{patch_expanding_concat.1} parent=0 // loop_footer_branch
    %12 = sbr.rel target = $region3
  $region8: #{patch_expanding_concat.1} parent=0 // loop_exit
    _

</llo_original>
